<compile_context>
chip_gen: v7x
topology: tpu7x:2x2x1
jax: 0.10.0
libtpu: 0.0.40
codegen_flags: <defaults>
</compile_context>

<pallas_src>
import jax
import jax.numpy as jnp
from jax.experimental import pallas as pl
from jax.experimental.pallas import tpu as pltpu


def _round_up(x, m):
    return ((x + m - 1) // m) * m


# ----------------------------------------------------------------------------
# Pallas kernels (one grid step == one view)
# ----------------------------------------------------------------------------
def _encoder_kernel(x_ref, w1_ref, b1_ref, w2_ref, b2_ref, w3_ref, b3_ref,
                    wz_ref, bz_ref, z_ref):
    """Fused per-view encoder: relu(relu(relu(x W1+b1) W2+b2) W3+b3) Wz+bz."""
    x = x_ref[0]
    h = jnp.maximum(
        jnp.dot(x, w1_ref[0], preferred_element_type=jnp.float32) + b1_ref[0], 0.0)
    h = jnp.maximum(
        jnp.dot(h, w2_ref[0], preferred_element_type=jnp.float32) + b2_ref[0], 0.0)
    h = jnp.maximum(
        jnp.dot(h, w3_ref[0], preferred_element_type=jnp.float32) + b3_ref[0], 0.0)
    z_ref[0] = jnp.dot(h, wz_ref[0], preferred_element_type=jnp.float32) + bz_ref[0]


def _decoder_kernel(we_ref, z_ref, wd0_ref, bd0_ref, wd1_ref, bd1_ref,
                    wd2_ref, bd2_ref, wd3_ref, bd3_ref, wxb_ref, bxb_ref,
                    xbar_ref, zf_ref):
    """Weighted-z fusion (folded in) + fused per-view decoder."""
    we = we_ref[...]                         # (B_PAD, WE_PAD), cols >=5 are zero
    zs = z_ref[...]                          # (5, B_PAD, Z_PAD)
    summ = (we[:, 0:1] * zs[0] + we[:, 1:2] * zs[1] + we[:, 2:3] * zs[2]
            + we[:, 3:4] * zs[3] + we[:, 4:5] * zs[4])
    inv = pl.reciprocal(jnp.sum(we, axis=1, keepdims=True))
    zf = summ * inv
    zf_ref[0] = zf                           # identical copy per view; take [0]

    h = jnp.maximum(
        jnp.dot(zf, wd0_ref[0], preferred_element_type=jnp.float32) + bd0_ref[0], 0.0)
    h = jnp.maximum(
        jnp.dot(h, wd1_ref[0], preferred_element_type=jnp.float32) + bd1_ref[0], 0.0)
    h = jnp.maximum(
        jnp.dot(h, wd2_ref[0], preferred_element_type=jnp.float32) + bd2_ref[0], 0.0)
    h = jnp.maximum(
        jnp.dot(h, wd3_ref[0], preferred_element_type=jnp.float32) + bd3_ref[0], 0.0)
    xbar_ref[0] = jnp.dot(h, wxb_ref[0], preferred_element_type=jnp.float32) + bxb_ref[0]


# ----------------------------------------------------------------------------
# pallas_call wrappers
# ----------------------------------------------------------------------------
def _encode_views(x_stack, p):
    V, B_PAD, IN_PAD = x_stack.shape
    D0P = p["w_enc1"].shape[2]
    D1P = p["w_enc2"].shape[2]
    D2P = p["w_enc3"].shape[2]
    ZP = p["w_z"].shape[2]
    per_view = lambda v: (v, 0, 0)
    return pl.pallas_call(
        _encoder_kernel,
        out_shape=jax.ShapeDtypeStruct((V, B_PAD, ZP), jnp.float32),
        grid=(V,),
        in_specs=[
            pl.BlockSpec((1, B_PAD, IN_PAD), per_view),
            pl.BlockSpec((1, IN_PAD, D0P), per_view), pl.BlockSpec((1, 1, D0P), per_view),
            pl.BlockSpec((1, D0P, D1P), per_view),    pl.BlockSpec((1, 1, D1P), per_view),
            pl.BlockSpec((1, D1P, D2P), per_view),    pl.BlockSpec((1, 1, D2P), per_view),
            pl.BlockSpec((1, D2P, ZP), per_view),     pl.BlockSpec((1, 1, ZP), per_view),
        ],
        out_specs=pl.BlockSpec((1, B_PAD, ZP), per_view),
        compiler_params=pltpu.CompilerParams(dimension_semantics=("parallel",)),
    )(x_stack, p["w_enc1"], p["b_enc1"], p["w_enc2"], p["b_enc2"],
      p["w_enc3"], p["b_enc3"], p["w_z"], p["b_z"])


def _decode_views(we_pad, z_stack, p):
    V, B_PAD, ZP = z_stack.shape
    WE_PAD = we_pad.shape[1]
    D2P = p["w_dec1"].shape[2]
    D1P = p["w_dec2"].shape[2]
    D0P = p["w_dec3"].shape[2]
    OUTP = p["w_xbar"].shape[2]
    per_view = lambda v: (v, 0, 0)
    whole2 = lambda v: (0, 0)
    whole3 = lambda v: (0, 0, 0)
    return pl.pallas_call(
        _decoder_kernel,
        out_shape=(jax.ShapeDtypeStruct((V, B_PAD, OUTP), jnp.float32),
                   jax.ShapeDtypeStruct((V, B_PAD, ZP), jnp.float32)),
        grid=(V,),
        in_specs=[
            pl.BlockSpec((B_PAD, WE_PAD), whole2),
            pl.BlockSpec((V, B_PAD, ZP), whole3),
            pl.BlockSpec((1, ZP, ZP), per_view),    pl.BlockSpec((1, 1, ZP), per_view),
            pl.BlockSpec((1, ZP, D2P), per_view),   pl.BlockSpec((1, 1, D2P), per_view),
            pl.BlockSpec((1, D2P, D1P), per_view),  pl.BlockSpec((1, 1, D1P), per_view),
            pl.BlockSpec((1, D1P, D0P), per_view),  pl.BlockSpec((1, 1, D0P), per_view),
            pl.BlockSpec((1, D0P, OUTP), per_view), pl.BlockSpec((1, 1, OUTP), per_view),
        ],
        out_specs=(pl.BlockSpec((1, B_PAD, OUTP), per_view),
                   pl.BlockSpec((1, B_PAD, ZP), per_view)),
        compiler_params=pltpu.CompilerParams(dimension_semantics=("parallel",)),
    )(we_pad, z_stack, p["w_dec0"], p["b_dec0"], p["w_dec1"], p["b_dec1"],
      p["w_dec2"], p["b_dec2"], p["w_dec3"], p["b_dec3"],
      p["w_xbar"], p["b_xbar"])


# ----------------------------------------------------------------------------
# Parameters (mirrors nn.Linear default init; stored as (in, out) = W.T)
# ----------------------------------------------------------------------------
def _init_linear(key, in_f, out_f):
    kw, kb = jax.random.split(key)
    bound = 1.0 / jnp.sqrt(jnp.float32(in_f))
    w = jax.random.uniform(kw, (in_f, out_f), jnp.float32, -bound, bound)
    b = jax.random.uniform(kb, (1, out_f), jnp.float32, -bound, bound)
    return {"w": w, "b": b}


def make_ae_params(key, n_stacks, n_input, n_z):
    dims = []
    for v in range(5):
        d = [int(round(n_input[v] * 0.8)) for _ in range(n_stacks - 2)]
        d.append(1500)
        dims.append(d)

    params = {"dims": dims, "n_z": n_z, "n_input": list(n_input)}
    keys = jax.random.split(key, 5 * 10)
    ki = 0
    for v in range(5):
        d = dims[v]
        params[f"enc{v}_1"] = _init_linear(keys[ki], n_input[v], d[0]); ki += 1
        params[f"enc{v}_2"] = _init_linear(keys[ki], d[0], d[1]); ki += 1
        params[f"enc{v}_3"] = _init_linear(keys[ki], d[1], d[2]); ki += 1
        params[f"z{v}_layer"] = _init_linear(keys[ki], d[2], n_z); ki += 1
        params[f"dec{v}_0"] = _init_linear(keys[ki], n_z, n_z); ki += 1
        params[f"dec{v}_1"] = _init_linear(keys[ki], n_z, d[2]); ki += 1
        params[f"dec{v}_2"] = _init_linear(keys[ki], d[2], d[1]); ki += 1
        params[f"dec{v}_3"] = _init_linear(keys[ki], d[1], d[0]); ki += 1
        params[f"x{v}_bar_layer"] = _init_linear(keys[ki], d[0], n_input[v]); ki += 1
        ki += 1  # keep 10 keys reserved per view
    return params


def pack_ae_params(params):
    """Zero-pad every layer to 128-multiple feature dims and stack over views."""
    n_input = params["n_input"]
    n_z = params["n_z"]
    dims = params["dims"]
    IN_PAD = _round_up(max(n_input), 128)
    D0P = _round_up(max(dims[v][0] for v in range(5)), 128)
    D1P = _round_up(max(dims[v][1] for v in range(5)), 128)
    D2P = _round_up(max(dims[v][2] for v in range(5)), 128)   # 1500 -> 1536
    ZP = _round_up(n_z, 128)

    def pad2(a, r, c):
        return jnp.zeros((r, c), jnp.float32).at[:a.shape[0], :a.shape[1]].set(a)

    def stack(fmt, r, c):
        ws = jnp.stack([pad2(params[fmt.format(v)]["w"], r, c) for v in range(5)])
        bs = jnp.stack([pad2(params[fmt.format(v)]["b"], 1, c) for v in range(5)])
        return ws, bs

    p = {}
    p["w_enc1"], p["b_enc1"] = stack("enc{}_1", IN_PAD, D0P)
    p["w_enc2"], p["b_enc2"] = stack("enc{}_2", D0P, D1P)
    p["w_enc3"], p["b_enc3"] = stack("enc{}_3", D1P, D2P)
    p["w_z"],    p["b_z"]    = stack("z{}_layer", D2P, ZP)
    p["w_dec0"], p["b_dec0"] = stack("dec{}_0", ZP, ZP)
    p["w_dec1"], p["b_dec1"] = stack("dec{}_1", ZP, D2P)
    p["w_dec2"], p["b_dec2"] = stack("dec{}_2", D2P, D1P)
    p["w_dec3"], p["b_dec3"] = stack("dec{}_3", D1P, D0P)
    p["w_xbar"], p["b_xbar"] = stack("x{}_bar_layer", D0P, IN_PAD)
    return p


# ----------------------------------------------------------------------------
# Forward pass
# ----------------------------------------------------------------------------
def make_ae_forward(n_input, n_z):
    n_input = tuple(int(n) for n in n_input)
    n_z = int(n_z)

    @jax.jit
    def fwd(packed, x0, x1, x2, x3, x4, we):
        xs = [x0, x1, x2, x3, x4]
        B = x0.shape[0]
        B_PAD = _round_up(max(B, 8), 8)
        IN_PAD = packed["w_enc1"].shape[1]

        x_stack = jnp.stack([
            jnp.pad(xs[v].astype(jnp.float32),
                    ((0, B_PAD - B), (0, IN_PAD - n_input[v])))
            for v in range(5)], axis=0)

        z_stack = _encode_views(x_stack, packed)          # (5, B_PAD, Z_PAD)

        WE_PAD = 128
        we_pad = jnp.zeros((B_PAD, WE_PAD), jnp.float32)
        we_pad = we_pad.at[:B, :5].set(we.astype(jnp.float32))
        we_pad = we_pad.at[B:, 0].set(1.0)                # keep padded rows finite

        xbar_stack, zf_stack = _decode_views(we_pad, z_stack, packed)

        x_bars = tuple(xbar_stack[v, :B, :n_input[v]] for v in range(5))
        z = zf_stack[0, :B, :n_z]
        zs = tuple(z_stack[v, :B, :n_z] for v in range(5))
        return x_bars + (z,) + zs

    return fwd


# ----------------------------------------------------------------------------
# Pure-JAX reference (sanity check of the Pallas path)
# ----------------------------------------------------------------------------
def ae_forward_ref(params, x0, x1, x2, x3, x4, we):
    xs = [x0, x1, x2, x3, x4]

    def lin(name, x, relu):
        p = params[name]
        y = x @ p["w"] + p["b"]
        return jnp.maximum(y, 0.0) if relu else y

    zs = []
    for v in range(5):
        h = lin(f"enc{v}_1", xs[v], True)
        h = lin(f"enc{v}_2", h, True)
        h = lin(f"enc{v}_3", h, True)
        zs.append(lin(f"z{v}_layer", h, False))

    summ = sum(we[:, v:v + 1] * zs[v] for v in range(5))
    z = summ / jnp.sum(we, axis=1, keepdims=True)

    x_bars = []
    for v in range(5):
        r = lin(f"dec{v}_0", z, True)
        h = lin(f"dec{v}_1", r, True)
        h = lin(f"dec{v}_2", h, True)
        h = lin(f"dec{v}_3", h, True)
        x_bars.append(lin(f"x{v}_bar_layer", h, False))

    return (x_bars[0], x_bars[1], x_bars[2], x_bars[3], x_bars[4],
            z, zs[0], zs[1], zs[2], zs[3], zs[4])


# ----------------------------------------------------------------------------
if __name__ == "__main__":
    n_stacks = 4                       # -> dims[v] = [0.8*n, 0.8*n, 1500]
    n_input = [40, 30, 50, 25, 35]     # five views
    n_z = 16
    batch = 8

    key = jax.random.PRNGKey(0)
    kp, k0, k1, k2, k3, k4, kw = jax.random.split(key, 7)

    params = make_ae_params(kp, n_stacks, n_input, n_z)
    packed = pack_ae_params(params)

    x0 = jax.random.normal(k0, (batch, n_input[0]), jnp.float32)
    x1 = jax.random.normal(k1, (batch, n_input[1]), jnp.float32)
    x2 = jax.random.normal(k2, (batch, n_input[2]), jnp.float32)
    x3 = jax.random.normal(k3, (batch, n_input[3]), jnp.float32)
    x4 = jax.random.normal(k4, (batch, n_input[4]), jnp.float32)
    we = jax.random.uniform(kw, (batch, 5), jnp.float32, 0.5, 1.5)

    fwd = make_ae_forward(n_input, n_z)
    out = fwd(packed, x0, x1, x2, x3, x4, we)
    out = jax.block_until_ready(out)

    ref = jax.jit(ae_forward_ref)(params, x0, x1, x2, x3, x4, we)
    ref = jax.block_until_ready(ref)

    for o, r in zip(out, ref):
        assert o.shape == r.shape, (o.shape, r.shape)
        err = jnp.max(jnp.abs(o - r))
        assert err < 2e-3, float(err)

    print("KERNEL_OK")
</pallas_src>

<mosaic_0001>
module attributes {stable_mosaic.version = 11 : i64} {
  func.func @_encoder_kernel(%arg0: i32, %arg1: memref<1x8x128xf32, #tpu.memory_space<vmem>>, %arg2: memref<1x128x128xf32, #tpu.memory_space<vmem>>, %arg3: memref<1x1x128xf32, #tpu.memory_space<vmem>>, %arg4: memref<1x128x128xf32, #tpu.memory_space<vmem>>, %arg5: memref<1x1x128xf32, #tpu.memory_space<vmem>>, %arg6: memref<1x128x1536xf32, #tpu.memory_space<vmem>>, %arg7: memref<1x1x1536xf32, #tpu.memory_space<vmem>>, %arg8: memref<1x1536x128xf32, #tpu.memory_space<vmem>>, %arg9: memref<1x1x128xf32, #tpu.memory_space<vmem>>, %arg10: memref<1x8x128xf32, #tpu.memory_space<vmem>>) attributes {dimension_semantics = [#tpu.dimension_semantics<parallel>], iteration_bounds = array<i64: 5>, scalar_prefetch = 0 : i64, scratch_operands = 0 : i64, tpu.core_type = #tpu.core_type<tc>, window_params = [{transform_indices = @transform_0, window_bounds = array<i64: 1, 8, 128>}, {transform_indices = @transform_1, window_bounds = array<i64: 1, 128, 128>}, {transform_indices = @transform_2, window_bounds = array<i64: 1, 1, 128>}, {transform_indices = @transform_3, window_bounds = array<i64: 1, 128, 128>}, {transform_indices = @transform_4, window_bounds = array<i64: 1, 1, 128>}, {transform_indices = @transform_5, window_bounds = array<i64: 1, 128, 1536>}, {transform_indices = @transform_6, window_bounds = array<i64: 1, 1, 1536>}, {transform_indices = @transform_7, window_bounds = array<i64: 1, 1536, 128>}, {transform_indices = @transform_8, window_bounds = array<i64: 1, 1, 128>}, {transform_indices = @transform_9, window_bounds = array<i64: 1, 8, 128>}]} {
    %c0 = arith.constant 0 : index
    %c0_0 = arith.constant 0 : index
    %c0_1 = arith.constant 0 : index
    %0 = vector.load %arg1[%c0, %c0_0, %c0_1] : memref<1x8x128xf32, #tpu.memory_space<vmem>>, vector<1x8x128xf32>
    %1 = vector.shape_cast %0 : vector<1x8x128xf32> to vector<8x128xf32>
    %c0_2 = arith.constant 0 : index
    %c0_3 = arith.constant 0 : index
    %c0_4 = arith.constant 0 : index
    %2 = vector.load %arg2[%c0_2, %c0_3, %c0_4] : memref<1x128x128xf32, #tpu.memory_space<vmem>>, vector<1x128x128xf32>
    %3 = vector.shape_cast %2 : vector<1x128x128xf32> to vector<128x128xf32>
    %cst = arith.constant dense<0.000000e+00> : vector<8x128xf32>
    %4 = tpu.matmul %1, %3, %cst {dimension_numbers = #tpu.dot_dimension_numbers<[1], [0], [0], [1], [0, 0, 1, 1], [], []>} : vector<8x128xf32>, vector<128x128xf32>, vector<8x128xf32> -> vector<8x128xf32>
    %c0_5 = arith.constant 0 : index
    %c0_6 = arith.constant 0 : index
    %c0_7 = arith.constant 0 : index
    %5 = vector.load %arg3[%c0_5, %c0_6, %c0_7] : memref<1x1x128xf32, #tpu.memory_space<vmem>>, vector<1x1x128xf32>
    %6 = vector.shape_cast %5 : vector<1x1x128xf32> to vector<1x128xf32>
    %7 = vector.broadcast %6 : vector<1x128xf32> to vector<8x128xf32>
    %8 = arith.addf %4, %7 : vector<8x128xf32>
    %cst_8 = arith.constant 0.000000e+00 : f32
    %9 = vector.broadcast %cst_8 : f32 to vector<8x128xf32>
    %10 = arith.maximumf %8, %9 : vector<8x128xf32>
    %c0_9 = arith.constant 0 : index
    %c0_10 = arith.constant 0 : index
    %c0_11 = arith.constant 0 : index
    %11 = vector.load %arg4[%c0_9, %c0_10, %c0_11] : memref<1x128x128xf32, #tpu.memory_space<vmem>>, vector<1x128x128xf32>
    %12 = vector.shape_cast %11 : vector<1x128x128xf32> to vector<128x128xf32>
    %cst_12 = arith.constant dense<0.000000e+00> : vector<8x128xf32>
    %13 = tpu.matmul %10, %12, %cst_12 {dimension_numbers = #tpu.dot_dimension_numbers<[1], [0], [0], [1], [0, 0, 1, 1], [], []>} : vector<8x128xf32>, vector<128x128xf32>, vector<8x128xf32> -> vector<8x128xf32>
    %c0_13 = arith.constant 0 : index
    %c0_14 = arith.constant 0 : index
    %c0_15 = arith.constant 0 : index
    %14 = vector.load %arg5[%c0_13, %c0_14, %c0_15] : memref<1x1x128xf32, #tpu.memory_space<vmem>>, vector<1x1x128xf32>
    %15 = vector.shape_cast %14 : vector<1x1x128xf32> to vector<1x128xf32>
    %16 = vector.broadcast %15 : vector<1x128xf32> to vector<8x128xf32>
    %17 = arith.addf %13, %16 : vector<8x128xf32>
    %cst_16 = arith.constant 0.000000e+00 : f32
    %18 = vector.broadcast %cst_16 : f32 to vector<8x128xf32>
    %19 = arith.maximumf %17, %18 : vector<8x128xf32>
    %c0_17 = arith.constant 0 : index
    %c0_18 = arith.constant 0 : index
    %c0_19 = arith.constant 0 : index
    %20 = vector.load %arg6[%c0_17, %c0_18, %c0_19] : memref<1x128x1536xf32, #tpu.memory_space<vmem>>, vector<1x128x1536xf32>
    %21 = vector.shape_cast %20 : vector<1x128x1536xf32> to vector<128x1536xf32>
    %cst_20 = arith.constant dense<0.000000e+00> : vector<8x1536xf32>
    %22 = tpu.matmul %19, %21, %cst_20 {dimension_numbers = #tpu.dot_dimension_numbers<[1], [0], [0], [1], [0, 0, 1, 1], [], []>} : vector<8x128xf32>, vector<128x1536xf32>, vector<8x1536xf32> -> vector<8x1536xf32>
    %c0_21 = arith.constant 0 : index
    %c0_22 = arith.constant 0 : index
    %c0_23 = arith.constant 0 : index
    %23 = vector.load %arg7[%c0_21, %c0_22, %c0_23] : memref<1x1x1536xf32, #tpu.memory_space<vmem>>, vector<1x1x1536xf32>
    %24 = vector.shape_cast %23 : vector<1x1x1536xf32> to vector<1x1536xf32>
    %25 = vector.broadcast %24 : vector<1x1536xf32> to vector<8x1536xf32>
    %26 = arith.addf %22, %25 : vector<8x1536xf32>
    %cst_24 = arith.constant 0.000000e+00 : f32
    %27 = vector.broadcast %cst_24 : f32 to vector<8x1536xf32>
    %28 = arith.maximumf %26, %27 : vector<8x1536xf32>
    %c0_25 = arith.constant 0 : index
    %c0_26 = arith.constant 0 : index
    %c0_27 = arith.constant 0 : index
    %29 = vector.load %arg8[%c0_25, %c0_26, %c0_27] : memref<1x1536x128xf32, #tpu.memory_space<vmem>>, vector<1x1536x128xf32>
    %30 = vector.shape_cast %29 : vector<1x1536x128xf32> to vector<1536x128xf32>
    %cst_28 = arith.constant dense<0.000000e+00> : vector<8x128xf32>
    %31 = tpu.matmul %28, %30, %cst_28 {dimension_numbers = #tpu.dot_dimension_numbers<[1], [0], [0], [1], [0, 0, 1, 1], [], []>} : vector<8x1536xf32>, vector<1536x128xf32>, vector<8x128xf32> -> vector<8x128xf32>
    %c0_29 = arith.constant 0 : index
    %c0_30 = arith.constant 0 : index
    %c0_31 = arith.constant 0 : index
    %32 = vector.load %arg9[%c0_29, %c0_30, %c0_31] : memref<1x1x128xf32, #tpu.memory_space<vmem>>, vector<1x1x128xf32>
    %33 = vector.shape_cast %32 : vector<1x1x128xf32> to vector<1x128xf32>
    %34 = vector.broadcast %33 : vector<1x128xf32> to vector<8x128xf32>
    %35 = arith.addf %31, %34 : vector<8x128xf32>
    %c0_32 = arith.constant 0 : index
    %c0_33 = arith.constant 0 : index
    %c0_34 = arith.constant 0 : index
    %36 = vector.load %arg10[%c0_32, %c0_33, %c0_34] : memref<1x8x128xf32, #tpu.memory_space<vmem>>, vector<1x8x128xf32>
    %37 = vector.shape_cast %36 : vector<1x8x128xf32> to vector<8x128xf32>
    %38 = vector.shape_cast %35 : vector<8x128xf32> to vector<1x8x128xf32>
    tpu.vector_store %arg10[%c0_32, %c0_33, %c0_34], %38 {strides = array<i32>} : memref<1x8x128xf32, #tpu.memory_space<vmem>>, vector<1x8x128xf32>,
    return
  }
  func.func @transform_0(%arg0: i32) -> (i32, i32, i32) {
    %c0_i32 = arith.constant 0 : i32
    %c0_i32_0 = arith.constant 0 : i32
    %c0_i32_1 = arith.constant 0 : i32
    return %arg0, %c0_i32, %c0_i32_0 : i32, i32, i32
  }
  func.func @transform_1(%arg0: i32) -> (i32, i32, i32) {
    %c0_i32 = arith.constant 0 : i32
    %c0_i32_0 = arith.constant 0 : i32
    %c0_i32_1 = arith.constant 0 : i32
    return %arg0, %c0_i32, %c0_i32_0 : i32, i32, i32
  }
  func.func @transform_2(%arg0: i32) -> (i32, i32, i32) {
    %c0_i32 = arith.constant 0 : i32
    %c0_i32_0 = arith.constant 0 : i32
    %c0_i32_1 = arith.constant 0 : i32
    return %arg0, %c0_i32, %c0_i32_0 : i32, i32, i32
  }
  func.func @transform_3(%arg0: i32) -> (i32, i32, i32) {
    %c0_i32 = arith.constant 0 : i32
    %c0_i32_0 = arith.constant 0 : i32
    %c0_i32_1 = arith.constant 0 : i32
    return %arg0, %c0_i32, %c0_i32_0 : i32, i32, i32
  }
  func.func @transform_4(%arg0: i32) -> (i32, i32, i32) {
    %c0_i32 = arith.constant 0 : i32
    %c0_i32_0 = arith.constant 0 : i32
    %c0_i32_1 = arith.constant 0 : i32
    return %arg0, %c0_i32, %c0_i32_0 : i32, i32, i32
  }
  func.func @transform_5(%arg0: i32) -> (i32, i32, i32) {
    %c0_i32 = arith.constant 0 : i32
    %c0_i32_0 = arith.constant 0 : i32
    %c0_i32_1 = arith.constant 0 : i32
    return %arg0, %c0_i32, %c0_i32_0 : i32, i32, i32
  }
  func.func @transform_6(%arg0: i32) -> (i32, i32, i32) {
    %c0_i32 = arith.constant 0 : i32
    %c0_i32_0 = arith.constant 0 : i32
    %c0_i32_1 = arith.constant 0 : i32
    return %arg0, %c0_i32, %c0_i32_0 : i32, i32, i32
  }
  func.func @transform_7(%arg0: i32) -> (i32, i32, i32) {
    %c0_i32 = arith.constant 0 : i32
    %c0_i32_0 = arith.constant 0 : i32
    %c0_i32_1 = arith.constant 0 : i32
    return %arg0, %c0_i32, %c0_i32_0 : i32, i32, i32
  }
  func.func @transform_8(%arg0: i32) -> (i32, i32, i32) {
    %c0_i32 = arith.constant 0 : i32
    %c0_i32_0 = arith.constant 0 : i32
    %c0_i32_1 = arith.constant 0 : i32
    return %arg0, %c0_i32, %c0_i32_0 : i32, i32, i32
  }
  func.func @transform_9(%arg0: i32) -> (i32, i32, i32) {
    %c0_i32 = arith.constant 0 : i32
    %c0_i32_0 = arith.constant 0 : i32
    %c0_i32_1 = arith.constant 0 : i32
    return %arg0, %c0_i32, %c0_i32_0 : i32, i32, i32
  }
}

module attributes {stable_mosaic.version = 11 : i64} {
  func.func @_decoder_kernel(%arg0: i32, %arg1: memref<8x128xf32, #tpu.memory_space<vmem>>, %arg2: memref<5x8x128xf32, #tpu.memory_space<vmem>>, %arg3: memref<1x128x128xf32, #tpu.memory_space<vmem>>, %arg4: memref<1x1x128xf32, #tpu.memory_space<vmem>>, %arg5: memref<1x128x1536xf32, #tpu.memory_space<vmem>>, %arg6: memref<1x1x1536xf32, #tpu.memory_space<vmem>>, %arg7: memref<1x1536x128xf32, #tpu.memory_space<vmem>>, %arg8: memref<1x1x128xf32, #tpu.memory_space<vmem>>, %arg9: memref<1x128x128xf32, #tpu.memory_space<vmem>>, %arg10: memref<1x1x128xf32, #tpu.memory_space<vmem>>, %arg11: memref<1x128x128xf32, #tpu.memory_space<vmem>>, %arg12: memref<1x1x128xf32, #tpu.memory_space<vmem>>, %arg13: memref<1x8x128xf32, #tpu.memory_space<vmem>>, %arg14: memref<1x8x128xf32, #tpu.memory_space<vmem>>) attributes {dimension_semantics = [#tpu.dimension_semantics<parallel>], iteration_bounds = array<i64: 5>, scalar_prefetch = 0 : i64, scratch_operands = 0 : i64, tpu.core_type = #tpu.core_type<tc>, window_params = [{pipeline_mode = #tpu.pipeline_mode<synchronous>, transform_indices = @transform_0, window_bounds = array<i64: 8, 128>}, {pipeline_mode = #tpu.pipeline_mode<synchronous>, transform_indices = @transform_1, window_bounds = array<i64: 5, 8, 128>}, {transform_indices = @transform_2, window_bounds = array<i64: 1, 128, 128>}, {transform_indices = @transform_3, window_bounds = array<i64: 1, 1, 128>}, {transform_indices = @transform_4, window_bounds = array<i64: 1, 128, 1536>}, {transform_indices = @transform_5, window_bounds = array<i64: 1, 1, 1536>}, {transform_indices = @transform_6, window_bounds = array<i64: 1, 1536, 128>}, {transform_indices = @transform_7, window_bounds = array<i64: 1, 1, 128>}, {transform_indices = @transform_8, window_bounds = array<i64: 1, 128, 128>}, {transform_indices = @transform_9, window_bounds = array<i64: 1, 1, 128>}, {transform_indices = @transform_10, window_bounds = array<i64: 1, 128, 128>}, {transform_indices = @transform_11, window_bounds = array<i64: 1, 1, 128>}, {transform_indices = @transform_12, window_bounds = array<i64: 1, 8, 128>}, {transform_indices = @transform_13, window_bounds = array<i64: 1, 8, 128>}]} {
    %c0 = arith.constant 0 : index
    %c0_0 = arith.constant 0 : index
    %0 = vector.load %arg1[%c0, %c0_0] : memref<8x128xf32, #tpu.memory_space<vmem>>, vector<8x128xf32>
    %c0_1 = arith.constant 0 : index
    %c0_2 = arith.constant 0 : index
    %c0_3 = arith.constant 0 : index
    %1 = vector.load %arg2[%c0_1, %c0_2, %c0_3] : memref<5x8x128xf32, #tpu.memory_space<vmem>>, vector<5x8x128xf32>
    %2 = vector.extract_strided_slice %0 {offsets = [0, 0], sizes = [8, 1], strides = [1, 1]} : vector<8x128xf32> to vector<8x1xf32>
    %3 = vector.extract_strided_slice %1 {offsets = [0, 0, 0], sizes = [1, 8, 128], strides = [1, 1, 1]} : vector<5x8x128xf32> to vector<1x8x128xf32>
    %4 = vector.shape_cast %3 : vector<1x8x128xf32> to vector<8x128xf32>
    %5 = vector.broadcast %2 : vector<8x1xf32> to vector<8x128xf32>
    %6 = arith.mulf %5, %4 : vector<8x128xf32>
    %7 = vector.extract_strided_slice %0 {offsets = [0, 1], sizes = [8, 1], strides = [1, 1]} : vector<8x128xf32> to vector<8x1xf32>
    %8 = vector.extract_strided_slice %1 {offsets = [1, 0, 0], sizes = [1, 8, 128], strides = [1, 1, 1]} : vector<5x8x128xf32> to vector<1x8x128xf32>
    %9 = vector.shape_cast %8 : vector<1x8x128xf32> to vector<8x128xf32>
    %10 = vector.broadcast %7 : vector<8x1xf32> to vector<8x128xf32>
    %11 = arith.mulf %10, %9 : vector<8x128xf32>
    %12 = arith.addf %6, %11 : vector<8x128xf32>
    %13 = vector.extract_strided_slice %0 {offsets = [0, 2], sizes = [8, 1], strides = [1, 1]} : vector<8x128xf32> to vector<8x1xf32>
    %14 = vector.extract_strided_slice %1 {offsets = [2, 0, 0], sizes = [1, 8, 128], strides = [1, 1, 1]} : vector<5x8x128xf32> to vector<1x8x128xf32>
    %15 = vector.shape_cast %14 : vector<1x8x128xf32> to vector<8x128xf32>
    %16 = vector.broadcast %13 : vector<8x1xf32> to vector<8x128xf32>
    %17 = arith.mulf %16, %15 : vector<8x128xf32>
    %18 = arith.addf %12, %17 : vector<8x128xf32>
    %19 = vector.extract_strided_slice %0 {offsets = [0, 3], sizes = [8, 1], strides = [1, 1]} : vector<8x128xf32> to vector<8x1xf32>
    %20 = vector.extract_strided_slice %1 {offsets = [3, 0, 0], sizes = [1, 8, 128], strides = [1, 1, 1]} : vector<5x8x128xf32> to vector<1x8x128xf32>
    %21 = vector.shape_cast %20 : vector<1x8x128xf32> to vector<8x128xf32>
    %22 = vector.broadcast %19 : vector<8x1xf32> to vector<8x128xf32>
    %23 = arith.mulf %22, %21 : vector<8x128xf32>
    %24 = arith.addf %18, %23 : vector<8x128xf32>
    %25 = vector.extract_strided_slice %0 {offsets = [0, 4], sizes = [8, 1], strides = [1, 1]} : vector<8x128xf32> to vector<8x1xf32>
    %26 = vector.extract_strided_slice %1 {offsets = [4, 0, 0], sizes = [1, 8, 128], strides = [1, 1, 1]} : vector<5x8x128xf32> to vector<1x8x128xf32>
    %27 = vector.shape_cast %26 : vector<1x8x128xf32> to vector<8x128xf32>
    %28 = vector.broadcast %25 : vector<8x1xf32> to vector<8x128xf32>
    %29 = arith.mulf %28, %27 : vector<8x128xf32>
    %30 = arith.addf %24, %29 : vector<8x128xf32>
    %cst = arith.constant dense<0.000000e+00> : vector<8xf32>
    %31 = vector.multi_reduction <add>, %0, %cst [1] : vector<8x128xf32> to vector<8xf32>
    %32 = vector.shape_cast %31 : vector<8xf32> to vector<8x1xf32>
    %33 = tpu.reciprocal %32 : vector<8x1xf32> -> vector<8x1xf32>
    %34 = vector.broadcast %33 : vector<8x1xf32> to vector<8x128xf32>
    %35 = arith.mulf %30, %34 : vector<8x128xf32>
    %c0_4 = arith.constant 0 : index
    %c0_5 = arith.constant 0 : index
    %c0_6 = arith.constant 0 : index
    %36 = vector.load %arg14[%c0_4, %c0_5, %c0_6] : memref<1x8x128xf32, #tpu.memory_space<vmem>>, vector<1x8x128xf32>
    %37 = vector.shape_cast %36 : vector<1x8x128xf32> to vector<8x128xf32>
    %38 = vector.shape_cast %35 : vector<8x128xf32> to vector<1x8x128xf32>
    tpu.vector_store %arg14[%c0_4, %c0_5, %c0_6], %38 {strides = array<i32>} : memref<1x8x128xf32, #tpu.memory_space<vmem>>, vector<1x8x128xf32>,
    %c0_7 = arith.constant 0 : index
    %c0_8 = arith.constant 0 : index
    %c0_9 = arith.constant 0 : index
    %39 = vector.load %arg3[%c0_7, %c0_8, %c0_9] : memref<1x128x128xf32, #tpu.memory_space<vmem>>, vector<1x128x128xf32>
    %40 = vector.shape_cast %39 : vector<1x128x128xf32> to vector<128x128xf32>
    %cst_10 = arith.constant dense<0.000000e+00> : vector<8x128xf32>
    %41 = tpu.matmul %35, %40, %cst_10 {dimension_numbers = #tpu.dot_dimension_numbers<[1], [0], [0], [1], [0, 0, 1, 1], [], []>} : vector<8x128xf32>, vector<128x128xf32>, vector<8x128xf32> -> vector<8x128xf32>
    %c0_11 = arith.constant 0 : index
    %c0_12 = arith.constant 0 : index
    %c0_13 = arith.constant 0 : index
    %42 = vector.load %arg4[%c0_11, %c0_12, %c0_13] : memref<1x1x128xf32, #tpu.memory_space<vmem>>, vector<1x1x128xf32>
    %43 = vector.shape_cast %42 : vector<1x1x128xf32> to vector<1x128xf32>
    %44 = vector.broadcast %43 : vector<1x128xf32> to vector<8x128xf32>
    %45 = arith.addf %41, %44 : vector<8x128xf32>
    %cst_14 = arith.constant 0.000000e+00 : f32
    %46 = vector.broadcast %cst_14 : f32 to vector<8x128xf32>
    %47 = arith.maximumf %45, %46 : vector<8x128xf32>
    %c0_15 = arith.constant 0 : index
    %c0_16 = arith.constant 0 : index
    %c0_17 = arith.constant 0 : index
    %48 = vector.load %arg5[%c0_15, %c0_16, %c0_17] : memref<1x128x1536xf32, #tpu.memory_space<vmem>>, vector<1x128x1536xf32>
    %49 = vector.shape_cast %48 : vector<1x128x1536xf32> to vector<128x1536xf32>
    %cst_18 = arith.constant dense<0.000000e+00> : vector<8x1536xf32>
    %50 = tpu.matmul %47, %49, %cst_18 {dimension_numbers = #tpu.dot_dimension_numbers<[1], [0], [0], [1], [0, 0, 1, 1], [], []>} : vector<8x128xf32>, vector<128x1536xf32>, vector<8x1536xf32> -> vector<8x1536xf32>
    %c0_19 = arith.constant 0 : index
    %c0_20 = arith.constant 0 : index
    %c0_21 = arith.constant 0 : index
    %51 = vector.load %arg6[%c0_19, %c0_20, %c0_21] : memref<1x1x1536xf32, #tpu.memory_space<vmem>>, vector<1x1x1536xf32>
    %52 = vector.shape_cast %51 : vector<1x1x1536xf32> to vector<1x1536xf32>
    %53 = vector.broadcast %52 : vector<1x1536xf32> to vector<8x1536xf32>
    %54 = arith.addf %50, %53 : vector<8x1536xf32>
    %cst_22 = arith.constant 0.000000e+00 : f32
    %55 = vector.broadcast %cst_22 : f32 to vector<8x1536xf32>
    %56 = arith.maximumf %54, %55 : vector<8x1536xf32>
    %c0_23 = arith.constant 0 : index
    %c0_24 = arith.constant 0 : index
    %c0_25 = arith.constant 0 : index
    %57 = vector.load %arg7[%c0_23, %c0_24, %c0_25] : memref<1x1536x128xf32, #tpu.memory_space<vmem>>, vector<1x1536x128xf32>
    %58 = vector.shape_cast %57 : vector<1x1536x128xf32> to vector<1536x128xf32>
    %cst_26 = arith.constant dense<0.000000e+00> : vector<8x128xf32>
    %59 = tpu.matmul %56, %58, %cst_26 {dimension_numbers = #tpu.dot_dimension_numbers<[1], [0], [0], [1], [0, 0, 1, 1], [], []>} : vector<8x1536xf32>, vector<1536x128xf32>, vector<8x128xf32> -> vector<8x128xf32>
    %c0_27 = arith.constant 0 : index
    %c0_28 = arith.constant 0 : index
    %c0_29 = arith.constant 0 : index
    %60 = vector.load %arg8[%c0_27, %c0_28, %c0_29] : memref<1x1x128xf32, #tpu.memory_space<vmem>>, vector<1x1x128xf32>
    %61 = vector.shape_cast %60 : vector<1x1x128xf32> to vector<1x128xf32>
    %62 = vector.broadcast %61 : vector<1x128xf32> to vector<8x128xf32>
    %63 = arith.addf %59, %62 : vector<8x128xf32>
    %cst_30 = arith.constant 0.000000e+00 : f32
    %64 = vector.broadcast %cst_30 : f32 to vector<8x128xf32>
    %65 = arith.maximumf %63, %64 : vector<8x128xf32>
    %c0_31 = arith.constant 0 : index
    %c0_32 = arith.constant 0 : index
    %c0_33 = arith.constant 0 : index
    %66 = vector.load %arg9[%c0_31, %c0_32, %c0_33] : memref<1x128x128xf32, #tpu.memory_space<vmem>>, vector<1x128x128xf32>
    %67 = vector.shape_cast %66 : vector<1x128x128xf32> to vector<128x128xf32>
    %cst_34 = arith.constant dense<0.000000e+00> : vector<8x128xf32>
    %68 = tpu.matmul %65, %67, %cst_34 {dimension_numbers = #tpu.dot_dimension_numbers<[1], [0], [0], [1], [0, 0, 1, 1], [], []>} : vector<8x128xf32>, vector<128x128xf32>, vector<8x128xf32> -> vector<8x128xf32>
    %c0_35 = arith.constant 0 : index
    %c0_36 = arith.constant 0 : index
    %c0_37 = arith.constant 0 : index
    %69 = vector.load %arg10[%c0_35, %c0_36, %c0_37] : memref<1x1x128xf32, #tpu.memory_space<vmem>>, vector<1x1x128xf32>
    %70 = vector.shape_cast %69 : vector<1x1x128xf32> to vector<1x128xf32>
    %71 = vector.broadcast %70 : vector<1x128xf32> to vector<8x128xf32>
    %72 = arith.addf %68, %71 : vector<8x128xf32>
    %cst_38 = arith.constant 0.000000e+00 : f32
    %73 = vector.broadcast %cst_38 : f32 to vector<8x128xf32>
    %74 = arith.maximumf %72, %73 : vector<8x128xf32>
    %c0_39 = arith.constant 0 : index
    %c0_40 = arith.constant 0 : index
    %c0_41 = arith.constant 0 : index
    %75 = vector.load %arg11[%c0_39, %c0_40, %c0_41] : memref<1x128x128xf32, #tpu.memory_space<vmem>>, vector<1x128x128xf32>
    %76 = vector.shape_cast %75 : vector<1x128x128xf32> to vector<128x128xf32>
    %cst_42 = arith.constant dense<0.000000e+00> : vector<8x128xf32>
    %77 = tpu.matmul %74, %76, %cst_42 {dimension_numbers = #tpu.dot_dimension_numbers<[1], [0], [0], [1], [0, 0, 1, 1], [], []>} : vector<8x128xf32>, vector<128x128xf32>, vector<8x128xf32> -> vector<8x128xf32>
    %c0_43 = arith.constant 0 : index
    %c0_44 = arith.constant 0 : index
    %c0_45 = arith.constant 0 : index
    %78 = vector.load %arg12[%c0_43, %c0_44, %c0_45] : memref<1x1x128xf32, #tpu.memory_space<vmem>>, vector<1x1x128xf32>
    %79 = vector.shape_cast %78 : vector<1x1x128xf32> to vector<1x128xf32>
    %80 = vector.broadcast %79 : vector<1x128xf32> to vector<8x128xf32>
    %81 = arith.addf %77, %80 : vector<8x128xf32>
    %c0_46 = arith.constant 0 : index
    %c0_47 = arith.constant 0 : index
    %c0_48 = arith.constant 0 : index
    %82 = vector.load %arg13[%c0_46, %c0_47, %c0_48] : memref<1x8x128xf32, #tpu.memory_space<vmem>>, vector<1x8x128xf32>
    %83 = vector.shape_cast %82 : vector<1x8x128xf32> to vector<8x128xf32>
    %84 = vector.shape_cast %81 : vector<8x128xf32> to vector<1x8x128xf32>
    tpu.vector_store %arg13[%c0_46, %c0_47, %c0_48], %84 {strides = array<i32>} : memref<1x8x128xf32, #tpu.memory_space<vmem>>, vector<1x8x128xf32>,
    return
  }
  func.func @transform_0(%arg0: i32) -> (i32, i32) {
    %c0_i32 = arith.constant 0 : i32
    %c0_i32_0 = arith.constant 0 : i32
    %c0_i32_1 = arith.constant 0 : i32
    return %c0_i32, %c0_i32_0 : i32, i32
  }
  func.func @transform_1(%arg0: i32) -> (i32, i32, i32) {
    %c0_i32 = arith.constant 0 : i32
    %c0_i32_0 = arith.constant 0 : i32
    %c0_i32_1 = arith.constant 0 : i32
    %c0_i32_2 = arith.constant 0 : i32
    return %c0_i32, %c0_i32_0, %c0_i32_1 : i32, i32, i32
  }
  func.func @transform_2(%arg0: i32) -> (i32, i32, i32) {
    %c0_i32 = arith.constant 0 : i32
    %c0_i32_0 = arith.constant 0 : i32
    %c0_i32_1 = arith.constant 0 : i32
    return %arg0, %c0_i32, %c0_i32_0 : i32, i32, i32
  }
  func.func @transform_3(%arg0: i32) -> (i32, i32, i32) {
    %c0_i32 = arith.constant 0 : i32
    %c0_i32_0 = arith.constant 0 : i32
    %c0_i32_1 = arith.constant 0 : i32
    return %arg0, %c0_i32, %c0_i32_0 : i32, i32, i32
  }
  func.func @transform_4(%arg0: i32) -> (i32, i32, i32) {
    %c0_i32 = arith.constant 0 : i32
    %c0_i32_0 = arith.constant 0 : i32
    %c0_i32_1 = arith.constant 0 : i32
    return %arg0, %c0_i32, %c0_i32_0 : i32, i32, i32
  }
  func.func @transform_5(%arg0: i32) -> (i32, i32, i32) {
    %c0_i32 = arith.constant 0 : i32
    %c0_i32_0 = arith.constant 0 : i32
    %c0_i32_1 = arith.constant 0 : i32
    return %arg0, %c0_i32, %c0_i32_0 : i32, i32, i32
  }
  func.func @transform_6(%arg0: i32) -> (i32, i32, i32) {
    %c0_i32 = arith.constant 0 : i32
    %c0_i32_0 = arith.constant 0 : i32
    %c0_i32_1 = arith.constant 0 : i32
    return %arg0, %c0_i32, %c0_i32_0 : i32, i32, i32
  }
  func.func @transform_7(%arg0: i32) -> (i32, i32, i32) {
    %c0_i32 = arith.constant 0 : i32
    %c0_i32_0 = arith.constant 0 : i32
    %c0_i32_1 = arith.constant 0 : i32
    return %arg0, %c0_i32, %c0_i32_0 : i32, i32, i32
  }
  func.func @transform_8(%arg0: i32) -> (i32, i32, i32) {
    %c0_i32 = arith.constant 0 : i32
    %c0_i32_0 = arith.constant 0 : i32
    %c0_i32_1 = arith.constant 0 : i32
    return %arg0, %c0_i32, %c0_i32_0 : i32, i32, i32
  }
  func.func @transform_9(%arg0: i32) -> (i32, i32, i32) {
    %c0_i32 = arith.constant 0 : i32
    %c0_i32_0 = arith.constant 0 : i32
    %c0_i32_1 = arith.constant 0 : i32
    return %arg0, %c0_i32, %c0_i32_0 : i32, i32, i32
  }
  func.func @transform_10(%arg0: i32) -> (i32, i32, i32) {
    %c0_i32 = arith.constant 0 : i32
    %c0_i32_0 = arith.constant 0 : i32
    %c0_i32_1 = arith.constant 0 : i32
    return %arg0, %c0_i32, %c0_i32_0 : i32, i32, i32
  }
  func.func @transform_11(%arg0: i32) -> (i32, i32, i32) {
    %c0_i32 = arith.constant 0 : i32
    %c0_i32_0 = arith.constant 0 : i32
    %c0_i32_1 = arith.constant 0 : i32
    return %arg0, %c0_i32, %c0_i32_0 : i32, i32, i32
  }
  func.func @transform_12(%arg0: i32) -> (i32, i32, i32) {
    %c0_i32 = arith.constant 0 : i32
    %c0_i32_0 = arith.constant 0 : i32
    %c0_i32_1 = arith.constant 0 : i32
    return %arg0, %c0_i32, %c0_i32_0 : i32, i32, i32
  }
  func.func @transform_13(%arg0: i32) -> (i32, i32, i32) {
    %c0_i32 = arith.constant 0 : i32
    %c0_i32_0 = arith.constant 0 : i32
    %c0_i32_1 = arith.constant 0 : i32
    return %arg0, %c0_i32, %c0_i32_0 : i32, i32, i32
  }
}

</mosaic_0001>

<llo_original>
// kernel: fwd.3
$region0: #{fwd.3}
  #allocation0 [shape = 'u32[]', space=smem, size = 0x4, offset = 0x4, fixed_abs, tag = 'smem constant byte address 0x4 - core index']
  #allocation1 [shape = 'u32[144,128]{1,0:T(1,128)}', space=vmem, size = 0x12000, scoped, tag = 'internal scratch']
  %s0 = inlined_call_operand.vmem [shape: f32[8,128], index: 0, kind: input, shape index: {}]
  %s1 = inlined_call_operand.vmem [shape: f32[5,8,128], index: 1, kind: input, shape index: {}]
  %s2 = inlined_call_operand.vmem [shape: f32[5,128,128], index: 2, kind: input, shape index: {}]
  %s3 = inlined_call_operand.vmem [shape: f32[5,1,128], index: 3, kind: input, shape index: {}]
  %s4 = inlined_call_operand.vmem [shape: f32[5,128,1536], index: 4, kind: input, shape index: {}]
  %s5 = inlined_call_operand.vmem [shape: f32[5,1,1536], index: 5, kind: input, shape index: {}]
  %s6 = inlined_call_operand.vmem [shape: f32[5,1536,128], index: 6, kind: input, shape index: {}]
  %s7 = inlined_call_operand.vmem [shape: f32[5,1,128], index: 7, kind: input, shape index: {}]
  %s8 = inlined_call_operand.vmem [shape: f32[5,128,128], index: 8, kind: input, shape index: {}]
  %s9 = inlined_call_operand.vmem [shape: f32[5,1,128], index: 9, kind: input, shape index: {}]
  %s10 = inlined_call_operand.hbm [shape: f32[5,128,128], index: 10, kind: input, shape index: {}]
  %s11 = inlined_call_operand.vmem [shape: f32[5,1,128], index: 11, kind: input, shape index: {}]
  %s12 = inlined_call_operand.vmem [shape: f32[5,8,128], index: 12, kind: output, shape index: {0}]
  %s13 = inlined_call_operand.vmem [shape: f32[5,8,128], index: 13, kind: output, shape index: {1}]
  %14 = xla_tuple %s12, %s13
  %s15 = sld [smem:[#allocation0]]
  $region93: #{fwd.3} parent=0
    _
  %s17 = ssub.s32 1, %s15
  %s18 = scalar_select 0, %s17, %s15
  $region1: #{fwd.3} parent=0
    #allocation2 [shape = 'u8[131072]{0}', space=vmem, size = 0x20000, scoped, tag = 'input window, operand 10']
    #allocation3 [shape = 's32[2]{0}', space=sflag, size = 0x8, scoped, tag = 'scoped memory for fwd.3']
    %19 = vsyncpa [#allocation3], 0
    %s20 = scalar_lea.sflag [#allocation3], 1
    %21 = vsyncpa %s20, 0
    loop: start=0, step=1, limit=7
    $region2: #{fwd.3} parent=1 // loop_pre_header
      _
    $region3: #{fwd.3} parent=1 // loop_header
      %s23 = sphi 0, %s27
      %p24 = scmp.ge.s32.totalorder %s23, 7
      %s31 = sphi 0, %s31
      %s33 = sphi 0, %s31
      %s34 = sphi 0, %s33
      %s48 = sphi 0, %s34
      %s52 = sphi 0, %s52
      %s54 = sphi 0, %s52
      %s55 = sphi 0, %s54
      %s69 = sphi 0, %s55
      %s75 = sphi 0, %s77
      %s78 = sphi 0, %s75
      %s79 = sphi 0, %s78
      %s95 = sphi 0, %s79
      %s101 = sphi 0, %s103
      %s104 = sphi 0, %s101
      %s105 = sphi 0, %s104
      %s121 = sphi 0, %s105
      %s127 = sphi 0, %s129
      %s130 = sphi 0, %s127
      %s131 = sphi 0, %s130
      %s147 = sphi 0, %s131
      %s153 = sphi 0, %s155
      %s156 = sphi 0, %s153
      %s157 = sphi 0, %s156
      %s173 = sphi 0, %s157
      %s179 = sphi 0, %s181
      %s182 = sphi 0, %s179
      %s183 = sphi 0, %s182
      %s199 = sphi 0, %s183
      %s205 = sphi 0, %s207
      %s208 = sphi 0, %s205
      %s209 = sphi 0, %s208
      %s225 = sphi 0, %s209
      %s231 = sphi 0, %s233
      %s234 = sphi 0, %s231
      %s235 = sphi 0, %s234
      %s251 = sphi 0, %s235
      %s257 = sphi 0, %s259
      %s260 = sphi 0, %s257
      %s261 = sphi 0, %s260
      %s277 = sphi 0, %s261
      %s283 = sphi 0, %s285
      %s286 = sphi 0, %s283
      %s287 = sphi 0, %s286
      %s303 = sphi 0, %s287
      %s309 = sphi 0, %s311
      %s312 = sphi 0, %s309
      %s313 = sphi 0, %s312
      %s329 = sphi 0, %s313
      %s335 = sphi 0, %s337
      %s338 = sphi 0, %s335
      %s339 = sphi 0, %s338
      %s355 = sphi 0, %s339
      %s361 = sphi 0, %s363
      %s364 = sphi 0, %s361
      %s365 = sphi 0, %s364
      %s381 = sphi 0, %s365
    $region4: #{fwd.3} parent=1 // loop_header_branch
      %26 = sbr.rel (%p24) target = $region8
    $region5: #{fwd.3} parent=1 // loop_body
      %s28 = ssub.s32 %s23, 1
      %s29 = ssub.s32 %s23, 2
      %s30 = sadd.s32 %s23, 1
      %s32 = sadd.s32 %s31, 1
      %p35 = scmp.eq.s32.totalorder %s23, 4
      %p36 = scmp.ne.s32.totalorder %s31, %s33
      %p37 = scmp.eq.s32.totalorder %s23, 0
      %p38 = por %p36, %p37
      %p39 = scmp.ne.s32.totalorder %s31, %s33
      %p40 = scmp.eq.s32.totalorder %s28, 4
      %p41 = por %p39, %p40
      %p42 = scmp.ne.s32.totalorder %s33, %s34
      %p43 = scmp.eq.s32.totalorder %s28, 0
      %p44 = por %p42, %p43
      %p45 = scmp.ne.s32.totalorder %s33, %s34
      %p46 = scmp.eq.s32.totalorder %s29, 4
      %p47 = por %p45, %p46
      %p49 = scmp.ne.s32.totalorder %s34, %s48
      %p50 = scmp.eq.s32.totalorder %s29, 0
      %p51 = por %p49, %p50
      %s53 = sadd.s32 %s52, 1
      %p56 = scmp.eq.s32.totalorder %s23, 4
      %p57 = scmp.ne.s32.totalorder %s52, %s54
      %p58 = scmp.eq.s32.totalorder %s23, 0
      %p59 = por %p57, %p58
      %p60 = scmp.ne.s32.totalorder %s52, %s54
      %p61 = scmp.eq.s32.totalorder %s28, 4
      %p62 = por %p60, %p61
      %p63 = scmp.ne.s32.totalorder %s54, %s55
      %p64 = scmp.eq.s32.totalorder %s28, 0
      %p65 = por %p63, %p64
      %p66 = scmp.ne.s32.totalorder %s54, %s55
      %p67 = scmp.eq.s32.totalorder %s29, 4
      %p68 = por %p66, %p67
      %p70 = scmp.ne.s32.totalorder %s55, %s69
      %p71 = scmp.eq.s32.totalorder %s29, 0
      %p72 = por %p70, %p71
      %s73 = ssub.s32 %s23, %s30
      %p74 = scmp.eq.s32.totalorder %s73, 0
      %s76 = sadd.s32 %s75, 1
      %s77 = scalar_select %p74, %s75, %s76
      %p80 = pneg %p74
      %p81 = scmp.eq.s32.totalorder %s23, 4
      %p82 = por %p80, %p81
      %p83 = scmp.ne.s32.totalorder %s75, %s78
      %p84 = scmp.eq.s32.totalorder %s23, 0
      %p85 = por %p83, %p84
      %p86 = scmp.ne.s32.totalorder %s75, %s78
      %p87 = scmp.eq.s32.totalorder %s28, 4
      %p88 = por %p86, %p87
      %p89 = scmp.ne.s32.totalorder %s78, %s79
      %p90 = scmp.eq.s32.totalorder %s28, 0
      %p91 = por %p89, %p90
      %p92 = scmp.ne.s32.totalorder %s78, %s79
      %p93 = scmp.eq.s32.totalorder %s29, 4
      %p94 = por %p92, %p93
      %p96 = scmp.ne.s32.totalorder %s79, %s95
      %p97 = scmp.eq.s32.totalorder %s29, 0
      %p98 = por %p96, %p97
      %s99 = ssub.s32 %s23, %s30
      %p100 = scmp.eq.s32.totalorder %s99, 0
      %s102 = sadd.s32 %s101, 1
      %s103 = scalar_select %p100, %s101, %s102
      %p106 = pneg %p100
      %p107 = scmp.eq.s32.totalorder %s23, 4
      %p108 = por %p106, %p107
      %p109 = scmp.ne.s32.totalorder %s101, %s104
      %p110 = scmp.eq.s32.totalorder %s23, 0
      %p111 = por %p109, %p110
      %p112 = scmp.ne.s32.totalorder %s101, %s104
      %p113 = scmp.eq.s32.totalorder %s28, 4
      %p114 = por %p112, %p113
      %p115 = scmp.ne.s32.totalorder %s104, %s105
      %p116 = scmp.eq.s32.totalorder %s28, 0
      %p117 = por %p115, %p116
      %p118 = scmp.ne.s32.totalorder %s104, %s105
      %p119 = scmp.eq.s32.totalorder %s29, 4
      %p120 = por %p118, %p119
      %p122 = scmp.ne.s32.totalorder %s105, %s121
      %p123 = scmp.eq.s32.totalorder %s29, 0
      %p124 = por %p122, %p123
      %s125 = ssub.s32 %s23, %s30
      %p126 = scmp.eq.s32.totalorder %s125, 0
      %s128 = sadd.s32 %s127, 1
      %s129 = scalar_select %p126, %s127, %s128
      %p132 = pneg %p126
      %p133 = scmp.eq.s32.totalorder %s23, 4
      %p134 = por %p132, %p133
      %p135 = scmp.ne.s32.totalorder %s127, %s130
      %p136 = scmp.eq.s32.totalorder %s23, 0
      %p137 = por %p135, %p136
      %p138 = scmp.ne.s32.totalorder %s127, %s130
      %p139 = scmp.eq.s32.totalorder %s28, 4
      %p140 = por %p138, %p139
      %p141 = scmp.ne.s32.totalorder %s130, %s131
      %p142 = scmp.eq.s32.totalorder %s28, 0
      %p143 = por %p141, %p142
      %p144 = scmp.ne.s32.totalorder %s130, %s131
      %p145 = scmp.eq.s32.totalorder %s29, 4
      %p146 = por %p144, %p145
      %p148 = scmp.ne.s32.totalorder %s131, %s147
      %p149 = scmp.eq.s32.totalorder %s29, 0
      %p150 = por %p148, %p149
      %s151 = ssub.s32 %s23, %s30
      %p152 = scmp.eq.s32.totalorder %s151, 0
      %s154 = sadd.s32 %s153, 1
      %s155 = scalar_select %p152, %s153, %s154
      %p158 = pneg %p152
      %p159 = scmp.eq.s32.totalorder %s23, 4
      %p160 = por %p158, %p159
      %p161 = scmp.ne.s32.totalorder %s153, %s156
      %p162 = scmp.eq.s32.totalorder %s23, 0
      %p163 = por %p161, %p162
      %p164 = scmp.ne.s32.totalorder %s153, %s156
      %p165 = scmp.eq.s32.totalorder %s28, 4
      %p166 = por %p164, %p165
      %p167 = scmp.ne.s32.totalorder %s156, %s157
      %p168 = scmp.eq.s32.totalorder %s28, 0
      %p169 = por %p167, %p168
      %p170 = scmp.ne.s32.totalorder %s156, %s157
      %p171 = scmp.eq.s32.totalorder %s29, 4
      %p172 = por %p170, %p171
      %p174 = scmp.ne.s32.totalorder %s157, %s173
      %p175 = scmp.eq.s32.totalorder %s29, 0
      %p176 = por %p174, %p175
      %s177 = ssub.s32 %s23, %s30
      %p178 = scmp.eq.s32.totalorder %s177, 0
      %s180 = sadd.s32 %s179, 1
      %s181 = scalar_select %p178, %s179, %s180
      %p184 = pneg %p178
      %p185 = scmp.eq.s32.totalorder %s23, 4
      %p186 = por %p184, %p185
      %p187 = scmp.ne.s32.totalorder %s179, %s182
      %p188 = scmp.eq.s32.totalorder %s23, 0
      %p189 = por %p187, %p188
      %p190 = scmp.ne.s32.totalorder %s179, %s182
      %p191 = scmp.eq.s32.totalorder %s28, 4
      %p192 = por %p190, %p191
      %p193 = scmp.ne.s32.totalorder %s182, %s183
      %p194 = scmp.eq.s32.totalorder %s28, 0
      %p195 = por %p193, %p194
      %p196 = scmp.ne.s32.totalorder %s182, %s183
      %p197 = scmp.eq.s32.totalorder %s29, 4
      %p198 = por %p196, %p197
      %p200 = scmp.ne.s32.totalorder %s183, %s199
      %p201 = scmp.eq.s32.totalorder %s29, 0
      %p202 = por %p200, %p201
      %s203 = ssub.s32 %s23, %s30
      %p204 = scmp.eq.s32.totalorder %s203, 0
      %s206 = sadd.s32 %s205, 1
      %s207 = scalar_select %p204, %s205, %s206
      %p210 = pneg %p204
      %p211 = scmp.eq.s32.totalorder %s23, 4
      %p212 = por %p210, %p211
      %p213 = scmp.ne.s32.totalorder %s205, %s208
      %p214 = scmp.eq.s32.totalorder %s23, 0
      %p215 = por %p213, %p214
      %p216 = scmp.ne.s32.totalorder %s205, %s208
      %p217 = scmp.eq.s32.totalorder %s28, 4
      %p218 = por %p216, %p217
      %p219 = scmp.ne.s32.totalorder %s208, %s209
      %p220 = scmp.eq.s32.totalorder %s28, 0
      %p221 = por %p219, %p220
      %p222 = scmp.ne.s32.totalorder %s208, %s209
      %p223 = scmp.eq.s32.totalorder %s29, 4
      %p224 = por %p222, %p223
      %p226 = scmp.ne.s32.totalorder %s209, %s225
      %p227 = scmp.eq.s32.totalorder %s29, 0
      %p228 = por %p226, %p227
      %s229 = ssub.s32 %s23, %s30
      %p230 = scmp.eq.s32.totalorder %s229, 0
      %s232 = sadd.s32 %s231, 1
      %s233 = scalar_select %p230, %s231, %s232
      %p236 = pneg %p230
      %p237 = scmp.eq.s32.totalorder %s23, 4
      %p238 = por %p236, %p237
      %p239 = scmp.ne.s32.totalorder %s231, %s234
      %p240 = scmp.eq.s32.totalorder %s23, 0
      %p241 = por %p239, %p240
      %p242 = scmp.ne.s32.totalorder %s231, %s234
      %p243 = scmp.eq.s32.totalorder %s28, 4
      %p244 = por %p242, %p243
      %p245 = scmp.ne.s32.totalorder %s234, %s235
      %p246 = scmp.eq.s32.totalorder %s28, 0
      %p247 = por %p245, %p246
      %p248 = scmp.ne.s32.totalorder %s234, %s235
      %p249 = scmp.eq.s32.totalorder %s29, 4
      %p250 = por %p248, %p249
      %p252 = scmp.ne.s32.totalorder %s235, %s251
      %p253 = scmp.eq.s32.totalorder %s29, 0
      %p254 = por %p252, %p253
      %s255 = ssub.s32 %s23, %s30
      %p256 = scmp.eq.s32.totalorder %s255, 0
      %s258 = sadd.s32 %s257, 1
      %s259 = scalar_select %p256, %s257, %s258
      %p262 = pneg %p256
      %p263 = scmp.eq.s32.totalorder %s23, 4
      %p264 = por %p262, %p263
      %p265 = scmp.ne.s32.totalorder %s257, %s260
      %p266 = scmp.eq.s32.totalorder %s23, 0
      %p267 = por %p265, %p266
      %p268 = scmp.ne.s32.totalorder %s257, %s260
      %p269 = scmp.eq.s32.totalorder %s28, 4
      %p270 = por %p268, %p269
      %p271 = scmp.ne.s32.totalorder %s260, %s261
      %p272 = scmp.eq.s32.totalorder %s28, 0
      %p273 = por %p271, %p272
      %p274 = scmp.ne.s32.totalorder %s260, %s261
      %p275 = scmp.eq.s32.totalorder %s29, 4
      %p276 = por %p274, %p275
      %p278 = scmp.ne.s32.totalorder %s261, %s277
      %p279 = scmp.eq.s32.totalorder %s29, 0
      %p280 = por %p278, %p279
      %s281 = ssub.s32 %s23, %s30
      %p282 = scmp.eq.s32.totalorder %s281, 0
      %s284 = sadd.s32 %s283, 1
      %s285 = scalar_select %p282, %s283, %s284
      %p288 = pneg %p282
      %p289 = scmp.eq.s32.totalorder %s23, 4
      %p290 = por %p288, %p289
      %p291 = scmp.ne.s32.totalorder %s283, %s286
      %p292 = scmp.eq.s32.totalorder %s23, 0
      %p293 = por %p291, %p292
      %p294 = scmp.ne.s32.totalorder %s283, %s286
      %p295 = scmp.eq.s32.totalorder %s28, 4
      %p296 = por %p294, %p295
      %p297 = scmp.ne.s32.totalorder %s286, %s287
      %p298 = scmp.eq.s32.totalorder %s28, 0
      %p299 = por %p297, %p298
      %p300 = scmp.ne.s32.totalorder %s286, %s287
      %p301 = scmp.eq.s32.totalorder %s29, 4
      %p302 = por %p300, %p301
      %p304 = scmp.ne.s32.totalorder %s287, %s303
      %p305 = scmp.eq.s32.totalorder %s29, 0
      %p306 = por %p304, %p305
      %s307 = ssub.s32 %s23, %s30
      %p308 = scmp.eq.s32.totalorder %s307, 0
      %s310 = sadd.s32 %s309, 1
      %s311 = scalar_select %p308, %s309, %s310
      %p314 = pneg %p308
      %p315 = scmp.eq.s32.totalorder %s23, 4
      %p316 = por %p314, %p315
      %p317 = scmp.ne.s32.totalorder %s309, %s312
      %p318 = scmp.eq.s32.totalorder %s23, 0
      %p319 = por %p317, %p318
      %p320 = scmp.ne.s32.totalorder %s309, %s312
      %p321 = scmp.eq.s32.totalorder %s28, 4
      %p322 = por %p320, %p321
      %p323 = scmp.ne.s32.totalorder %s312, %s313
      %p324 = scmp.eq.s32.totalorder %s28, 0
      %p325 = por %p323, %p324
      %p326 = scmp.ne.s32.totalorder %s312, %s313
      %p327 = scmp.eq.s32.totalorder %s29, 4
      %p328 = por %p326, %p327
      %p330 = scmp.ne.s32.totalorder %s313, %s329
      %p331 = scmp.eq.s32.totalorder %s29, 0
      %p332 = por %p330, %p331
      %s333 = ssub.s32 %s23, %s30
      %p334 = scmp.eq.s32.totalorder %s333, 0
      %s336 = sadd.s32 %s335, 1
      %s337 = scalar_select %p334, %s335, %s336
      %p340 = pneg %p334
      %p341 = scmp.eq.s32.totalorder %s23, 4
      %p342 = por %p340, %p341
      %p343 = scmp.ne.s32.totalorder %s335, %s338
      %p344 = scmp.eq.s32.totalorder %s23, 0
      %p345 = por %p343, %p344
      %p346 = scmp.ne.s32.totalorder %s335, %s338
      %p347 = scmp.eq.s32.totalorder %s28, 4
      %p348 = por %p346, %p347
      %p349 = scmp.ne.s32.totalorder %s338, %s339
      %p350 = scmp.eq.s32.totalorder %s28, 0
      %p351 = por %p349, %p350
      %p352 = scmp.ne.s32.totalorder %s338, %s339
      %p353 = scmp.eq.s32.totalorder %s29, 4
      %p354 = por %p352, %p353
      %p356 = scmp.ne.s32.totalorder %s339, %s355
      %p357 = scmp.eq.s32.totalorder %s29, 0
      %p358 = por %p356, %p357
      %s359 = ssub.s32 %s23, %s30
      %p360 = scmp.eq.s32.totalorder %s359, 0
      %s362 = sadd.s32 %s361, 1
      %s363 = scalar_select %p360, %s361, %s362
      %p366 = pneg %p360
      %p367 = scmp.eq.s32.totalorder %s23, 4
      %p368 = por %p366, %p367
      %p369 = scmp.ne.s32.totalorder %s361, %s364
      %p370 = scmp.eq.s32.totalorder %s23, 0
      %p371 = por %p369, %p370
      %p372 = scmp.ne.s32.totalorder %s361, %s364
      %p373 = scmp.eq.s32.totalorder %s28, 4
      %p374 = por %p372, %p373
      %p375 = scmp.ne.s32.totalorder %s364, %s365
      %p376 = scmp.eq.s32.totalorder %s28, 0
      %p377 = por %p375, %p376
      %p378 = scmp.ne.s32.totalorder %s364, %s365
      %p379 = scmp.eq.s32.totalorder %s29, 4
      %p380 = por %p378, %p379
      %p382 = scmp.ne.s32.totalorder %s365, %s381
      %p383 = scmp.eq.s32.totalorder %s29, 0
      %p384 = por %p382, %p383
      %p385 = scmp.le.s32.totalorder 1, %s23
      %p386 = scmp.lt.s32.totalorder %s23, 6
      %p387 = pnand %p385, %p386
      %p388 = pneg %p387
      // Predicated region
      $region9: #{fwd.3} parent=5 // pred_check
        _
      $region10: #{fwd.3} parent=5 // pred_check_branch
        %390 = sbr.rel (%p387) target = $region12
      $region11: #{fwd.3} parent=5 // pred_region
        %s391 = ssub.s32 %s23, 1
        // Predicated region
        $region13: #{fwd.3} parent=11 // pred_check
          %p392 = pneg %p44
        $region14: #{fwd.3} parent=11 // pred_check_branch
          %394 = sbr.rel (%p392) target = $region16
        $region15: #{fwd.3} parent=11 // pred_region
          _
        $region16: #{fwd.3} parent=11 // pred_fallthru
          _
        // Predicated region
        $region17: #{fwd.3} parent=11 // pred_check
          %p395 = pneg %p65
        $region18: #{fwd.3} parent=11 // pred_check_branch
          %397 = sbr.rel (%p395) target = $region20
        $region19: #{fwd.3} parent=11 // pred_region
          _
        $region20: #{fwd.3} parent=11 // pred_fallthru
          _
      $region12: #{fwd.3} parent=5 // pred_fallthru
        _
      %p398 = scmp.lt.s32.totalorder %s23, 5
      // Predicated region
      $region21: #{fwd.3} parent=5 // pred_check
        %p399 = pneg %p398
      $region22: #{fwd.3} parent=5 // pred_check_branch
        %401 = sbr.rel (%p399) target = $region24
      $region23: #{fwd.3} parent=5 // pred_region
        // Predicated region
        $region25: #{fwd.3} parent=23 // pred_check
          %p402 = pneg %p85
        $region26: #{fwd.3} parent=23 // pred_check_branch
          %404 = sbr.rel (%p402) target = $region28
        $region27: #{fwd.3} parent=23 // pred_region
          %p405 = scmp.lt.s32.totalorder %s23, 4
          %s406 = scalar_select %p405, %s23, 4
          %s407 = smul.addr %s406, 16
          %s408 = smul.addr %s407, 8
          %s409 = scalar_lea.vmem %s2, %s408
        $region28: #{fwd.3} parent=23 // pred_fallthru
          _
        // Predicated region
        $region29: #{fwd.3} parent=23 // pred_check
          %p410 = pneg %p111
        $region30: #{fwd.3} parent=23 // pred_check_branch
          %412 = sbr.rel (%p410) target = $region32
        $region31: #{fwd.3} parent=23 // pred_region
          %p413 = scmp.lt.s32.totalorder %s23, 4
          %s414 = scalar_select %p413, %s23, 4
          %s415 = scalar_lea.vmem %s3, %s414
        $region32: #{fwd.3} parent=23 // pred_fallthru
          _
        // Predicated region
        $region33: #{fwd.3} parent=23 // pred_check
          %p416 = pneg %p137
        $region34: #{fwd.3} parent=23 // pred_check_branch
          %418 = sbr.rel (%p416) target = $region36
        $region35: #{fwd.3} parent=23 // pred_region
          %p419 = scmp.lt.s32.totalorder %s23, 4
          %s420 = scalar_select %p419, %s23, 4
          %s421 = smul.addr %s420, 192
          %s422 = smul.addr %s421, 8
          %s423 = scalar_lea.vmem %s4, %s422
        $region36: #{fwd.3} parent=23 // pred_fallthru
          _
        // Predicated region
        $region37: #{fwd.3} parent=23 // pred_check
          %p424 = pneg %p163
        $region38: #{fwd.3} parent=23 // pred_check_branch
          %426 = sbr.rel (%p424) target = $region40
        $region39: #{fwd.3} parent=23 // pred_region
          %p427 = scmp.lt.s32.totalorder %s23, 4
          %s428 = scalar_select %p427, %s23, 4
          %s429 = smul.addr %s428, 12
          %s430 = scalar_lea.vmem %s5, %s429
        $region40: #{fwd.3} parent=23 // pred_fallthru
          _
        // Predicated region
        $region41: #{fwd.3} parent=23 // pred_check
          %p431 = pneg %p189
        $region42: #{fwd.3} parent=23 // pred_check_branch
          %433 = sbr.rel (%p431) target = $region44
        $region43: #{fwd.3} parent=23 // pred_region
          %p434 = scmp.lt.s32.totalorder %s23, 4
          %s435 = scalar_select %p434, %s23, 4
          %s436 = smul.addr %s435, 192
          %s437 = smul.addr %s436, 8
          %s438 = scalar_lea.vmem %s6, %s437
        $region44: #{fwd.3} parent=23 // pred_fallthru
          _
        // Predicated region
        $region45: #{fwd.3} parent=23 // pred_check
          %p439 = pneg %p215
        $region46: #{fwd.3} parent=23 // pred_check_branch
          %441 = sbr.rel (%p439) target = $region48
        $region47: #{fwd.3} parent=23 // pred_region
          %p442 = scmp.lt.s32.totalorder %s23, 4
          %s443 = scalar_select %p442, %s23, 4
          %s444 = scalar_lea.vmem %s7, %s443
        $region48: #{fwd.3} parent=23 // pred_fallthru
          _
        // Predicated region
        $region49: #{fwd.3} parent=23 // pred_check
          %p445 = pneg %p241
        $region50: #{fwd.3} parent=23 // pred_check_branch
          %447 = sbr.rel (%p445) target = $region52
        $region51: #{fwd.3} parent=23 // pred_region
          %p448 = scmp.lt.s32.totalorder %s23, 4
          %s449 = scalar_select %p448, %s23, 4
          %s450 = smul.addr %s449, 16
          %s451 = smul.addr %s450, 8
          %s452 = scalar_lea.vmem %s8, %s451
        $region52: #{fwd.3} parent=23 // pred_fallthru
          _
        // Predicated region
        $region53: #{fwd.3} parent=23 // pred_check
          %p453 = pneg %p267
        $region54: #{fwd.3} parent=23 // pred_check_branch
          %455 = sbr.rel (%p453) target = $region56
        $region55: #{fwd.3} parent=23 // pred_region
          %p456 = scmp.lt.s32.totalorder %s23, 4
          %s457 = scalar_select %p456, %s23, 4
          %s458 = scalar_lea.vmem %s9, %s457
        $region56: #{fwd.3} parent=23 // pred_fallthru
          _
        // Predicated region
        $region57: #{fwd.3} parent=23 // pred_check
          %p459 = pneg %p293
        $region58: #{fwd.3} parent=23 // pred_check_branch
          %461 = sbr.rel (%p459) target = $region60
        $region59: #{fwd.3} parent=23 // pred_region
          %s462 = sand.u32 %s283, 1
          %s463 = scalar_lea.sflag [#allocation3], %s462
          %s464 = sand.u32 %s283, 1
          %s465 = smul.addr %s464, 128
          %s466 = scalar_lea.vmem [#allocation2], %s465
          %s468 = ssub.s32 2048, 2048
          %469 = vsyncadd %s463, %s468
          %s470 = smul.addr %s23, 16
          %s471 = smul.addr %s470, 128
          %s472 = scalar_lea.hbm %s10, %s471
          %s473 = sshll.u32 %s466, 4
          %s474 = int_to_ptr.vmem [resolvable:$true] %s473
          %479 = dma.hbm_to_vmem [thread:$0]  %s472, 2048, %s474, %s463, 128, 128, 8
        $region60: #{fwd.3} parent=23 // pred_fallthru
          _
        // Predicated region
        $region61: #{fwd.3} parent=23 // pred_check
          %p480 = pneg %p319
        $region62: #{fwd.3} parent=23 // pred_check_branch
          %482 = sbr.rel (%p480) target = $region64
        $region63: #{fwd.3} parent=23 // pred_region
          %p483 = scmp.lt.s32.totalorder %s23, 4
          %s484 = scalar_select %p483, %s23, 4
          %s485 = scalar_lea.vmem %s11, %s484
        $region64: #{fwd.3} parent=23 // pred_fallthru
          _
      $region24: #{fwd.3} parent=5 // pred_fallthru
        _
      %p486 = scmp.le.s32.totalorder 1, %s23
      %p487 = scmp.lt.s32.totalorder %s23, 6
      %p488 = pnand %p486, %p487
      %p489 = pneg %p488
      // Predicated region
      $region65: #{fwd.3} parent=5 // pred_check
        _
      $region66: #{fwd.3} parent=5 // pred_check_branch
        %491 = sbr.rel (%p488) target = $region68
      $region67: #{fwd.3} parent=5 // pred_region
        %s492 = ssub.s32 %s23, 1
        %s493 = sand.u32 %s286, 1
        %s494 = scalar_lea.sflag [#allocation3], %s493
        %s495 = sand.u32 %s286, 1
        %s496 = smul.addr %s495, 128
        %s497 = scalar_lea.vmem [#allocation2], %s496
        // Predicated region
        $region69: #{fwd.3} parent=67 // pred_check
          %p498 = pneg %p299
        $region70: #{fwd.3} parent=67 // pred_check_branch
          %500 = sbr.rel (%p498) target = $region72
        $region71: #{fwd.3} parent=67 // pred_region
          %501 = dma.done %s494, 2048
        $region72: #{fwd.3} parent=67 // pred_fallthru
          _
        %p502 = pneg %p44
        %p503 = pneg %p41
        %p504 = pneg %p65
        %p505 = pneg %p62
        %p506 = scmp.lt.s32.totalorder %s28, 4
        %s507 = scalar_select %p506, %s28, 4
        %s508 = smul.addr %s507, 16
        %s509 = smul.addr %s508, 8
        %s510 = scalar_lea.vmem %s2, %s509
        %p511 = pneg %p91
        %p512 = pneg %p88
        %p513 = scmp.lt.s32.totalorder %s28, 4
        %s514 = scalar_select %p513, %s28, 4
        %s515 = scalar_lea.vmem %s3, %s514
        %p516 = pneg %p117
        %p517 = pneg %p114
        %p518 = scmp.lt.s32.totalorder %s28, 4
        %s519 = scalar_select %p518, %s28, 4
        %s520 = smul.addr %s519, 192
        %s521 = smul.addr %s520, 8
        %s522 = scalar_lea.vmem %s4, %s521
        %p523 = pneg %p143
        %p524 = pneg %p140
        %p525 = scmp.lt.s32.totalorder %s28, 4
        %s526 = scalar_select %p525, %s28, 4
        %s527 = smul.addr %s526, 12
        %s528 = scalar_lea.vmem %s5, %s527
        %p529 = pneg %p169
        %p530 = pneg %p166
        %p531 = scmp.lt.s32.totalorder %s28, 4
        %s532 = scalar_select %p531, %s28, 4
        %s533 = smul.addr %s532, 192
        %s534 = smul.addr %s533, 8
        %s535 = scalar_lea.vmem %s6, %s534
        %p536 = pneg %p195
        %p537 = pneg %p192
        %p538 = scmp.lt.s32.totalorder %s28, 4
        %s539 = scalar_select %p538, %s28, 4
        %s540 = scalar_lea.vmem %s7, %s539
        %p541 = pneg %p221
        %p542 = pneg %p218
        %p543 = scmp.lt.s32.totalorder %s28, 4
        %s544 = scalar_select %p543, %s28, 4
        %s545 = smul.addr %s544, 16
        %s546 = smul.addr %s545, 8
        %s547 = scalar_lea.vmem %s8, %s546
        %p548 = pneg %p247
        %p549 = pneg %p244
        %p550 = scmp.lt.s32.totalorder %s28, 4
        %s551 = scalar_select %p550, %s28, 4
        %s552 = scalar_lea.vmem %s9, %s551
        %p553 = pneg %p273
        %p554 = pneg %p270
        %s555 = sand.u32 %s286, 1
        %s556 = scalar_lea.sflag [#allocation3], %s555
        %s557 = sand.u32 %s286, 1
        %s558 = smul.addr %s557, 128
        %s559 = scalar_lea.vmem [#allocation2], %s558
        %p560 = pneg %p299
        %p561 = pneg %p296
        %p562 = scmp.lt.s32.totalorder %s28, 4
        %s563 = scalar_select %p562, %s28, 4
        %s564 = scalar_lea.vmem %s11, %s563
        %p565 = pneg %p325
        %p566 = pneg %p322
        %p567 = pneg %p351
        %p568 = pneg %p348
        %p569 = scmp.lt.s32.totalorder %s28, 4
        %s570 = scalar_select %p569, %s28, 4
        %s571 = smul.addr %s570, 8
        %s572 = scalar_lea.vmem %s12, %s571
        %p573 = pneg %p377
        %p574 = pneg %p374
        %p575 = scmp.lt.s32.totalorder %s28, 4
        %s576 = scalar_select %p575, %s28, 4
        %s577 = smul.addr %s576, 8
        %s578 = scalar_lea.vmem %s13, %s577
        %p579 = scmp.lt.s32.totalorder %s28, 4
        %s580 = scalar_select %p579, %s28, 4
        %s581 = smul.addr %s580, 16
        %s582 = smul.addr %s581, 8
        %s583 = scalar_lea.vmem %s2, %s582
        %p584 = scmp.lt.s32.totalorder %s28, 4
        %s585 = scalar_select %p584, %s28, 4
        %s586 = scalar_lea.vmem %s3, %s585
        %p587 = scmp.lt.s32.totalorder %s28, 4
        %s588 = scalar_select %p587, %s28, 4
        %s589 = smul.addr %s588, 192
        %s590 = smul.addr %s589, 8
        %s591 = scalar_lea.vmem %s4, %s590
        %p592 = scmp.lt.s32.totalorder %s28, 4
        %s593 = scalar_select %p592, %s28, 4
        %s594 = smul.addr %s593, 12
        %s595 = scalar_lea.vmem %s5, %s594
        %p596 = scmp.lt.s32.totalorder %s28, 4
        %s597 = scalar_select %p596, %s28, 4
        %s598 = smul.addr %s597, 192
        %s599 = smul.addr %s598, 8
        %s600 = scalar_lea.vmem %s6, %s599
        %p601 = scmp.lt.s32.totalorder %s28, 4
        %s602 = scalar_select %p601, %s28, 4
        %s603 = scalar_lea.vmem %s7, %s602
        %p604 = scmp.lt.s32.totalorder %s28, 4
        %s605 = scalar_select %p604, %s28, 4
        %s606 = smul.addr %s605, 16
        %s607 = smul.addr %s606, 8
        %s608 = scalar_lea.vmem %s8, %s607
        %p609 = scmp.lt.s32.totalorder %s28, 4
        %s610 = scalar_select %p609, %s28, 4
        %s611 = scalar_lea.vmem %s9, %s610
        %p612 = scmp.lt.s32.totalorder %s28, 4
        %s613 = scalar_select %p612, %s28, 4
        %s614 = scalar_lea.vmem %s11, %s613
        %p615 = scmp.lt.s32.totalorder %s28, 4
        %s616 = scalar_select %p615, %s28, 4
        %s617 = smul.addr %s616, 8
        %s618 = scalar_lea.vmem %s12, %s617
        %p619 = scmp.lt.s32.totalorder %s28, 4
        %s620 = scalar_select %p619, %s28, 4
        %s621 = smul.addr %s620, 8
        %s622 = scalar_lea.vmem %s13, %s621
        %v623 = vld [vmem:[%s0] sm:$0xff]
        %v624 = vld [vmem:[%s1] sm:$0xff]
        %v625 = vld [vmem:[%s1 + $0x8] sm:$0xff]
        %v626 = vld [vmem:[%s1 + $0x10] sm:$0xff]
        %v627 = vld [vmem:[%s1 + $0x18] sm:$0xff]
        %v628 = vld [vmem:[%s1 + $0x20] sm:$0xff]
        %630 = vset.pattern.permute.xlu0 0
        %631 = vperm.xlu0 %630, %v623
        %v632 = vpop.permute.xlu0 %631
        %v634 = vmul.f32 %v632, %v624
        %635 = vset.pattern.permute.xlu0 1
        %636 = vperm.xlu0 %635, %v623
        %v637 = vpop.permute.xlu0 %636
        %v639 = vmul.f32 %v637, %v625
        %v640 = vadd.f32 %v634, %v639
        %641 = vset.pattern.permute.xlu0 2
        %642 = vperm.xlu0 %641, %v623
        %v643 = vpop.permute.xlu0 %642
        %v645 = vmul.f32 %v643, %v626
        %v646 = vadd.f32 %v640, %v645
        %647 = vset.pattern.permute.xlu0 3
        %648 = vperm.xlu0 %647, %v623
        %v649 = vpop.permute.xlu0 %648
        %v651 = vmul.f32 %v649, %v627
        %v652 = vadd.f32 %v646, %v651
        %653 = vset.pattern.permute.xlu0 4
        %654 = vperm.xlu0 %653, %v623
        %v655 = vpop.permute.xlu0 %654
        %v657 = vmul.f32 %v655, %v628
        %v658 = vadd.f32 %v652, %v657
        %659 = vadd.xlane.f32.xlu0 %v623
        %v660 = vpop.xlane.xlu0 %659
        %v661 = vrcp.pop %v660
        %v662 = vmul.f32 %v658, %v661
        %663 = vst [vmem:[%s622] sm:$0xff] %v662
        %v664 = vld [vmem:[%s583] sm:$0xff]
        %v665 = vld [vmem:[%s583 + $0x8] sm:$0xff]
        %v666 = vld [vmem:[%s583 + $0x10] sm:$0xff]
        %v667 = vld [vmem:[%s583 + $0x18] sm:$0xff]
        %v668 = vld [vmem:[%s583 + $0x20] sm:$0xff]
        %v669 = vld [vmem:[%s583 + $0x28] sm:$0xff]
        %v670 = vld [vmem:[%s583 + $0x30] sm:$0xff]
        %v671 = vld [vmem:[%s583 + $0x38] sm:$0xff]
        %v672 = vld [vmem:[%s583 + $0x40] sm:$0xff]
        %v673 = vld [vmem:[%s583 + $0x48] sm:$0xff]
        %v674 = vld [vmem:[%s583 + $0x50] sm:$0xff]
        %v675 = vld [vmem:[%s583 + $0x58] sm:$0xff]
        %v676 = vld [vmem:[%s583 + $0x60] sm:$0xff]
        %v677 = vld [vmem:[%s583 + $0x68] sm:$0xff]
        %v678 = vld [vmem:[%s583 + $0x70] sm:$0xff]
        %v679 = vld [vmem:[%s583 + $0x78] sm:$0xff]
        %v680 = vld [vmem:[%s586] sm:$0x1]
        %v682 = vlaneseq
        %v683 = vshrl.u32 %v682, 7
        %v684 = vsub.s32 0, %v683
        %v685 = vrot.slane %v680, %v684
        %687 = vmatprep.subr.mxu0 0.0
        %688 = vmatpush1.msra.mxu0 %v664
        %689 = vmatprep.subr.mxu0 0.0
        %690 = vmatpush1.msra.mxu0 %v665
        %691 = vmatprep.subr.mxu0 0.0
        %692 = vmatpush1.msra.mxu0 %v666
        %693 = vmatprep.subr.mxu0 0.0
        %694 = vmatpush1.msra.mxu0 %v667
        %695 = vmatprep.subr.mxu0 0.0
        %696 = vmatpush1.msra.mxu0 %v668
        %697 = vmatprep.subr.mxu0 0.0
        %698 = vmatpush1.msra.mxu0 %v669
        %699 = vmatprep.subr.mxu0 0.0
        %700 = vmatpush1.msra.mxu0 %v670
        %701 = vmatprep.subr.mxu0 0.0
        %702 = vmatpush1.msra.mxu0 %v671
        %703 = vmatprep.subr.mxu0 0.0
        %704 = vmatpush1.msra.mxu0 %v672
        %705 = vmatprep.subr.mxu0 0.0
        %706 = vmatpush1.msra.mxu0 %v673
        %707 = vmatprep.subr.mxu0 0.0
        %708 = vmatpush1.msra.mxu0 %v674
        %709 = vmatprep.subr.mxu0 0.0
        %710 = vmatpush1.msra.mxu0 %v675
        %711 = vmatprep.subr.mxu0 0.0
        %712 = vmatpush1.msra.mxu0 %v676
        %713 = vmatprep.subr.mxu0 0.0
        %714 = vmatpush1.msra.mxu0 %v677
        %715 = vmatprep.subr.mxu0 0.0
        %716 = vmatpush1.msra.mxu0 %v678
        %717 = vmatprep.subr.mxu0 0.0
        %718 = vmatpush1.msra.mxu0 %v679
        %719 = vmatprep.subr.mxu0 0.0
        %720 = vmatpush1.msra.mxu0 0.0
        %721 = vmatprep.subr.mxu0 0.0
        %722 = vmatpush1.msra.mxu0 0.0
        %723 = vmatprep.subr.mxu0 0.0
        %724 = vmatpush1.msra.mxu0 0.0
        %725 = vmatprep.subr.mxu0 0.0
        %726 = vmatpush1.msra.mxu0 0.0
        %727 = vmatprep.subr.mxu0 0.0
        %728 = vmatpush1.msra.mxu0 0.0
        %729 = vmatprep.subr.mxu0 0.0
        %730 = vmatpush1.msra.mxu0 0.0
        %731 = vmatprep.subr.mxu0 0.0
        %732 = vmatpush1.msra.mxu0 0.0
        %733 = vmatprep.subr.mxu0 0.0
        %734 = vmatpush1.msra.mxu0 0.0
        %735 = vmatprep.subr.mxu0 0.0
        %736 = vmatpush1.msra.mxu0 0.0
        %737 = vmatprep.subr.mxu0 0.0
        %738 = vmatpush1.msra.mxu0 0.0
        %739 = vmatprep.subr.mxu0 0.0
        %740 = vmatpush1.msra.mxu0 0.0
        %741 = vmatprep.subr.mxu0 0.0
        %742 = vmatpush1.msra.mxu0 0.0
        %743 = vmatprep.subr.mxu0 0.0
        %744 = vmatpush1.msra.mxu0 0.0
        %745 = vmatprep.subr.mxu0 0.0
        %746 = vmatpush1.msra.mxu0 0.0
        %747 = vmatprep.subr.mxu0 0.0
        %748 = vmatpush1.msra.mxu0 0.0
        %749 = vmatprep.subr.mxu0 0.0
        %750 = vmatpush1.msra.mxu0 0.0
        %751 = vmatprep.mubr.f32.mxu0 0.0
        %752 = vmatmul.mubr.f32.gmra.mrb[0].mxu0 %v662
        %v753 = vpop.f32.mrb[0].mxu0
        %v754 = vadd.f32 %v685, %v753
        %v755 = vpop.f32.mrb[0].mxu0
        %756 = vdwg.mxu0
        %v757 = vmax.f32 %v754, 0.0
        %v758 = vld [vmem:[%s591] sm:$0xff]
        %v759 = vld [vmem:[%s591 + $0x8] sm:$0xff]
        %v760 = vld [vmem:[%s591 + $0x10] sm:$0xff]
        %v761 = vld [vmem:[%s591 + $0x18] sm:$0xff]
        %v762 = vld [vmem:[%s591 + $0x20] sm:$0xff]
        %v763 = vld [vmem:[%s591 + $0x28] sm:$0xff]
        %v764 = vld [vmem:[%s591 + $0x30] sm:$0xff]
        %v765 = vld [vmem:[%s591 + $0x38] sm:$0xff]
        %v766 = vld [vmem:[%s591 + $0x40] sm:$0xff]
        %v767 = vld [vmem:[%s591 + $0x48] sm:$0xff]
        %v768 = vld [vmem:[%s591 + $0x50] sm:$0xff]
        %v769 = vld [vmem:[%s591 + $0x58] sm:$0xff]
        %v770 = vld [vmem:[%s591 + $0x60] sm:$0xff]
        %v771 = vld [vmem:[%s591 + $0x68] sm:$0xff]
        %v772 = vld [vmem:[%s591 + $0x70] sm:$0xff]
        %v773 = vld [vmem:[%s591 + $0x78] sm:$0xff]
        %v774 = vld [vmem:[%s591 + $0x80] sm:$0xff]
        %v775 = vld [vmem:[%s591 + $0x88] sm:$0xff]
        %v776 = vld [vmem:[%s591 + $0x90] sm:$0xff]
        %v777 = vld [vmem:[%s591 + $0x98] sm:$0xff]
        %v778 = vld [vmem:[%s591 + $0xa0] sm:$0xff]
        %v779 = vld [vmem:[%s591 + $0xa8] sm:$0xff]
        %v780 = vld [vmem:[%s591 + $0xb0] sm:$0xff]
        %v781 = vld [vmem:[%s591 + $0xb8] sm:$0xff]
        %v782 = vld [vmem:[%s591 + $0xc0] sm:$0xff]
        %v783 = vld [vmem:[%s591 + $0xc8] sm:$0xff]
        %v784 = vld [vmem:[%s591 + $0xd0] sm:$0xff]
        %v785 = vld [vmem:[%s591 + $0xd8] sm:$0xff]
        %v786 = vld [vmem:[%s591 + $0xe0] sm:$0xff]
        %v787 = vld [vmem:[%s591 + $0xe8] sm:$0xff]
        %v788 = vld [vmem:[%s591 + $0xf0] sm:$0xff]
        %v789 = vld [vmem:[%s591 + $0xf8] sm:$0xff]
        %v790 = vld [vmem:[%s591 + $0x100] sm:$0xff]
        %v791 = vld [vmem:[%s591 + $0x108] sm:$0xff]
        %v792 = vld [vmem:[%s591 + $0x110] sm:$0xff]
        %v793 = vld [vmem:[%s591 + $0x118] sm:$0xff]
        %v794 = vld [vmem:[%s591 + $0x120] sm:$0xff]
        %v795 = vld [vmem:[%s591 + $0x128] sm:$0xff]
        %v796 = vld [vmem:[%s591 + $0x130] sm:$0xff]
        %v797 = vld [vmem:[%s591 + $0x138] sm:$0xff]
        %v798 = vld [vmem:[%s591 + $0x140] sm:$0xff]
        %v799 = vld [vmem:[%s591 + $0x148] sm:$0xff]
        %v800 = vld [vmem:[%s591 + $0x150] sm:$0xff]
        %v801 = vld [vmem:[%s591 + $0x158] sm:$0xff]
        %v802 = vld [vmem:[%s591 + $0x160] sm:$0xff]
        %v803 = vld [vmem:[%s591 + $0x168] sm:$0xff]
        %v804 = vld [vmem:[%s591 + $0x170] sm:$0xff]
        %v805 = vld [vmem:[%s591 + $0x178] sm:$0xff]
        %v806 = vld [vmem:[%s591 + $0x180] sm:$0xff]
        %v807 = vld [vmem:[%s591 + $0x188] sm:$0xff]
        %v808 = vld [vmem:[%s591 + $0x190] sm:$0xff]
        %v809 = vld [vmem:[%s591 + $0x198] sm:$0xff]
        %v810 = vld [vmem:[%s591 + $0x1a0] sm:$0xff]
        %v811 = vld [vmem:[%s591 + $0x1a8] sm:$0xff]
        %v812 = vld [vmem:[%s591 + $0x1b0] sm:$0xff]
        %v813 = vld [vmem:[%s591 + $0x1b8] sm:$0xff]
        %v814 = vld [vmem:[%s591 + $0x1c0] sm:$0xff]
        %v815 = vld [vmem:[%s591 + $0x1c8] sm:$0xff]
        %v816 = vld [vmem:[%s591 + $0x1d0] sm:$0xff]
        %v817 = vld [vmem:[%s591 + $0x1d8] sm:$0xff]
        %v818 = vld [vmem:[%s591 + $0x1e0] sm:$0xff]
        %v819 = vld [vmem:[%s591 + $0x1e8] sm:$0xff]
        %v820 = vld [vmem:[%s591 + $0x1f0] sm:$0xff]
        %v821 = vld [vmem:[%s591 + $0x1f8] sm:$0xff]
        %v822 = vld [vmem:[%s591 + $0x200] sm:$0xff]
        %v823 = vld [vmem:[%s591 + $0x208] sm:$0xff]
        %v824 = vld [vmem:[%s591 + $0x210] sm:$0xff]
        %v825 = vld [vmem:[%s591 + $0x218] sm:$0xff]
        %v826 = vld [vmem:[%s591 + $0x220] sm:$0xff]
        %v827 = vld [vmem:[%s591 + $0x228] sm:$0xff]
        %v828 = vld [vmem:[%s591 + $0x230] sm:$0xff]
        %v829 = vld [vmem:[%s591 + $0x238] sm:$0xff]
        %v830 = vld [vmem:[%s591 + $0x240] sm:$0xff]
        %v831 = vld [vmem:[%s591 + $0x248] sm:$0xff]
        %v832 = vld [vmem:[%s591 + $0x250] sm:$0xff]
        %v833 = vld [vmem:[%s591 + $0x258] sm:$0xff]
        %v834 = vld [vmem:[%s591 + $0x260] sm:$0xff]
        %v835 = vld [vmem:[%s591 + $0x268] sm:$0xff]
        %v836 = vld [vmem:[%s591 + $0x270] sm:$0xff]
        %v837 = vld [vmem:[%s591 + $0x278] sm:$0xff]
        %v838 = vld [vmem:[%s591 + $0x280] sm:$0xff]
        %v839 = vld [vmem:[%s591 + $0x288] sm:$0xff]
        %v840 = vld [vmem:[%s591 + $0x290] sm:$0xff]
        %v841 = vld [vmem:[%s591 + $0x298] sm:$0xff]
        %v842 = vld [vmem:[%s591 + $0x2a0] sm:$0xff]
        %v843 = vld [vmem:[%s591 + $0x2a8] sm:$0xff]
        %v844 = vld [vmem:[%s591 + $0x2b0] sm:$0xff]
        %v845 = vld [vmem:[%s591 + $0x2b8] sm:$0xff]
        %v846 = vld [vmem:[%s591 + $0x2c0] sm:$0xff]
        %v847 = vld [vmem:[%s591 + $0x2c8] sm:$0xff]
        %v848 = vld [vmem:[%s591 + $0x2d0] sm:$0xff]
        %v849 = vld [vmem:[%s591 + $0x2d8] sm:$0xff]
        %v850 = vld [vmem:[%s591 + $0x2e0] sm:$0xff]
        %v851 = vld [vmem:[%s591 + $0x2e8] sm:$0xff]
        %v852 = vld [vmem:[%s591 + $0x2f0] sm:$0xff]
        %v853 = vld [vmem:[%s591 + $0x2f8] sm:$0xff]
        %v854 = vld [vmem:[%s591 + $0x300] sm:$0xff]
        %v855 = vld [vmem:[%s591 + $0x308] sm:$0xff]
        %v856 = vld [vmem:[%s591 + $0x310] sm:$0xff]
        %v857 = vld [vmem:[%s591 + $0x318] sm:$0xff]
        %v858 = vld [vmem:[%s591 + $0x320] sm:$0xff]
        %v859 = vld [vmem:[%s591 + $0x328] sm:$0xff]
        %v860 = vld [vmem:[%s591 + $0x330] sm:$0xff]
        %v861 = vld [vmem:[%s591 + $0x338] sm:$0xff]
        %v862 = vld [vmem:[%s591 + $0x340] sm:$0xff]
        %v863 = vld [vmem:[%s591 + $0x348] sm:$0xff]
        %v864 = vld [vmem:[%s591 + $0x350] sm:$0xff]
        %v865 = vld [vmem:[%s591 + $0x358] sm:$0xff]
        %v866 = vld [vmem:[%s591 + $0x360] sm:$0xff]
        %v867 = vld [vmem:[%s591 + $0x368] sm:$0xff]
        %v868 = vld [vmem:[%s591 + $0x370] sm:$0xff]
        %v869 = vld [vmem:[%s591 + $0x378] sm:$0xff]
        %v870 = vld [vmem:[%s591 + $0x380] sm:$0xff]
        %v871 = vld [vmem:[%s591 + $0x388] sm:$0xff]
        %v872 = vld [vmem:[%s591 + $0x390] sm:$0xff]
        %v873 = vld [vmem:[%s591 + $0x398] sm:$0xff]
        %v874 = vld [vmem:[%s591 + $0x3a0] sm:$0xff]
        %v875 = vld [vmem:[%s591 + $0x3a8] sm:$0xff]
        %v876 = vld [vmem:[%s591 + $0x3b0] sm:$0xff]
        %v877 = vld [vmem:[%s591 + $0x3b8] sm:$0xff]
        %v878 = vld [vmem:[%s591 + $0x3c0] sm:$0xff]
        %v879 = vld [vmem:[%s591 + $0x3c8] sm:$0xff]
        %v880 = vld [vmem:[%s591 + $0x3d0] sm:$0xff]
        %v881 = vld [vmem:[%s591 + $0x3d8] sm:$0xff]
        %v882 = vld [vmem:[%s591 + $0x3e0] sm:$0xff]
        %v883 = vld [vmem:[%s591 + $0x3e8] sm:$0xff]
        %v884 = vld [vmem:[%s591 + $0x3f0] sm:$0xff]
        %v885 = vld [vmem:[%s591 + $0x3f8] sm:$0xff]
        %v886 = vld [vmem:[%s591 + $0x400] sm:$0xff]
        %v887 = vld [vmem:[%s591 + $0x408] sm:$0xff]
        %v888 = vld [vmem:[%s591 + $0x410] sm:$0xff]
        %v889 = vld [vmem:[%s591 + $0x418] sm:$0xff]
        %v890 = vld [vmem:[%s591 + $0x420] sm:$0xff]
        %v891 = vld [vmem:[%s591 + $0x428] sm:$0xff]
        %v892 = vld [vmem:[%s591 + $0x430] sm:$0xff]
        %v893 = vld [vmem:[%s591 + $0x438] sm:$0xff]
        %v894 = vld [vmem:[%s591 + $0x440] sm:$0xff]
        %v895 = vld [vmem:[%s591 + $0x448] sm:$0xff]
        %v896 = vld [vmem:[%s591 + $0x450] sm:$0xff]
        %v897 = vld [vmem:[%s591 + $0x458] sm:$0xff]
        %v898 = vld [vmem:[%s591 + $0x460] sm:$0xff]
        %v899 = vld [vmem:[%s591 + $0x468] sm:$0xff]
        %v900 = vld [vmem:[%s591 + $0x470] sm:$0xff]
        %v901 = vld [vmem:[%s591 + $0x478] sm:$0xff]
        %v902 = vld [vmem:[%s591 + $0x480] sm:$0xff]
        %v903 = vld [vmem:[%s591 + $0x488] sm:$0xff]
        %v904 = vld [vmem:[%s591 + $0x490] sm:$0xff]
        %v905 = vld [vmem:[%s591 + $0x498] sm:$0xff]
        %v906 = vld [vmem:[%s591 + $0x4a0] sm:$0xff]
        %v907 = vld [vmem:[%s591 + $0x4a8] sm:$0xff]
        %v908 = vld [vmem:[%s591 + $0x4b0] sm:$0xff]
        %v909 = vld [vmem:[%s591 + $0x4b8] sm:$0xff]
        %v910 = vld [vmem:[%s591 + $0x4c0] sm:$0xff]
        %v911 = vld [vmem:[%s591 + $0x4c8] sm:$0xff]
        %v912 = vld [vmem:[%s591 + $0x4d0] sm:$0xff]
        %v913 = vld [vmem:[%s591 + $0x4d8] sm:$0xff]
        %v914 = vld [vmem:[%s591 + $0x4e0] sm:$0xff]
        %v915 = vld [vmem:[%s591 + $0x4e8] sm:$0xff]
        %v916 = vld [vmem:[%s591 + $0x4f0] sm:$0xff]
        %v917 = vld [vmem:[%s591 + $0x4f8] sm:$0xff]
        %v918 = vld [vmem:[%s591 + $0x500] sm:$0xff]
        %v919 = vld [vmem:[%s591 + $0x508] sm:$0xff]
        %v920 = vld [vmem:[%s591 + $0x510] sm:$0xff]
        %v921 = vld [vmem:[%s591 + $0x518] sm:$0xff]
        %v922 = vld [vmem:[%s591 + $0x520] sm:$0xff]
        %v923 = vld [vmem:[%s591 + $0x528] sm:$0xff]
        %v924 = vld [vmem:[%s591 + $0x530] sm:$0xff]
        %v925 = vld [vmem:[%s591 + $0x538] sm:$0xff]
        %v926 = vld [vmem:[%s591 + $0x540] sm:$0xff]
        %v927 = vld [vmem:[%s591 + $0x548] sm:$0xff]
        %v928 = vld [vmem:[%s591 + $0x550] sm:$0xff]
        %v929 = vld [vmem:[%s591 + $0x558] sm:$0xff]
        %v930 = vld [vmem:[%s591 + $0x560] sm:$0xff]
        %v931 = vld [vmem:[%s591 + $0x568] sm:$0xff]
        %v932 = vld [vmem:[%s591 + $0x570] sm:$0xff]
        %v933 = vld [vmem:[%s591 + $0x578] sm:$0xff]
        %v934 = vld [vmem:[%s591 + $0x580] sm:$0xff]
        %v935 = vld [vmem:[%s591 + $0x588] sm:$0xff]
        %v936 = vld [vmem:[%s591 + $0x590] sm:$0xff]
        %v937 = vld [vmem:[%s591 + $0x598] sm:$0xff]
        %v938 = vld [vmem:[%s591 + $0x5a0] sm:$0xff]
        %v939 = vld [vmem:[%s591 + $0x5a8] sm:$0xff]
        %v940 = vld [vmem:[%s591 + $0x5b0] sm:$0xff]
        %v941 = vld [vmem:[%s591 + $0x5b8] sm:$0xff]
        %v942 = vld [vmem:[%s591 + $0x5c0] sm:$0xff]
        %v943 = vld [vmem:[%s591 + $0x5c8] sm:$0xff]
        %v944 = vld [vmem:[%s591 + $0x5d0] sm:$0xff]
        %v945 = vld [vmem:[%s591 + $0x5d8] sm:$0xff]
        %v946 = vld [vmem:[%s591 + $0x5e0] sm:$0xff]
        %v947 = vld [vmem:[%s591 + $0x5e8] sm:$0xff]
        %v948 = vld [vmem:[%s591 + $0x5f0] sm:$0xff]
        %v949 = vld [vmem:[%s591 + $0x5f8] sm:$0xff]
        %v950 = vld [vmem:[%s595] sm:$0xff]
        %v951 = vld [vmem:[%s595 + $0x8] sm:$0xf]
        %v954 = vlaneseq
        %v955 = vshrl.u32 %v954, 7
        %v956 = vsub.s32 0, %v955
        %v957 = vrot.slane %v950, %v956
        %v958 = vlaneseq
        %v959 = vshrl.u32 %v958, 7
        %v960 = vsub.s32 1, %v959
        %v961 = vrot.slane %v950, %v960
        %v962 = vlaneseq
        %v963 = vshrl.u32 %v962, 7
        %v964 = vsub.s32 2, %v963
        %v965 = vrot.slane %v950, %v964
        %v966 = vlaneseq
        %v967 = vshrl.u32 %v966, 7
        %v968 = vsub.s32 3, %v967
        %v969 = vrot.slane %v950, %v968
        %v970 = vlaneseq
        %v971 = vshrl.u32 %v970, 7
        %v972 = vsub.s32 4, %v971
        %v973 = vrot.slane %v950, %v972
        %v974 = vlaneseq
        %v975 = vshrl.u32 %v974, 7
        %v976 = vsub.s32 5, %v975
        %v977 = vrot.slane %v950, %v976
        %v978 = vlaneseq
        %v979 = vshrl.u32 %v978, 7
        %v980 = vsub.s32 6, %v979
        %v981 = vrot.slane %v950, %v980
        %v982 = vlaneseq
        %v983 = vshrl.u32 %v982, 7
        %v984 = vsub.s32 7, %v983
        %v985 = vrot.slane %v950, %v984
        %v986 = vlaneseq
        %v987 = vshrl.u32 %v986, 7
        %v988 = vsub.s32 0, %v987
        %v989 = vrot.slane %v951, %v988
        %v990 = vlaneseq
        %v991 = vshrl.u32 %v990, 7
        %v992 = vsub.s32 1, %v991
        %v993 = vrot.slane %v951, %v992
        %v994 = vlaneseq
        %v995 = vshrl.u32 %v994, 7
        %v996 = vsub.s32 2, %v995
        %v997 = vrot.slane %v951, %v996
        %v998 = vlaneseq
        %v999 = vshrl.u32 %v998, 7
        %v1000 = vsub.s32 3, %v999
        %v1001 = vrot.slane %v951, %v1000
        %1014 = vmatprep.subr.mxu0 %v759
        %1015 = vmatpush1.msra.mxu0 %v758
        %1016 = vmatprep.subr.mxu0 %v771
        %1017 = vmatpush1.msra.mxu0 %v770
        %1018 = vmatprep.subr.mxu0 %v783
        %1019 = vmatpush1.msra.mxu0 %v782
        %1020 = vmatprep.subr.mxu0 %v795
        %1021 = vmatpush1.msra.mxu0 %v794
        %1022 = vmatprep.subr.mxu0 %v807
        %1023 = vmatpush1.msra.mxu0 %v806
        %1024 = vmatprep.subr.mxu0 %v819
        %1025 = vmatpush1.msra.mxu0 %v818
        %1026 = vmatprep.subr.mxu0 %v831
        %1027 = vmatpush1.msra.mxu0 %v830
        %1028 = vmatprep.subr.mxu0 %v843
        %1029 = vmatpush1.msra.mxu0 %v842
        %1030 = vmatprep.subr.mxu0 %v855
        %1031 = vmatpush1.msra.mxu0 %v854
        %1032 = vmatprep.subr.mxu0 %v867
        %1033 = vmatpush1.msra.mxu0 %v866
        %1034 = vmatprep.subr.mxu0 %v879
        %1035 = vmatpush1.msra.mxu0 %v878
        %1036 = vmatprep.subr.mxu0 %v891
        %1037 = vmatpush1.msra.mxu0 %v890
        %1038 = vmatprep.subr.mxu0 %v903
        %1039 = vmatpush1.msra.mxu0 %v902
        %1040 = vmatprep.subr.mxu0 %v915
        %1041 = vmatpush1.msra.mxu0 %v914
        %1042 = vmatprep.subr.mxu0 %v927
        %1043 = vmatpush1.msra.mxu0 %v926
        %1044 = vmatprep.subr.mxu0 %v939
        %1045 = vmatpush1.msra.mxu0 %v938
        %1046 = vmatprep.subr.mxu0 0.0
        %1047 = vmatpush1.msra.mxu0 0.0
        %1048 = vmatprep.subr.mxu0 0.0
        %1049 = vmatpush1.msra.mxu0 0.0
        %1050 = vmatprep.subr.mxu0 0.0
        %1051 = vmatpush1.msra.mxu0 0.0
        %1052 = vmatprep.subr.mxu0 0.0
        %1053 = vmatpush1.msra.mxu0 0.0
        %1054 = vmatprep.subr.mxu0 0.0
        %1055 = vmatpush1.msra.mxu0 0.0
        %1056 = vmatprep.subr.mxu0 0.0
        %1057 = vmatpush1.msra.mxu0 0.0
        %1058 = vmatprep.subr.mxu0 0.0
        %1059 = vmatpush1.msra.mxu0 0.0
        %1060 = vmatprep.subr.mxu0 0.0
        %1061 = vmatpush1.msra.mxu0 0.0
        %1062 = vmatprep.subr.mxu0 0.0
        %1063 = vmatpush1.msra.mxu0 0.0
        %1064 = vmatprep.subr.mxu0 0.0
        %1065 = vmatpush1.msra.mxu0 0.0
        %1066 = vmatprep.subr.mxu0 0.0
        %1067 = vmatpush1.msra.mxu0 0.0
        %1068 = vmatprep.subr.mxu0 0.0
        %1069 = vmatpush1.msra.mxu0 0.0
        %1070 = vmatprep.subr.mxu0 0.0
        %1071 = vmatpush1.msra.mxu0 0.0
        %1072 = vmatprep.subr.mxu0 0.0
        %1073 = vmatpush1.msra.mxu0 0.0
        %1074 = vmatprep.subr.mxu0 0.0
        %1075 = vmatpush1.msra.mxu0 0.0
        %1076 = vmatprep.subr.mxu0 0.0
        %1077 = vmatpush1.msra.mxu0 0.0
        %1078 = vmatprep.mubr.f32.mxu0 0.0
        %1079 = vmatmul.mubr.f32.gmra.mrb[0].mxu0 %v757
        %v1080 = vpop.f32.mrb[0].mxu0
        %v1081 = vadd.f32 %v957, %v1080
        %v1082 = vpop.f32.mrb[0].mxu0
        %v1083 = vadd.f32 %v961, %v1082
        %1084 = vdwg.mxu0
        %1085 = vmatprep.subr.mxu0 %v761
        %1086 = vmatpush1.msra.mxu0 %v760
        %1087 = vmatprep.subr.mxu0 %v773
        %1088 = vmatpush1.msra.mxu0 %v772
        %1089 = vmatprep.subr.mxu0 %v785
        %1090 = vmatpush1.msra.mxu0 %v784
        %1091 = vmatprep.subr.mxu0 %v797
        %1092 = vmatpush1.msra.mxu0 %v796
        %1093 = vmatprep.subr.mxu0 %v809
        %1094 = vmatpush1.msra.mxu0 %v808
        %1095 = vmatprep.subr.mxu0 %v821
        %1096 = vmatpush1.msra.mxu0 %v820
        %1097 = vmatprep.subr.mxu0 %v833
        %1098 = vmatpush1.msra.mxu0 %v832
        %1099 = vmatprep.subr.mxu0 %v845
        %1100 = vmatpush1.msra.mxu0 %v844
        %1101 = vmatprep.subr.mxu0 %v857
        %1102 = vmatpush1.msra.mxu0 %v856
        %1103 = vmatprep.subr.mxu0 %v869
        %1104 = vmatpush1.msra.mxu0 %v868
        %1105 = vmatprep.subr.mxu0 %v881
        %1106 = vmatpush1.msra.mxu0 %v880
        %1107 = vmatprep.subr.mxu0 %v893
        %1108 = vmatpush1.msra.mxu0 %v892
        %1109 = vmatprep.subr.mxu0 %v905
        %1110 = vmatpush1.msra.mxu0 %v904
        %1111 = vmatprep.subr.mxu0 %v917
        %1112 = vmatpush1.msra.mxu0 %v916
        %1113 = vmatprep.subr.mxu0 %v929
        %1114 = vmatpush1.msra.mxu0 %v928
        %1115 = vmatprep.subr.mxu0 %v941
        %1116 = vmatpush1.msra.mxu0 %v940
        %1117 = vmatprep.subr.mxu0 0.0
        %1118 = vmatpush1.msra.mxu0 0.0
        %1119 = vmatprep.subr.mxu0 0.0
        %1120 = vmatpush1.msra.mxu0 0.0
        %1121 = vmatprep.subr.mxu0 0.0
        %1122 = vmatpush1.msra.mxu0 0.0
        %1123 = vmatprep.subr.mxu0 0.0
        %1124 = vmatpush1.msra.mxu0 0.0
        %1125 = vmatprep.subr.mxu0 0.0
        %1126 = vmatpush1.msra.mxu0 0.0
        %1127 = vmatprep.subr.mxu0 0.0
        %1128 = vmatpush1.msra.mxu0 0.0
        %1129 = vmatprep.subr.mxu0 0.0
        %1130 = vmatpush1.msra.mxu0 0.0
        %1131 = vmatprep.subr.mxu0 0.0
        %1132 = vmatpush1.msra.mxu0 0.0
        %1133 = vmatprep.subr.mxu0 0.0
        %1134 = vmatpush1.msra.mxu0 0.0
        %1135 = vmatprep.subr.mxu0 0.0
        %1136 = vmatpush1.msra.mxu0 0.0
        %1137 = vmatprep.subr.mxu0 0.0
        %1138 = vmatpush1.msra.mxu0 0.0
        %1139 = vmatprep.subr.mxu0 0.0
        %1140 = vmatpush1.msra.mxu0 0.0
        %1141 = vmatprep.subr.mxu0 0.0
        %1142 = vmatpush1.msra.mxu0 0.0
        %1143 = vmatprep.subr.mxu0 0.0
        %1144 = vmatpush1.msra.mxu0 0.0
        %1145 = vmatprep.subr.mxu0 0.0
        %1146 = vmatpush1.msra.mxu0 0.0
        %1147 = vmatprep.subr.mxu0 0.0
        %1148 = vmatpush1.msra.mxu0 0.0
        %1149 = vmatprep.mubr.f32.mxu0 0.0
        %1150 = vmatmul.mubr.f32.gmra.mrb[0].mxu0 %v757
        %v1151 = vpop.f32.mrb[0].mxu0
        %v1152 = vadd.f32 %v965, %v1151
        %v1153 = vpop.f32.mrb[0].mxu0
        %v1154 = vadd.f32 %v969, %v1153
        %1155 = vdwg.mxu0
        %1156 = vmatprep.subr.mxu0 %v763
        %1157 = vmatpush1.msra.mxu0 %v762
        %1158 = vmatprep.subr.mxu0 %v775
        %1159 = vmatpush1.msra.mxu0 %v774
        %1160 = vmatprep.subr.mxu0 %v787
        %1161 = vmatpush1.msra.mxu0 %v786
        %1162 = vmatprep.subr.mxu0 %v799
        %1163 = vmatpush1.msra.mxu0 %v798
        %1164 = vmatprep.subr.mxu0 %v811
        %1165 = vmatpush1.msra.mxu0 %v810
        %1166 = vmatprep.subr.mxu0 %v823
        %1167 = vmatpush1.msra.mxu0 %v822
        %1168 = vmatprep.subr.mxu0 %v835
        %1169 = vmatpush1.msra.mxu0 %v834
        %1170 = vmatprep.subr.mxu0 %v847
        %1171 = vmatpush1.msra.mxu0 %v846
        %1172 = vmatprep.subr.mxu0 %v859
        %1173 = vmatpush1.msra.mxu0 %v858
        %1174 = vmatprep.subr.mxu0 %v871
        %1175 = vmatpush1.msra.mxu0 %v870
        %1176 = vmatprep.subr.mxu0 %v883
        %1177 = vmatpush1.msra.mxu0 %v882
        %1178 = vmatprep.subr.mxu0 %v895
        %1179 = vmatpush1.msra.mxu0 %v894
        %1180 = vmatprep.subr.mxu0 %v907
        %1181 = vmatpush1.msra.mxu0 %v906
        %1182 = vmatprep.subr.mxu0 %v919
        %1183 = vmatpush1.msra.mxu0 %v918
        %1184 = vmatprep.subr.mxu0 %v931
        %1185 = vmatpush1.msra.mxu0 %v930
        %1186 = vmatprep.subr.mxu0 %v943
        %1187 = vmatpush1.msra.mxu0 %v942
        %1188 = vmatprep.subr.mxu0 0.0
        %1189 = vmatpush1.msra.mxu0 0.0
        %1190 = vmatprep.subr.mxu0 0.0
        %1191 = vmatpush1.msra.mxu0 0.0
        %1192 = vmatprep.subr.mxu0 0.0
        %1193 = vmatpush1.msra.mxu0 0.0
        %1194 = vmatprep.subr.mxu0 0.0
        %1195 = vmatpush1.msra.mxu0 0.0
        %1196 = vmatprep.subr.mxu0 0.0
        %1197 = vmatpush1.msra.mxu0 0.0
        %1198 = vmatprep.subr.mxu0 0.0
        %1199 = vmatpush1.msra.mxu0 0.0
        %1200 = vmatprep.subr.mxu0 0.0
        %1201 = vmatpush1.msra.mxu0 0.0
        %1202 = vmatprep.subr.mxu0 0.0
        %1203 = vmatpush1.msra.mxu0 0.0
        %1204 = vmatprep.subr.mxu0 0.0
        %1205 = vmatpush1.msra.mxu0 0.0
        %1206 = vmatprep.subr.mxu0 0.0
        %1207 = vmatpush1.msra.mxu0 0.0
        %1208 = vmatprep.subr.mxu0 0.0
        %1209 = vmatpush1.msra.mxu0 0.0
        %1210 = vmatprep.subr.mxu0 0.0
        %1211 = vmatpush1.msra.mxu0 0.0
        %1212 = vmatprep.subr.mxu0 0.0
        %1213 = vmatpush1.msra.mxu0 0.0
        %1214 = vmatprep.subr.mxu0 0.0
        %1215 = vmatpush1.msra.mxu0 0.0
        %1216 = vmatprep.subr.mxu0 0.0
        %1217 = vmatpush1.msra.mxu0 0.0
        %1218 = vmatprep.subr.mxu0 0.0
        %1219 = vmatpush1.msra.mxu0 0.0
        %1220 = vmatprep.mubr.f32.mxu0 0.0
        %1221 = vmatmul.mubr.f32.gmra.mrb[0].mxu0 %v757
        %v1222 = vpop.f32.mrb[0].mxu0
        %v1223 = vadd.f32 %v973, %v1222
        %v1224 = vpop.f32.mrb[0].mxu0
        %v1225 = vadd.f32 %v977, %v1224
        %1226 = vdwg.mxu0
        %1227 = vmatprep.subr.mxu0 %v765
        %1228 = vmatpush1.msra.mxu0 %v764
        %1229 = vmatprep.subr.mxu0 %v777
        %1230 = vmatpush1.msra.mxu0 %v776
        %1231 = vmatprep.subr.mxu0 %v789
        %1232 = vmatpush1.msra.mxu0 %v788
        %1233 = vmatprep.subr.mxu0 %v801
        %1234 = vmatpush1.msra.mxu0 %v800
        %1235 = vmatprep.subr.mxu0 %v813
        %1236 = vmatpush1.msra.mxu0 %v812
        %1237 = vmatprep.subr.mxu0 %v825
        %1238 = vmatpush1.msra.mxu0 %v824
        %1239 = vmatprep.subr.mxu0 %v837
        %1240 = vmatpush1.msra.mxu0 %v836
        %1241 = vmatprep.subr.mxu0 %v849
        %1242 = vmatpush1.msra.mxu0 %v848
        %1243 = vmatprep.subr.mxu0 %v861
        %1244 = vmatpush1.msra.mxu0 %v860
        %1245 = vmatprep.subr.mxu0 %v873
        %1246 = vmatpush1.msra.mxu0 %v872
        %1247 = vmatprep.subr.mxu0 %v885
        %1248 = vmatpush1.msra.mxu0 %v884
        %1249 = vmatprep.subr.mxu0 %v897
        %1250 = vmatpush1.msra.mxu0 %v896
        %1251 = vmatprep.subr.mxu0 %v909
        %1252 = vmatpush1.msra.mxu0 %v908
        %1253 = vmatprep.subr.mxu0 %v921
        %1254 = vmatpush1.msra.mxu0 %v920
        %1255 = vmatprep.subr.mxu0 %v933
        %1256 = vmatpush1.msra.mxu0 %v932
        %1257 = vmatprep.subr.mxu0 %v945
        %1258 = vmatpush1.msra.mxu0 %v944
        %1259 = vmatprep.subr.mxu0 0.0
        %1260 = vmatpush1.msra.mxu0 0.0
        %1261 = vmatprep.subr.mxu0 0.0
        %1262 = vmatpush1.msra.mxu0 0.0
        %1263 = vmatprep.subr.mxu0 0.0
        %1264 = vmatpush1.msra.mxu0 0.0
        %1265 = vmatprep.subr.mxu0 0.0
        %1266 = vmatpush1.msra.mxu0 0.0
        %1267 = vmatprep.subr.mxu0 0.0
        %1268 = vmatpush1.msra.mxu0 0.0
        %1269 = vmatprep.subr.mxu0 0.0
        %1270 = vmatpush1.msra.mxu0 0.0
        %1271 = vmatprep.subr.mxu0 0.0
        %1272 = vmatpush1.msra.mxu0 0.0
        %1273 = vmatprep.subr.mxu0 0.0
        %1274 = vmatpush1.msra.mxu0 0.0
        %1275 = vmatprep.subr.mxu0 0.0
        %1276 = vmatpush1.msra.mxu0 0.0
        %1277 = vmatprep.subr.mxu0 0.0
        %1278 = vmatpush1.msra.mxu0 0.0
        %1279 = vmatprep.subr.mxu0 0.0
        %1280 = vmatpush1.msra.mxu0 0.0
        %1281 = vmatprep.subr.mxu0 0.0
        %1282 = vmatpush1.msra.mxu0 0.0
        %1283 = vmatprep.subr.mxu0 0.0
        %1284 = vmatpush1.msra.mxu0 0.0
        %1285 = vmatprep.subr.mxu0 0.0
        %1286 = vmatpush1.msra.mxu0 0.0
        %1287 = vmatprep.subr.mxu0 0.0
        %1288 = vmatpush1.msra.mxu0 0.0
        %1289 = vmatprep.subr.mxu0 0.0
        %1290 = vmatpush1.msra.mxu0 0.0
        %1291 = vmatprep.mubr.f32.mxu0 0.0
        %1292 = vmatmul.mubr.f32.gmra.mrb[0].mxu0 %v757
        %v1293 = vpop.f32.mrb[0].mxu0
        %v1294 = vadd.f32 %v981, %v1293
        %v1295 = vpop.f32.mrb[0].mxu0
        %v1296 = vadd.f32 %v985, %v1295
        %1297 = vdwg.mxu0
        %1298 = vmatprep.subr.mxu0 %v767
        %1299 = vmatpush1.msra.mxu0 %v766
        %1300 = vmatprep.subr.mxu0 %v779
        %1301 = vmatpush1.msra.mxu0 %v778
        %1302 = vmatprep.subr.mxu0 %v791
        %1303 = vmatpush1.msra.mxu0 %v790
        %1304 = vmatprep.subr.mxu0 %v803
        %1305 = vmatpush1.msra.mxu0 %v802
        %1306 = vmatprep.subr.mxu0 %v815
        %1307 = vmatpush1.msra.mxu0 %v814
        %1308 = vmatprep.subr.mxu0 %v827
        %1309 = vmatpush1.msra.mxu0 %v826
        %1310 = vmatprep.subr.mxu0 %v839
        %1311 = vmatpush1.msra.mxu0 %v838
        %1312 = vmatprep.subr.mxu0 %v851
        %1313 = vmatpush1.msra.mxu0 %v850
        %1314 = vmatprep.subr.mxu0 %v863
        %1315 = vmatpush1.msra.mxu0 %v862
        %1316 = vmatprep.subr.mxu0 %v875
        %1317 = vmatpush1.msra.mxu0 %v874
        %1318 = vmatprep.subr.mxu0 %v887
        %1319 = vmatpush1.msra.mxu0 %v886
        %1320 = vmatprep.subr.mxu0 %v899
        %1321 = vmatpush1.msra.mxu0 %v898
        %1322 = vmatprep.subr.mxu0 %v911
        %1323 = vmatpush1.msra.mxu0 %v910
        %1324 = vmatprep.subr.mxu0 %v923
        %1325 = vmatpush1.msra.mxu0 %v922
        %1326 = vmatprep.subr.mxu0 %v935
        %1327 = vmatpush1.msra.mxu0 %v934
        %1328 = vmatprep.subr.mxu0 %v947
        %1329 = vmatpush1.msra.mxu0 %v946
        %1330 = vmatprep.subr.mxu0 0.0
        %1331 = vmatpush1.msra.mxu0 0.0
        %1332 = vmatprep.subr.mxu0 0.0
        %1333 = vmatpush1.msra.mxu0 0.0
        %1334 = vmatprep.subr.mxu0 0.0
        %1335 = vmatpush1.msra.mxu0 0.0
        %1336 = vmatprep.subr.mxu0 0.0
        %1337 = vmatpush1.msra.mxu0 0.0
        %1338 = vmatprep.subr.mxu0 0.0
        %1339 = vmatpush1.msra.mxu0 0.0
        %1340 = vmatprep.subr.mxu0 0.0
        %1341 = vmatpush1.msra.mxu0 0.0
        %1342 = vmatprep.subr.mxu0 0.0
        %1343 = vmatpush1.msra.mxu0 0.0
        %1344 = vmatprep.subr.mxu0 0.0
        %1345 = vmatpush1.msra.mxu0 0.0
        %1346 = vmatprep.subr.mxu0 0.0
        %1347 = vmatpush1.msra.mxu0 0.0
        %1348 = vmatprep.subr.mxu0 0.0
        %1349 = vmatpush1.msra.mxu0 0.0
        %1350 = vmatprep.subr.mxu0 0.0
        %1351 = vmatpush1.msra.mxu0 0.0
        %1352 = vmatprep.subr.mxu0 0.0
        %1353 = vmatpush1.msra.mxu0 0.0
        %1354 = vmatprep.subr.mxu0 0.0
        %1355 = vmatpush1.msra.mxu0 0.0
        %1356 = vmatprep.subr.mxu0 0.0
        %1357 = vmatpush1.msra.mxu0 0.0
        %1358 = vmatprep.subr.mxu0 0.0
        %1359 = vmatpush1.msra.mxu0 0.0
        %1360 = vmatprep.subr.mxu0 0.0
        %1361 = vmatpush1.msra.mxu0 0.0
        %1362 = vmatprep.mubr.f32.mxu0 0.0
        %1363 = vmatmul.mubr.f32.gmra.mrb[0].mxu0 %v757
        %v1364 = vpop.f32.mrb[0].mxu0
        %v1365 = vadd.f32 %v989, %v1364
        %v1366 = vpop.f32.mrb[0].mxu0
        %v1367 = vadd.f32 %v993, %v1366
        %1368 = vdwg.mxu0
        %1369 = vmatprep.subr.mxu0 %v769
        %1370 = vmatpush1.msra.mxu0 %v768
        %1371 = vmatprep.subr.mxu0 %v781
        %1372 = vmatpush1.msra.mxu0 %v780
        %1373 = vmatprep.subr.mxu0 %v793
        %1374 = vmatpush1.msra.mxu0 %v792
        %1375 = vmatprep.subr.mxu0 %v805
        %1376 = vmatpush1.msra.mxu0 %v804
        %1377 = vmatprep.subr.mxu0 %v817
        %1378 = vmatpush1.msra.mxu0 %v816
        %1379 = vmatprep.subr.mxu0 %v829
        %1380 = vmatpush1.msra.mxu0 %v828
        %1381 = vmatprep.subr.mxu0 %v841
        %1382 = vmatpush1.msra.mxu0 %v840
        %1383 = vmatprep.subr.mxu0 %v853
        %1384 = vmatpush1.msra.mxu0 %v852
        %1385 = vmatprep.subr.mxu0 %v865
        %1386 = vmatpush1.msra.mxu0 %v864
        %1387 = vmatprep.subr.mxu0 %v877
        %1388 = vmatpush1.msra.mxu0 %v876
        %1389 = vmatprep.subr.mxu0 %v889
        %1390 = vmatpush1.msra.mxu0 %v888
        %1391 = vmatprep.subr.mxu0 %v901
        %1392 = vmatpush1.msra.mxu0 %v900
        %1393 = vmatprep.subr.mxu0 %v913
        %1394 = vmatpush1.msra.mxu0 %v912
        %1395 = vmatprep.subr.mxu0 %v925
        %1396 = vmatpush1.msra.mxu0 %v924
        %1397 = vmatprep.subr.mxu0 %v937
        %1398 = vmatpush1.msra.mxu0 %v936
        %1399 = vmatprep.subr.mxu0 %v949
        %1400 = vmatpush1.msra.mxu0 %v948
        %1401 = vmatprep.subr.mxu0 0.0
        %1402 = vmatpush1.msra.mxu0 0.0
        %1403 = vmatprep.subr.mxu0 0.0
        %1404 = vmatpush1.msra.mxu0 0.0
        %1405 = vmatprep.subr.mxu0 0.0
        %1406 = vmatpush1.msra.mxu0 0.0
        %1407 = vmatprep.subr.mxu0 0.0
        %1408 = vmatpush1.msra.mxu0 0.0
        %1409 = vmatprep.subr.mxu0 0.0
        %1410 = vmatpush1.msra.mxu0 0.0
        %1411 = vmatprep.subr.mxu0 0.0
        %1412 = vmatpush1.msra.mxu0 0.0
        %1413 = vmatprep.subr.mxu0 0.0
        %1414 = vmatpush1.msra.mxu0 0.0
        %1415 = vmatprep.subr.mxu0 0.0
        %1416 = vmatpush1.msra.mxu0 0.0
        %1417 = vmatprep.subr.mxu0 0.0
        %1418 = vmatpush1.msra.mxu0 0.0
        %1419 = vmatprep.subr.mxu0 0.0
        %1420 = vmatpush1.msra.mxu0 0.0
        %1421 = vmatprep.subr.mxu0 0.0
        %1422 = vmatpush1.msra.mxu0 0.0
        %1423 = vmatprep.subr.mxu0 0.0
        %1424 = vmatpush1.msra.mxu0 0.0
        %1425 = vmatprep.subr.mxu0 0.0
        %1426 = vmatpush1.msra.mxu0 0.0
        %1427 = vmatprep.subr.mxu0 0.0
        %1428 = vmatpush1.msra.mxu0 0.0
        %1429 = vmatprep.subr.mxu0 0.0
        %1430 = vmatpush1.msra.mxu0 0.0
        %1431 = vmatprep.subr.mxu0 0.0
        %1432 = vmatpush1.msra.mxu0 0.0
        %1433 = vmatprep.mubr.f32.mxu0 0.0
        %1434 = vmatmul.mubr.f32.gmra.mrb[0].mxu0 %v757
        %v1435 = vpop.f32.mrb[0].mxu0
        %v1436 = vadd.f32 %v997, %v1435
        %v1437 = vpop.f32.mrb[0].mxu0
        %v1438 = vadd.f32 %v1001, %v1437
        %1439 = vdwg.mxu0
        %v1440 = vmax.f32 %v1081, 0.0
        %v1441 = vmax.f32 %v1083, 0.0
        %v1442 = vmax.f32 %v1152, 0.0
        %v1443 = vmax.f32 %v1154, 0.0
        %v1444 = vmax.f32 %v1223, 0.0
        %v1445 = vmax.f32 %v1225, 0.0
        %v1446 = vmax.f32 %v1294, 0.0
        %v1447 = vmax.f32 %v1296, 0.0
        %v1448 = vmax.f32 %v1365, 0.0
        %v1449 = vmax.f32 %v1367, 0.0
        %v1450 = vmax.f32 %v1436, 0.0
        %v1451 = vmax.f32 %v1438, 0.0
        %v1452 = vld [vmem:[%s600] sm:$0xff]
        %v1453 = vld [vmem:[%s600 + $0x8] sm:$0xff]
        %v1454 = vld [vmem:[%s600 + $0x10] sm:$0xff]
        %v1455 = vld [vmem:[%s600 + $0x18] sm:$0xff]
        %v1456 = vld [vmem:[%s600 + $0x20] sm:$0xff]
        %v1457 = vld [vmem:[%s600 + $0x28] sm:$0xff]
        %v1458 = vld [vmem:[%s600 + $0x30] sm:$0xff]
        %v1459 = vld [vmem:[%s600 + $0x38] sm:$0xff]
        %v1460 = vld [vmem:[%s600 + $0x40] sm:$0xff]
        %v1461 = vld [vmem:[%s600 + $0x48] sm:$0xff]
        %v1462 = vld [vmem:[%s600 + $0x50] sm:$0xff]
        %v1463 = vld [vmem:[%s600 + $0x58] sm:$0xff]
        %v1464 = vld [vmem:[%s600 + $0x60] sm:$0xff]
        %v1465 = vld [vmem:[%s600 + $0x68] sm:$0xff]
        %v1466 = vld [vmem:[%s600 + $0x70] sm:$0xff]
        %v1467 = vld [vmem:[%s600 + $0x78] sm:$0xff]
        %v1468 = vld [vmem:[%s600 + $0x80] sm:$0xff]
        %v1469 = vld [vmem:[%s600 + $0x88] sm:$0xff]
        %v1470 = vld [vmem:[%s600 + $0x90] sm:$0xff]
        %v1471 = vld [vmem:[%s600 + $0x98] sm:$0xff]
        %v1472 = vld [vmem:[%s600 + $0xa0] sm:$0xff]
        %v1473 = vld [vmem:[%s600 + $0xa8] sm:$0xff]
        %v1474 = vld [vmem:[%s600 + $0xb0] sm:$0xff]
        %v1475 = vld [vmem:[%s600 + $0xb8] sm:$0xff]
        %v1476 = vld [vmem:[%s600 + $0xc0] sm:$0xff]
        %v1477 = vld [vmem:[%s600 + $0xc8] sm:$0xff]
        %v1478 = vld [vmem:[%s600 + $0xd0] sm:$0xff]
        %v1479 = vld [vmem:[%s600 + $0xd8] sm:$0xff]
        %v1480 = vld [vmem:[%s600 + $0xe0] sm:$0xff]
        %v1481 = vld [vmem:[%s600 + $0xe8] sm:$0xff]
        %v1482 = vld [vmem:[%s600 + $0xf0] sm:$0xff]
        %v1483 = vld [vmem:[%s600 + $0xf8] sm:$0xff]
        %v1484 = vld [vmem:[%s600 + $0x100] sm:$0xff]
        %v1485 = vld [vmem:[%s600 + $0x108] sm:$0xff]
        %v1486 = vld [vmem:[%s600 + $0x110] sm:$0xff]
        %v1487 = vld [vmem:[%s600 + $0x118] sm:$0xff]
        %v1488 = vld [vmem:[%s600 + $0x120] sm:$0xff]
        %v1489 = vld [vmem:[%s600 + $0x128] sm:$0xff]
        %v1490 = vld [vmem:[%s600 + $0x130] sm:$0xff]
        %v1491 = vld [vmem:[%s600 + $0x138] sm:$0xff]
        %v1492 = vld [vmem:[%s600 + $0x140] sm:$0xff]
        %v1493 = vld [vmem:[%s600 + $0x148] sm:$0xff]
        %v1494 = vld [vmem:[%s600 + $0x150] sm:$0xff]
        %v1495 = vld [vmem:[%s600 + $0x158] sm:$0xff]
        %v1496 = vld [vmem:[%s600 + $0x160] sm:$0xff]
        %v1497 = vld [vmem:[%s600 + $0x168] sm:$0xff]
        %v1498 = vld [vmem:[%s600 + $0x170] sm:$0xff]
        %v1499 = vld [vmem:[%s600 + $0x178] sm:$0xff]
        %v1500 = vld [vmem:[%s600 + $0x180] sm:$0xff]
        %v1501 = vld [vmem:[%s600 + $0x188] sm:$0xff]
        %v1502 = vld [vmem:[%s600 + $0x190] sm:$0xff]
        %v1503 = vld [vmem:[%s600 + $0x198] sm:$0xff]
        %v1504 = vld [vmem:[%s600 + $0x1a0] sm:$0xff]
        %v1505 = vld [vmem:[%s600 + $0x1a8] sm:$0xff]
        %v1506 = vld [vmem:[%s600 + $0x1b0] sm:$0xff]
        %v1507 = vld [vmem:[%s600 + $0x1b8] sm:$0xff]
        %v1508 = vld [vmem:[%s600 + $0x1c0] sm:$0xff]
        %v1509 = vld [vmem:[%s600 + $0x1c8] sm:$0xff]
        %v1510 = vld [vmem:[%s600 + $0x1d0] sm:$0xff]
        %v1511 = vld [vmem:[%s600 + $0x1d8] sm:$0xff]
        %v1512 = vld [vmem:[%s600 + $0x1e0] sm:$0xff]
        %v1513 = vld [vmem:[%s600 + $0x1e8] sm:$0xff]
        %v1514 = vld [vmem:[%s600 + $0x1f0] sm:$0xff]
        %v1515 = vld [vmem:[%s600 + $0x1f8] sm:$0xff]
        %v1516 = vld [vmem:[%s600 + $0x200] sm:$0xff]
        %v1517 = vld [vmem:[%s600 + $0x208] sm:$0xff]
        %v1518 = vld [vmem:[%s600 + $0x210] sm:$0xff]
        %v1519 = vld [vmem:[%s600 + $0x218] sm:$0xff]
        %v1520 = vld [vmem:[%s600 + $0x220] sm:$0xff]
        %v1521 = vld [vmem:[%s600 + $0x228] sm:$0xff]
        %v1522 = vld [vmem:[%s600 + $0x230] sm:$0xff]
        %v1523 = vld [vmem:[%s600 + $0x238] sm:$0xff]
        %v1524 = vld [vmem:[%s600 + $0x240] sm:$0xff]
        %v1525 = vld [vmem:[%s600 + $0x248] sm:$0xff]
        %v1526 = vld [vmem:[%s600 + $0x250] sm:$0xff]
        %v1527 = vld [vmem:[%s600 + $0x258] sm:$0xff]
        %v1528 = vld [vmem:[%s600 + $0x260] sm:$0xff]
        %v1529 = vld [vmem:[%s600 + $0x268] sm:$0xff]
        %v1530 = vld [vmem:[%s600 + $0x270] sm:$0xff]
        %v1531 = vld [vmem:[%s600 + $0x278] sm:$0xff]
        %v1532 = vld [vmem:[%s600 + $0x280] sm:$0xff]
        %v1533 = vld [vmem:[%s600 + $0x288] sm:$0xff]
        %v1534 = vld [vmem:[%s600 + $0x290] sm:$0xff]
        %v1535 = vld [vmem:[%s600 + $0x298] sm:$0xff]
        %v1536 = vld [vmem:[%s600 + $0x2a0] sm:$0xff]
        %v1537 = vld [vmem:[%s600 + $0x2a8] sm:$0xff]
        %v1538 = vld [vmem:[%s600 + $0x2b0] sm:$0xff]
        %v1539 = vld [vmem:[%s600 + $0x2b8] sm:$0xff]
        %v1540 = vld [vmem:[%s600 + $0x2c0] sm:$0xff]
        %v1541 = vld [vmem:[%s600 + $0x2c8] sm:$0xff]
        %v1542 = vld [vmem:[%s600 + $0x2d0] sm:$0xff]
        %v1543 = vld [vmem:[%s600 + $0x2d8] sm:$0xff]
        %v1544 = vld [vmem:[%s600 + $0x2e0] sm:$0xff]
        %v1545 = vld [vmem:[%s600 + $0x2e8] sm:$0xff]
        %v1546 = vld [vmem:[%s600 + $0x2f0] sm:$0xff]
        %v1547 = vld [vmem:[%s600 + $0x2f8] sm:$0xff]
        %v1548 = vld [vmem:[%s600 + $0x300] sm:$0xff]
        %v1549 = vld [vmem:[%s600 + $0x308] sm:$0xff]
        %v1550 = vld [vmem:[%s600 + $0x310] sm:$0xff]
        %v1551 = vld [vmem:[%s600 + $0x318] sm:$0xff]
        %v1552 = vld [vmem:[%s600 + $0x320] sm:$0xff]
        %v1553 = vld [vmem:[%s600 + $0x328] sm:$0xff]
        %v1554 = vld [vmem:[%s600 + $0x330] sm:$0xff]
        %v1555 = vld [vmem:[%s600 + $0x338] sm:$0xff]
        %v1556 = vld [vmem:[%s600 + $0x340] sm:$0xff]
        %v1557 = vld [vmem:[%s600 + $0x348] sm:$0xff]
        %v1558 = vld [vmem:[%s600 + $0x350] sm:$0xff]
        %v1559 = vld [vmem:[%s600 + $0x358] sm:$0xff]
        %v1560 = vld [vmem:[%s600 + $0x360] sm:$0xff]
        %v1561 = vld [vmem:[%s600 + $0x368] sm:$0xff]
        %v1562 = vld [vmem:[%s600 + $0x370] sm:$0xff]
        %v1563 = vld [vmem:[%s600 + $0x378] sm:$0xff]
        %v1564 = vld [vmem:[%s600 + $0x380] sm:$0xff]
        %v1565 = vld [vmem:[%s600 + $0x388] sm:$0xff]
        %v1566 = vld [vmem:[%s600 + $0x390] sm:$0xff]
        %v1567 = vld [vmem:[%s600 + $0x398] sm:$0xff]
        %v1568 = vld [vmem:[%s600 + $0x3a0] sm:$0xff]
        %v1569 = vld [vmem:[%s600 + $0x3a8] sm:$0xff]
        %v1570 = vld [vmem:[%s600 + $0x3b0] sm:$0xff]
        %v1571 = vld [vmem:[%s600 + $0x3b8] sm:$0xff]
        %v1572 = vld [vmem:[%s600 + $0x3c0] sm:$0xff]
        %v1573 = vld [vmem:[%s600 + $0x3c8] sm:$0xff]
        %v1574 = vld [vmem:[%s600 + $0x3d0] sm:$0xff]
        %v1575 = vld [vmem:[%s600 + $0x3d8] sm:$0xff]
        %v1576 = vld [vmem:[%s600 + $0x3e0] sm:$0xff]
        %v1577 = vld [vmem:[%s600 + $0x3e8] sm:$0xff]
        %v1578 = vld [vmem:[%s600 + $0x3f0] sm:$0xff]
        %v1579 = vld [vmem:[%s600 + $0x3f8] sm:$0xff]
        %v1580 = vld [vmem:[%s600 + $0x400] sm:$0xff]
        %v1581 = vld [vmem:[%s600 + $0x408] sm:$0xff]
        %v1582 = vld [vmem:[%s600 + $0x410] sm:$0xff]
        %v1583 = vld [vmem:[%s600 + $0x418] sm:$0xff]
        %v1584 = vld [vmem:[%s600 + $0x420] sm:$0xff]
        %v1585 = vld [vmem:[%s600 + $0x428] sm:$0xff]
        %v1586 = vld [vmem:[%s600 + $0x430] sm:$0xff]
        %v1587 = vld [vmem:[%s600 + $0x438] sm:$0xff]
        %v1588 = vld [vmem:[%s600 + $0x440] sm:$0xff]
        %v1589 = vld [vmem:[%s600 + $0x448] sm:$0xff]
        %v1590 = vld [vmem:[%s600 + $0x450] sm:$0xff]
        %v1591 = vld [vmem:[%s600 + $0x458] sm:$0xff]
        %v1592 = vld [vmem:[%s600 + $0x460] sm:$0xff]
        %v1593 = vld [vmem:[%s600 + $0x468] sm:$0xff]
        %v1594 = vld [vmem:[%s600 + $0x470] sm:$0xff]
        %v1595 = vld [vmem:[%s600 + $0x478] sm:$0xff]
        %v1596 = vld [vmem:[%s600 + $0x480] sm:$0xff]
        %v1597 = vld [vmem:[%s600 + $0x488] sm:$0xff]
        %v1598 = vld [vmem:[%s600 + $0x490] sm:$0xff]
        %v1599 = vld [vmem:[%s600 + $0x498] sm:$0xff]
        %v1600 = vld [vmem:[%s600 + $0x4a0] sm:$0xff]
        %v1601 = vld [vmem:[%s600 + $0x4a8] sm:$0xff]
        %v1602 = vld [vmem:[%s600 + $0x4b0] sm:$0xff]
        %v1603 = vld [vmem:[%s600 + $0x4b8] sm:$0xff]
        %v1604 = vld [vmem:[%s600 + $0x4c0] sm:$0xff]
        %v1605 = vld [vmem:[%s600 + $0x4c8] sm:$0xff]
        %v1606 = vld [vmem:[%s600 + $0x4d0] sm:$0xff]
        %v1607 = vld [vmem:[%s600 + $0x4d8] sm:$0xff]
        %v1608 = vld [vmem:[%s600 + $0x4e0] sm:$0xff]
        %v1609 = vld [vmem:[%s600 + $0x4e8] sm:$0xff]
        %v1610 = vld [vmem:[%s600 + $0x4f0] sm:$0xff]
        %v1611 = vld [vmem:[%s600 + $0x4f8] sm:$0xff]
        %v1612 = vld [vmem:[%s600 + $0x500] sm:$0xff]
        %v1613 = vld [vmem:[%s600 + $0x508] sm:$0xff]
        %v1614 = vld [vmem:[%s600 + $0x510] sm:$0xff]
        %v1615 = vld [vmem:[%s600 + $0x518] sm:$0xff]
        %v1616 = vld [vmem:[%s600 + $0x520] sm:$0xff]
        %v1617 = vld [vmem:[%s600 + $0x528] sm:$0xff]
        %v1618 = vld [vmem:[%s600 + $0x530] sm:$0xff]
        %v1619 = vld [vmem:[%s600 + $0x538] sm:$0xff]
        %v1620 = vld [vmem:[%s600 + $0x540] sm:$0xff]
        %v1621 = vld [vmem:[%s600 + $0x548] sm:$0xff]
        %v1622 = vld [vmem:[%s600 + $0x550] sm:$0xff]
        %v1623 = vld [vmem:[%s600 + $0x558] sm:$0xff]
        %v1624 = vld [vmem:[%s600 + $0x560] sm:$0xff]
        %v1625 = vld [vmem:[%s600 + $0x568] sm:$0xff]
        %v1626 = vld [vmem:[%s600 + $0x570] sm:$0xff]
        %v1627 = vld [vmem:[%s600 + $0x578] sm:$0xff]
        %v1628 = vld [vmem:[%s600 + $0x580] sm:$0xff]
        %v1629 = vld [vmem:[%s600 + $0x588] sm:$0xff]
        %v1630 = vld [vmem:[%s600 + $0x590] sm:$0xff]
        %v1631 = vld [vmem:[%s600 + $0x598] sm:$0xff]
        %v1632 = vld [vmem:[%s600 + $0x5a0] sm:$0xff]
        %v1633 = vld [vmem:[%s600 + $0x5a8] sm:$0xff]
        %v1634 = vld [vmem:[%s600 + $0x5b0] sm:$0xff]
        %v1635 = vld [vmem:[%s600 + $0x5b8] sm:$0xff]
        %v1636 = vld [vmem:[%s600 + $0x5c0] sm:$0xff]
        %v1637 = vld [vmem:[%s600 + $0x5c8] sm:$0xff]
        %v1638 = vld [vmem:[%s600 + $0x5d0] sm:$0xff]
        %v1639 = vld [vmem:[%s600 + $0x5d8] sm:$0xff]
        %v1640 = vld [vmem:[%s600 + $0x5e0] sm:$0xff]
        %v1641 = vld [vmem:[%s600 + $0x5e8] sm:$0xff]
        %v1642 = vld [vmem:[%s600 + $0x5f0] sm:$0xff]
        %v1643 = vld [vmem:[%s600 + $0x5f8] sm:$0xff]
        %v1644 = vld [vmem:[%s603] sm:$0x1]
        %v1646 = vlaneseq
        %v1647 = vshrl.u32 %v1646, 7
        %v1648 = vsub.s32 0, %v1647
        %v1649 = vrot.slane %v1644, %v1648
        %1651 = vmatprep.subr.mxu0 0.0
        %1652 = vmatpush1.msra.mxu0 %v1452
        %1653 = vmatprep.subr.mxu0 0.0
        %1654 = vmatpush1.msra.mxu0 %v1453
        %1655 = vmatprep.subr.mxu0 0.0
        %1656 = vmatpush1.msra.mxu0 %v1454
        %1657 = vmatprep.subr.mxu0 0.0
        %1658 = vmatpush1.msra.mxu0 %v1455
        %1659 = vmatprep.subr.mxu0 0.0
        %1660 = vmatpush1.msra.mxu0 %v1456
        %1661 = vmatprep.subr.mxu0 0.0
        %1662 = vmatpush1.msra.mxu0 %v1457
        %1663 = vmatprep.subr.mxu0 0.0
        %1664 = vmatpush1.msra.mxu0 %v1458
        %1665 = vmatprep.subr.mxu0 0.0
        %1666 = vmatpush1.msra.mxu0 %v1459
        %1667 = vmatprep.subr.mxu0 0.0
        %1668 = vmatpush1.msra.mxu0 %v1460
        %1669 = vmatprep.subr.mxu0 0.0
        %1670 = vmatpush1.msra.mxu0 %v1461
        %1671 = vmatprep.subr.mxu0 0.0
        %1672 = vmatpush1.msra.mxu0 %v1462
        %1673 = vmatprep.subr.mxu0 0.0
        %1674 = vmatpush1.msra.mxu0 %v1463
        %1675 = vmatprep.subr.mxu0 0.0
        %1676 = vmatpush1.msra.mxu0 %v1464
        %1677 = vmatprep.subr.mxu0 0.0
        %1678 = vmatpush1.msra.mxu0 %v1465
        %1679 = vmatprep.subr.mxu0 0.0
        %1680 = vmatpush1.msra.mxu0 %v1466
        %1681 = vmatprep.subr.mxu0 0.0
        %1682 = vmatpush1.msra.mxu0 %v1467
        %1683 = vmatprep.subr.mxu0 0.0
        %1684 = vmatpush1.msra.mxu0 %v1468
        %1685 = vmatprep.subr.mxu0 0.0
        %1686 = vmatpush1.msra.mxu0 %v1469
        %1687 = vmatprep.subr.mxu0 0.0
        %1688 = vmatpush1.msra.mxu0 %v1470
        %1689 = vmatprep.subr.mxu0 0.0
        %1690 = vmatpush1.msra.mxu0 %v1471
        %1691 = vmatprep.subr.mxu0 0.0
        %1692 = vmatpush1.msra.mxu0 %v1472
        %1693 = vmatprep.subr.mxu0 0.0
        %1694 = vmatpush1.msra.mxu0 %v1473
        %1695 = vmatprep.subr.mxu0 0.0
        %1696 = vmatpush1.msra.mxu0 %v1474
        %1697 = vmatprep.subr.mxu0 0.0
        %1698 = vmatpush1.msra.mxu0 %v1475
        %1699 = vmatprep.subr.mxu0 0.0
        %1700 = vmatpush1.msra.mxu0 %v1476
        %1701 = vmatprep.subr.mxu0 0.0
        %1702 = vmatpush1.msra.mxu0 %v1477
        %1703 = vmatprep.subr.mxu0 0.0
        %1704 = vmatpush1.msra.mxu0 %v1478
        %1705 = vmatprep.subr.mxu0 0.0
        %1706 = vmatpush1.msra.mxu0 %v1479
        %1707 = vmatprep.subr.mxu0 0.0
        %1708 = vmatpush1.msra.mxu0 %v1480
        %1709 = vmatprep.subr.mxu0 0.0
        %1710 = vmatpush1.msra.mxu0 %v1481
        %1711 = vmatprep.subr.mxu0 0.0
        %1712 = vmatpush1.msra.mxu0 %v1482
        %1713 = vmatprep.subr.mxu0 0.0
        %1714 = vmatpush1.msra.mxu0 %v1483
        %1715 = vmatprep.mubr.f32.mxu0 %v1441
        %1716 = vmatmul.mubr.f32.gmra.mrb[0].mxu0 %v1440
        %v1717 = vpop.f32.mrb[0].mxu0
        %v1718 = vadd.f32 %v1649, %v1717
        %v1719 = vpop.f32.mrb[0].mxu0
        %1720 = vdwg.mxu0
        %1721 = vmatprep.subr.mxu0 0.0
        %1722 = vmatpush1.msra.mxu0 %v1484
        %1723 = vmatprep.subr.mxu0 0.0
        %1724 = vmatpush1.msra.mxu0 %v1485
        %1725 = vmatprep.subr.mxu0 0.0
        %1726 = vmatpush1.msra.mxu0 %v1486
        %1727 = vmatprep.subr.mxu0 0.0
        %1728 = vmatpush1.msra.mxu0 %v1487
        %1729 = vmatprep.subr.mxu0 0.0
        %1730 = vmatpush1.msra.mxu0 %v1488
        %1731 = vmatprep.subr.mxu0 0.0
        %1732 = vmatpush1.msra.mxu0 %v1489
        %1733 = vmatprep.subr.mxu0 0.0
        %1734 = vmatpush1.msra.mxu0 %v1490
        %1735 = vmatprep.subr.mxu0 0.0
        %1736 = vmatpush1.msra.mxu0 %v1491
        %1737 = vmatprep.subr.mxu0 0.0
        %1738 = vmatpush1.msra.mxu0 %v1492
        %1739 = vmatprep.subr.mxu0 0.0
        %1740 = vmatpush1.msra.mxu0 %v1493
        %1741 = vmatprep.subr.mxu0 0.0
        %1742 = vmatpush1.msra.mxu0 %v1494
        %1743 = vmatprep.subr.mxu0 0.0
        %1744 = vmatpush1.msra.mxu0 %v1495
        %1745 = vmatprep.subr.mxu0 0.0
        %1746 = vmatpush1.msra.mxu0 %v1496
        %1747 = vmatprep.subr.mxu0 0.0
        %1748 = vmatpush1.msra.mxu0 %v1497
        %1749 = vmatprep.subr.mxu0 0.0
        %1750 = vmatpush1.msra.mxu0 %v1498
        %1751 = vmatprep.subr.mxu0 0.0
        %1752 = vmatpush1.msra.mxu0 %v1499
        %1753 = vmatprep.subr.mxu0 0.0
        %1754 = vmatpush1.msra.mxu0 %v1500
        %1755 = vmatprep.subr.mxu0 0.0
        %1756 = vmatpush1.msra.mxu0 %v1501
        %1757 = vmatprep.subr.mxu0 0.0
        %1758 = vmatpush1.msra.mxu0 %v1502
        %1759 = vmatprep.subr.mxu0 0.0
        %1760 = vmatpush1.msra.mxu0 %v1503
        %1761 = vmatprep.subr.mxu0 0.0
        %1762 = vmatpush1.msra.mxu0 %v1504
        %1763 = vmatprep.subr.mxu0 0.0
        %1764 = vmatpush1.msra.mxu0 %v1505
        %1765 = vmatprep.subr.mxu0 0.0
        %1766 = vmatpush1.msra.mxu0 %v1506
        %1767 = vmatprep.subr.mxu0 0.0
        %1768 = vmatpush1.msra.mxu0 %v1507
        %1769 = vmatprep.subr.mxu0 0.0
        %1770 = vmatpush1.msra.mxu0 %v1508
        %1771 = vmatprep.subr.mxu0 0.0
        %1772 = vmatpush1.msra.mxu0 %v1509
        %1773 = vmatprep.subr.mxu0 0.0
        %1774 = vmatpush1.msra.mxu0 %v1510
        %1775 = vmatprep.subr.mxu0 0.0
        %1776 = vmatpush1.msra.mxu0 %v1511
        %1777 = vmatprep.subr.mxu0 0.0
        %1778 = vmatpush1.msra.mxu0 %v1512
        %1779 = vmatprep.subr.mxu0 0.0
        %1780 = vmatpush1.msra.mxu0 %v1513
        %1781 = vmatprep.subr.mxu0 0.0
        %1782 = vmatpush1.msra.mxu0 %v1514
        %1783 = vmatprep.subr.mxu0 0.0
        %1784 = vmatpush1.msra.mxu0 %v1515
        %1785 = vmatprep.mubr.f32.mxu0 %v1443
        %1786 = vmatmul.mubr.f32.gmra.mrb[0].mxu0 %v1442
        %v1787 = vpop.f32.mrb[0].mxu0
        %v1788 = vadd.f32 %v1718, %v1787
        %v1789 = vpop.f32.mrb[0].mxu0
        %1790 = vdwg.mxu0
        %1791 = vmatprep.subr.mxu0 0.0
        %1792 = vmatpush1.msra.mxu0 %v1516
        %1793 = vmatprep.subr.mxu0 0.0
        %1794 = vmatpush1.msra.mxu0 %v1517
        %1795 = vmatprep.subr.mxu0 0.0
        %1796 = vmatpush1.msra.mxu0 %v1518
        %1797 = vmatprep.subr.mxu0 0.0
        %1798 = vmatpush1.msra.mxu0 %v1519
        %1799 = vmatprep.subr.mxu0 0.0
        %1800 = vmatpush1.msra.mxu0 %v1520
        %1801 = vmatprep.subr.mxu0 0.0
        %1802 = vmatpush1.msra.mxu0 %v1521
        %1803 = vmatprep.subr.mxu0 0.0
        %1804 = vmatpush1.msra.mxu0 %v1522
        %1805 = vmatprep.subr.mxu0 0.0
        %1806 = vmatpush1.msra.mxu0 %v1523
        %1807 = vmatprep.subr.mxu0 0.0
        %1808 = vmatpush1.msra.mxu0 %v1524
        %1809 = vmatprep.subr.mxu0 0.0
        %1810 = vmatpush1.msra.mxu0 %v1525
        %1811 = vmatprep.subr.mxu0 0.0
        %1812 = vmatpush1.msra.mxu0 %v1526
        %1813 = vmatprep.subr.mxu0 0.0
        %1814 = vmatpush1.msra.mxu0 %v1527
        %1815 = vmatprep.subr.mxu0 0.0
        %1816 = vmatpush1.msra.mxu0 %v1528
        %1817 = vmatprep.subr.mxu0 0.0
        %1818 = vmatpush1.msra.mxu0 %v1529
        %1819 = vmatprep.subr.mxu0 0.0
        %1820 = vmatpush1.msra.mxu0 %v1530
        %1821 = vmatprep.subr.mxu0 0.0
        %1822 = vmatpush1.msra.mxu0 %v1531
        %1823 = vmatprep.subr.mxu0 0.0
        %1824 = vmatpush1.msra.mxu0 %v1532
        %1825 = vmatprep.subr.mxu0 0.0
        %1826 = vmatpush1.msra.mxu0 %v1533
        %1827 = vmatprep.subr.mxu0 0.0
        %1828 = vmatpush1.msra.mxu0 %v1534
        %1829 = vmatprep.subr.mxu0 0.0
        %1830 = vmatpush1.msra.mxu0 %v1535
        %1831 = vmatprep.subr.mxu0 0.0
        %1832 = vmatpush1.msra.mxu0 %v1536
        %1833 = vmatprep.subr.mxu0 0.0
        %1834 = vmatpush1.msra.mxu0 %v1537
        %1835 = vmatprep.subr.mxu0 0.0
        %1836 = vmatpush1.msra.mxu0 %v1538
        %1837 = vmatprep.subr.mxu0 0.0
        %1838 = vmatpush1.msra.mxu0 %v1539
        %1839 = vmatprep.subr.mxu0 0.0
        %1840 = vmatpush1.msra.mxu0 %v1540
        %1841 = vmatprep.subr.mxu0 0.0
        %1842 = vmatpush1.msra.mxu0 %v1541
        %1843 = vmatprep.subr.mxu0 0.0
        %1844 = vmatpush1.msra.mxu0 %v1542
        %1845 = vmatprep.subr.mxu0 0.0
        %1846 = vmatpush1.msra.mxu0 %v1543
        %1847 = vmatprep.subr.mxu0 0.0
        %1848 = vmatpush1.msra.mxu0 %v1544
        %1849 = vmatprep.subr.mxu0 0.0
        %1850 = vmatpush1.msra.mxu0 %v1545
        %1851 = vmatprep.subr.mxu0 0.0
        %1852 = vmatpush1.msra.mxu0 %v1546
        %1853 = vmatprep.subr.mxu0 0.0
        %1854 = vmatpush1.msra.mxu0 %v1547
        %1855 = vmatprep.mubr.f32.mxu0 %v1445
        %1856 = vmatmul.mubr.f32.gmra.mrb[0].mxu0 %v1444
        %v1857 = vpop.f32.mrb[0].mxu0
        %v1858 = vadd.f32 %v1788, %v1857
        %v1859 = vpop.f32.mrb[0].mxu0
        %1860 = vdwg.mxu0
        %1861 = vmatprep.subr.mxu0 0.0
        %1862 = vmatpush1.msra.mxu0 %v1548
        %1863 = vmatprep.subr.mxu0 0.0
        %1864 = vmatpush1.msra.mxu0 %v1549
        %1865 = vmatprep.subr.mxu0 0.0
        %1866 = vmatpush1.msra.mxu0 %v1550
        %1867 = vmatprep.subr.mxu0 0.0
        %1868 = vmatpush1.msra.mxu0 %v1551
        %1869 = vmatprep.subr.mxu0 0.0
        %1870 = vmatpush1.msra.mxu0 %v1552
        %1871 = vmatprep.subr.mxu0 0.0
        %1872 = vmatpush1.msra.mxu0 %v1553
        %1873 = vmatprep.subr.mxu0 0.0
        %1874 = vmatpush1.msra.mxu0 %v1554
        %1875 = vmatprep.subr.mxu0 0.0
        %1876 = vmatpush1.msra.mxu0 %v1555
        %1877 = vmatprep.subr.mxu0 0.0
        %1878 = vmatpush1.msra.mxu0 %v1556
        %1879 = vmatprep.subr.mxu0 0.0
        %1880 = vmatpush1.msra.mxu0 %v1557
        %1881 = vmatprep.subr.mxu0 0.0
        %1882 = vmatpush1.msra.mxu0 %v1558
        %1883 = vmatprep.subr.mxu0 0.0
        %1884 = vmatpush1.msra.mxu0 %v1559
        %1885 = vmatprep.subr.mxu0 0.0
        %1886 = vmatpush1.msra.mxu0 %v1560
        %1887 = vmatprep.subr.mxu0 0.0
        %1888 = vmatpush1.msra.mxu0 %v1561
        %1889 = vmatprep.subr.mxu0 0.0
        %1890 = vmatpush1.msra.mxu0 %v1562
        %1891 = vmatprep.subr.mxu0 0.0
        %1892 = vmatpush1.msra.mxu0 %v1563
        %1893 = vmatprep.subr.mxu0 0.0
        %1894 = vmatpush1.msra.mxu0 %v1564
        %1895 = vmatprep.subr.mxu0 0.0
        %1896 = vmatpush1.msra.mxu0 %v1565
        %1897 = vmatprep.subr.mxu0 0.0
        %1898 = vmatpush1.msra.mxu0 %v1566
        %1899 = vmatprep.subr.mxu0 0.0
        %1900 = vmatpush1.msra.mxu0 %v1567
        %1901 = vmatprep.subr.mxu0 0.0
        %1902 = vmatpush1.msra.mxu0 %v1568
        %1903 = vmatprep.subr.mxu0 0.0
        %1904 = vmatpush1.msra.mxu0 %v1569
        %1905 = vmatprep.subr.mxu0 0.0
        %1906 = vmatpush1.msra.mxu0 %v1570
        %1907 = vmatprep.subr.mxu0 0.0
        %1908 = vmatpush1.msra.mxu0 %v1571
        %1909 = vmatprep.subr.mxu0 0.0
        %1910 = vmatpush1.msra.mxu0 %v1572
        %1911 = vmatprep.subr.mxu0 0.0
        %1912 = vmatpush1.msra.mxu0 %v1573
        %1913 = vmatprep.subr.mxu0 0.0
        %1914 = vmatpush1.msra.mxu0 %v1574
        %1915 = vmatprep.subr.mxu0 0.0
        %1916 = vmatpush1.msra.mxu0 %v1575
        %1917 = vmatprep.subr.mxu0 0.0
        %1918 = vmatpush1.msra.mxu0 %v1576
        %1919 = vmatprep.subr.mxu0 0.0
        %1920 = vmatpush1.msra.mxu0 %v1577
        %1921 = vmatprep.subr.mxu0 0.0
        %1922 = vmatpush1.msra.mxu0 %v1578
        %1923 = vmatprep.subr.mxu0 0.0
        %1924 = vmatpush1.msra.mxu0 %v1579
        %1925 = vmatprep.mubr.f32.mxu0 %v1447
        %1926 = vmatmul.mubr.f32.gmra.mrb[0].mxu0 %v1446
        %v1927 = vpop.f32.mrb[0].mxu0
        %v1928 = vadd.f32 %v1858, %v1927
        %v1929 = vpop.f32.mrb[0].mxu0
        %1930 = vdwg.mxu0
        %1931 = vmatprep.subr.mxu0 0.0
        %1932 = vmatpush1.msra.mxu0 %v1580
        %1933 = vmatprep.subr.mxu0 0.0
        %1934 = vmatpush1.msra.mxu0 %v1581
        %1935 = vmatprep.subr.mxu0 0.0
        %1936 = vmatpush1.msra.mxu0 %v1582
        %1937 = vmatprep.subr.mxu0 0.0
        %1938 = vmatpush1.msra.mxu0 %v1583
        %1939 = vmatprep.subr.mxu0 0.0
        %1940 = vmatpush1.msra.mxu0 %v1584
        %1941 = vmatprep.subr.mxu0 0.0
        %1942 = vmatpush1.msra.mxu0 %v1585
        %1943 = vmatprep.subr.mxu0 0.0
        %1944 = vmatpush1.msra.mxu0 %v1586
        %1945 = vmatprep.subr.mxu0 0.0
        %1946 = vmatpush1.msra.mxu0 %v1587
        %1947 = vmatprep.subr.mxu0 0.0
        %1948 = vmatpush1.msra.mxu0 %v1588
        %1949 = vmatprep.subr.mxu0 0.0
        %1950 = vmatpush1.msra.mxu0 %v1589
        %1951 = vmatprep.subr.mxu0 0.0
        %1952 = vmatpush1.msra.mxu0 %v1590
        %1953 = vmatprep.subr.mxu0 0.0
        %1954 = vmatpush1.msra.mxu0 %v1591
        %1955 = vmatprep.subr.mxu0 0.0
        %1956 = vmatpush1.msra.mxu0 %v1592
        %1957 = vmatprep.subr.mxu0 0.0
        %1958 = vmatpush1.msra.mxu0 %v1593
        %1959 = vmatprep.subr.mxu0 0.0
        %1960 = vmatpush1.msra.mxu0 %v1594
        %1961 = vmatprep.subr.mxu0 0.0
        %1962 = vmatpush1.msra.mxu0 %v1595
        %1963 = vmatprep.subr.mxu0 0.0
        %1964 = vmatpush1.msra.mxu0 %v1596
        %1965 = vmatprep.subr.mxu0 0.0
        %1966 = vmatpush1.msra.mxu0 %v1597
        %1967 = vmatprep.subr.mxu0 0.0
        %1968 = vmatpush1.msra.mxu0 %v1598
        %1969 = vmatprep.subr.mxu0 0.0
        %1970 = vmatpush1.msra.mxu0 %v1599
        %1971 = vmatprep.subr.mxu0 0.0
        %1972 = vmatpush1.msra.mxu0 %v1600
        %1973 = vmatprep.subr.mxu0 0.0
        %1974 = vmatpush1.msra.mxu0 %v1601
        %1975 = vmatprep.subr.mxu0 0.0
        %1976 = vmatpush1.msra.mxu0 %v1602
        %1977 = vmatprep.subr.mxu0 0.0
        %1978 = vmatpush1.msra.mxu0 %v1603
        %1979 = vmatprep.subr.mxu0 0.0
        %1980 = vmatpush1.msra.mxu0 %v1604
        %1981 = vmatprep.subr.mxu0 0.0
        %1982 = vmatpush1.msra.mxu0 %v1605
        %1983 = vmatprep.subr.mxu0 0.0
        %1984 = vmatpush1.msra.mxu0 %v1606
        %1985 = vmatprep.subr.mxu0 0.0
        %1986 = vmatpush1.msra.mxu0 %v1607
        %1987 = vmatprep.subr.mxu0 0.0
        %1988 = vmatpush1.msra.mxu0 %v1608
        %1989 = vmatprep.subr.mxu0 0.0
        %1990 = vmatpush1.msra.mxu0 %v1609
        %1991 = vmatprep.subr.mxu0 0.0
        %1992 = vmatpush1.msra.mxu0 %v1610
        %1993 = vmatprep.subr.mxu0 0.0
        %1994 = vmatpush1.msra.mxu0 %v1611
        %1995 = vmatprep.mubr.f32.mxu0 %v1449
        %1996 = vmatmul.mubr.f32.gmra.mrb[0].mxu0 %v1448
        %v1997 = vpop.f32.mrb[0].mxu0
        %v1998 = vadd.f32 %v1928, %v1997
        %v1999 = vpop.f32.mrb[0].mxu0
        %2000 = vdwg.mxu0
        %2001 = vmatprep.subr.mxu0 0.0
        %2002 = vmatpush1.msra.mxu0 %v1612
        %2003 = vmatprep.subr.mxu0 0.0
        %2004 = vmatpush1.msra.mxu0 %v1613
        %2005 = vmatprep.subr.mxu0 0.0
        %2006 = vmatpush1.msra.mxu0 %v1614
        %2007 = vmatprep.subr.mxu0 0.0
        %2008 = vmatpush1.msra.mxu0 %v1615
        %2009 = vmatprep.subr.mxu0 0.0
        %2010 = vmatpush1.msra.mxu0 %v1616
        %2011 = vmatprep.subr.mxu0 0.0
        %2012 = vmatpush1.msra.mxu0 %v1617
        %2013 = vmatprep.subr.mxu0 0.0
        %2014 = vmatpush1.msra.mxu0 %v1618
        %2015 = vmatprep.subr.mxu0 0.0
        %2016 = vmatpush1.msra.mxu0 %v1619
        %2017 = vmatprep.subr.mxu0 0.0
        %2018 = vmatpush1.msra.mxu0 %v1620
        %2019 = vmatprep.subr.mxu0 0.0
        %2020 = vmatpush1.msra.mxu0 %v1621
        %2021 = vmatprep.subr.mxu0 0.0
        %2022 = vmatpush1.msra.mxu0 %v1622
        %2023 = vmatprep.subr.mxu0 0.0
        %2024 = vmatpush1.msra.mxu0 %v1623
        %2025 = vmatprep.subr.mxu0 0.0
        %2026 = vmatpush1.msra.mxu0 %v1624
        %2027 = vmatprep.subr.mxu0 0.0
        %2028 = vmatpush1.msra.mxu0 %v1625
        %2029 = vmatprep.subr.mxu0 0.0
        %2030 = vmatpush1.msra.mxu0 %v1626
        %2031 = vmatprep.subr.mxu0 0.0
        %2032 = vmatpush1.msra.mxu0 %v1627
        %2033 = vmatprep.subr.mxu0 0.0
        %2034 = vmatpush1.msra.mxu0 %v1628
        %2035 = vmatprep.subr.mxu0 0.0
        %2036 = vmatpush1.msra.mxu0 %v1629
        %2037 = vmatprep.subr.mxu0 0.0
        %2038 = vmatpush1.msra.mxu0 %v1630
        %2039 = vmatprep.subr.mxu0 0.0
        %2040 = vmatpush1.msra.mxu0 %v1631
        %2041 = vmatprep.subr.mxu0 0.0
        %2042 = vmatpush1.msra.mxu0 %v1632
        %2043 = vmatprep.subr.mxu0 0.0
        %2044 = vmatpush1.msra.mxu0 %v1633
        %2045 = vmatprep.subr.mxu0 0.0
        %2046 = vmatpush1.msra.mxu0 %v1634
        %2047 = vmatprep.subr.mxu0 0.0
        %2048 = vmatpush1.msra.mxu0 %v1635
        %2049 = vmatprep.subr.mxu0 0.0
        %2050 = vmatpush1.msra.mxu0 %v1636
        %2051 = vmatprep.subr.mxu0 0.0
        %2052 = vmatpush1.msra.mxu0 %v1637
        %2053 = vmatprep.subr.mxu0 0.0
        %2054 = vmatpush1.msra.mxu0 %v1638
        %2055 = vmatprep.subr.mxu0 0.0
        %2056 = vmatpush1.msra.mxu0 %v1639
        %2057 = vmatprep.subr.mxu0 0.0
        %2058 = vmatpush1.msra.mxu0 %v1640
        %2059 = vmatprep.subr.mxu0 0.0
        %2060 = vmatpush1.msra.mxu0 %v1641
        %2061 = vmatprep.subr.mxu0 0.0
        %2062 = vmatpush1.msra.mxu0 %v1642
        %2063 = vmatprep.subr.mxu0 0.0
        %2064 = vmatpush1.msra.mxu0 %v1643
        %2065 = vmatprep.mubr.f32.mxu0 %v1451
        %2066 = vmatmul.mubr.f32.gmra.mrb[0].mxu0 %v1450
        %v2067 = vpop.f32.mrb[0].mxu0
        %v2068 = vadd.f32 %v1998, %v2067
        %v2069 = vpop.f32.mrb[0].mxu0
        %2070 = vdwg.mxu0
        %v2071 = vmax.f32 %v2068, 0.0
        %v2072 = vld [vmem:[%s608] sm:$0xff]
        %v2073 = vld [vmem:[%s608 + $0x8] sm:$0xff]
        %v2074 = vld [vmem:[%s608 + $0x10] sm:$0xff]
        %v2075 = vld [vmem:[%s608 + $0x18] sm:$0xff]
        %v2076 = vld [vmem:[%s608 + $0x20] sm:$0xff]
        %v2077 = vld [vmem:[%s608 + $0x28] sm:$0xff]
        %v2078 = vld [vmem:[%s608 + $0x30] sm:$0xff]
        %v2079 = vld [vmem:[%s608 + $0x38] sm:$0xff]
        %v2080 = vld [vmem:[%s608 + $0x40] sm:$0xff]
        %v2081 = vld [vmem:[%s608 + $0x48] sm:$0xff]
        %v2082 = vld [vmem:[%s608 + $0x50] sm:$0xff]
        %v2083 = vld [vmem:[%s608 + $0x58] sm:$0xff]
        %v2084 = vld [vmem:[%s608 + $0x60] sm:$0xff]
        %v2085 = vld [vmem:[%s608 + $0x68] sm:$0xff]
        %v2086 = vld [vmem:[%s608 + $0x70] sm:$0xff]
        %v2087 = vld [vmem:[%s608 + $0x78] sm:$0xff]
        %v2088 = vld [vmem:[%s611] sm:$0x1]
        %v2090 = vlaneseq
        %v2091 = vshrl.u32 %v2090, 7
        %v2092 = vsub.s32 0, %v2091
        %v2093 = vrot.slane %v2088, %v2092
        %2095 = vmatprep.subr.mxu0 0.0
        %2096 = vmatpush1.msra.mxu0 %v2072
        %2097 = vmatprep.subr.mxu0 0.0
        %2098 = vmatpush1.msra.mxu0 %v2073
        %2099 = vmatprep.subr.mxu0 0.0
        %2100 = vmatpush1.msra.mxu0 %v2074
        %2101 = vmatprep.subr.mxu0 0.0
        %2102 = vmatpush1.msra.mxu0 %v2075
        %2103 = vmatprep.subr.mxu0 0.0
        %2104 = vmatpush1.msra.mxu0 %v2076
        %2105 = vmatprep.subr.mxu0 0.0
        %2106 = vmatpush1.msra.mxu0 %v2077
        %2107 = vmatprep.subr.mxu0 0.0
        %2108 = vmatpush1.msra.mxu0 %v2078
        %2109 = vmatprep.subr.mxu0 0.0
        %2110 = vmatpush1.msra.mxu0 %v2079
        %2111 = vmatprep.subr.mxu0 0.0
        %2112 = vmatpush1.msra.mxu0 %v2080
        %2113 = vmatprep.subr.mxu0 0.0
        %2114 = vmatpush1.msra.mxu0 %v2081
        %2115 = vmatprep.subr.mxu0 0.0
        %2116 = vmatpush1.msra.mxu0 %v2082
        %2117 = vmatprep.subr.mxu0 0.0
        %2118 = vmatpush1.msra.mxu0 %v2083
        %2119 = vmatprep.subr.mxu0 0.0
        %2120 = vmatpush1.msra.mxu0 %v2084
        %2121 = vmatprep.subr.mxu0 0.0
        %2122 = vmatpush1.msra.mxu0 %v2085
        %2123 = vmatprep.subr.mxu0 0.0
        %2124 = vmatpush1.msra.mxu0 %v2086
        %2125 = vmatprep.subr.mxu0 0.0
        %2126 = vmatpush1.msra.mxu0 %v2087
        %2127 = vmatprep.subr.mxu0 0.0
        %2128 = vmatpush1.msra.mxu0 0.0
        %2129 = vmatprep.subr.mxu0 0.0
        %2130 = vmatpush1.msra.mxu0 0.0
        %2131 = vmatprep.subr.mxu0 0.0
        %2132 = vmatpush1.msra.mxu0 0.0
        %2133 = vmatprep.subr.mxu0 0.0
        %2134 = vmatpush1.msra.mxu0 0.0
        %2135 = vmatprep.subr.mxu0 0.0
        %2136 = vmatpush1.msra.mxu0 0.0
        %2137 = vmatprep.subr.mxu0 0.0
        %2138 = vmatpush1.msra.mxu0 0.0
        %2139 = vmatprep.subr.mxu0 0.0
        %2140 = vmatpush1.msra.mxu0 0.0
        %2141 = vmatprep.subr.mxu0 0.0
        %2142 = vmatpush1.msra.mxu0 0.0
        %2143 = vmatprep.subr.mxu0 0.0
        %2144 = vmatpush1.msra.mxu0 0.0
        %2145 = vmatprep.subr.mxu0 0.0
        %2146 = vmatpush1.msra.mxu0 0.0
        %2147 = vmatprep.subr.mxu0 0.0
        %2148 = vmatpush1.msra.mxu0 0.0
        %2149 = vmatprep.subr.mxu0 0.0
        %2150 = vmatpush1.msra.mxu0 0.0
        %2151 = vmatprep.subr.mxu0 0.0
        %2152 = vmatpush1.msra.mxu0 0.0
        %2153 = vmatprep.subr.mxu0 0.0
        %2154 = vmatpush1.msra.mxu0 0.0
        %2155 = vmatprep.subr.mxu0 0.0
        %2156 = vmatpush1.msra.mxu0 0.0
        %2157 = vmatprep.subr.mxu0 0.0
        %2158 = vmatpush1.msra.mxu0 0.0
        %2159 = vmatprep.mubr.f32.mxu0 0.0
        %2160 = vmatmul.mubr.f32.gmra.mrb[0].mxu0 %v2071
        %v2161 = vpop.f32.mrb[0].mxu0
        %v2162 = vadd.f32 %v2093, %v2161
        %v2163 = vpop.f32.mrb[0].mxu0
        %2164 = vdwg.mxu0
        %v2165 = vmax.f32 %v2162, 0.0
        %v2166 = vld [vmem:[%s497] sm:$0xff]
        %v2167 = vld [vmem:[%s497 + $0x8] sm:$0xff]
        %v2168 = vld [vmem:[%s497 + $0x10] sm:$0xff]
        %v2169 = vld [vmem:[%s497 + $0x18] sm:$0xff]
        %v2170 = vld [vmem:[%s497 + $0x20] sm:$0xff]
        %v2171 = vld [vmem:[%s497 + $0x28] sm:$0xff]
        %v2172 = vld [vmem:[%s497 + $0x30] sm:$0xff]
        %v2173 = vld [vmem:[%s497 + $0x38] sm:$0xff]
        %v2174 = vld [vmem:[%s497 + $0x40] sm:$0xff]
        %v2175 = vld [vmem:[%s497 + $0x48] sm:$0xff]
        %v2176 = vld [vmem:[%s497 + $0x50] sm:$0xff]
        %v2177 = vld [vmem:[%s497 + $0x58] sm:$0xff]
        %v2178 = vld [vmem:[%s497 + $0x60] sm:$0xff]
        %v2179 = vld [vmem:[%s497 + $0x68] sm:$0xff]
        %v2180 = vld [vmem:[%s497 + $0x70] sm:$0xff]
        %v2181 = vld [vmem:[%s497 + $0x78] sm:$0xff]
        %v2182 = vld [vmem:[%s614] sm:$0x1]
        %v2184 = vlaneseq
        %v2185 = vshrl.u32 %v2184, 7
        %v2186 = vsub.s32 0, %v2185
        %v2187 = vrot.slane %v2182, %v2186
        %2189 = vmatprep.subr.mxu0 0.0
        %2190 = vmatpush1.msra.mxu0 %v2166
        %2191 = vmatprep.subr.mxu0 0.0
        %2192 = vmatpush1.msra.mxu0 %v2167
        %2193 = vmatprep.subr.mxu0 0.0
        %2194 = vmatpush1.msra.mxu0 %v2168
        %2195 = vmatprep.subr.mxu0 0.0
        %2196 = vmatpush1.msra.mxu0 %v2169
        %2197 = vmatprep.subr.mxu0 0.0
        %2198 = vmatpush1.msra.mxu0 %v2170
        %2199 = vmatprep.subr.mxu0 0.0
        %2200 = vmatpush1.msra.mxu0 %v2171
        %2201 = vmatprep.subr.mxu0 0.0
        %2202 = vmatpush1.msra.mxu0 %v2172
        %2203 = vmatprep.subr.mxu0 0.0
        %2204 = vmatpush1.msra.mxu0 %v2173
        %2205 = vmatprep.subr.mxu0 0.0
        %2206 = vmatpush1.msra.mxu0 %v2174
        %2207 = vmatprep.subr.mxu0 0.0
        %2208 = vmatpush1.msra.mxu0 %v2175
        %2209 = vmatprep.subr.mxu0 0.0
        %2210 = vmatpush1.msra.mxu0 %v2176
        %2211 = vmatprep.subr.mxu0 0.0
        %2212 = vmatpush1.msra.mxu0 %v2177
        %2213 = vmatprep.subr.mxu0 0.0
        %2214 = vmatpush1.msra.mxu0 %v2178
        %2215 = vmatprep.subr.mxu0 0.0
        %2216 = vmatpush1.msra.mxu0 %v2179
        %2217 = vmatprep.subr.mxu0 0.0
        %2218 = vmatpush1.msra.mxu0 %v2180
        %2219 = vmatprep.subr.mxu0 0.0
        %2220 = vmatpush1.msra.mxu0 %v2181
        %2221 = vmatprep.subr.mxu0 0.0
        %2222 = vmatpush1.msra.mxu0 0.0
        %2223 = vmatprep.subr.mxu0 0.0
        %2224 = vmatpush1.msra.mxu0 0.0
        %2225 = vmatprep.subr.mxu0 0.0
        %2226 = vmatpush1.msra.mxu0 0.0
        %2227 = vmatprep.subr.mxu0 0.0
        %2228 = vmatpush1.msra.mxu0 0.0
        %2229 = vmatprep.subr.mxu0 0.0
        %2230 = vmatpush1.msra.mxu0 0.0
        %2231 = vmatprep.subr.mxu0 0.0
        %2232 = vmatpush1.msra.mxu0 0.0
        %2233 = vmatprep.subr.mxu0 0.0
        %2234 = vmatpush1.msra.mxu0 0.0
        %2235 = vmatprep.subr.mxu0 0.0
        %2236 = vmatpush1.msra.mxu0 0.0
        %2237 = vmatprep.subr.mxu0 0.0
        %2238 = vmatpush1.msra.mxu0 0.0
        %2239 = vmatprep.subr.mxu0 0.0
        %2240 = vmatpush1.msra.mxu0 0.0
        %2241 = vmatprep.subr.mxu0 0.0
        %2242 = vmatpush1.msra.mxu0 0.0
        %2243 = vmatprep.subr.mxu0 0.0
        %2244 = vmatpush1.msra.mxu0 0.0
        %2245 = vmatprep.subr.mxu0 0.0
        %2246 = vmatpush1.msra.mxu0 0.0
        %2247 = vmatprep.subr.mxu0 0.0
        %2248 = vmatpush1.msra.mxu0 0.0
        %2249 = vmatprep.subr.mxu0 0.0
        %2250 = vmatpush1.msra.mxu0 0.0
        %2251 = vmatprep.subr.mxu0 0.0
        %2252 = vmatpush1.msra.mxu0 0.0
        %2253 = vmatprep.mubr.f32.mxu0 0.0
        %2254 = vmatmul.mubr.f32.gmra.mrb[0].mxu0 %v2165
        %v2255 = vpop.f32.mrb[0].mxu0
        %v2256 = vadd.f32 %v2187, %v2255
        %v2257 = vpop.f32.mrb[0].mxu0
        %2258 = vdwg.mxu0
        %2259 = vst [vmem:[%s618] sm:$0xff] %v2256
        %p2260 = scmp.lt.s32.totalorder %s28, 4
        %s2261 = scalar_select %p2260, %s28, 4
        %s2262 = smul.addr %s2261, 8
        %s2263 = scalar_lea.vmem %s12, %s2262
        %p2264 = scmp.lt.s32.totalorder %s28, 4
        %s2265 = scalar_select %p2264, %s28, 4
        %s2266 = smul.addr %s2265, 8
        %s2267 = scalar_lea.vmem %s13, %s2266
        // Predicated region
        $region73: #{fwd.3} parent=67 // pred_check
          %p2268 = pneg %p348
        $region74: #{fwd.3} parent=67 // pred_check_branch
          %2270 = sbr.rel (%p2268) target = $region76
        $region75: #{fwd.3} parent=67 // pred_region
          _
        $region76: #{fwd.3} parent=67 // pred_fallthru
          _
        // Predicated region
        $region77: #{fwd.3} parent=67 // pred_check
          %p2271 = pneg %p374
        $region78: #{fwd.3} parent=67 // pred_check_branch
          %2273 = sbr.rel (%p2271) target = $region80
        $region79: #{fwd.3} parent=67 // pred_region
          _
        $region80: #{fwd.3} parent=67 // pred_fallthru
          _
      $region68: #{fwd.3} parent=5 // pred_fallthru
        _
      %p2274 = scmp.le.s32.totalorder 2, %s23
      // Predicated region
      $region81: #{fwd.3} parent=5 // pred_check
        %p2275 = pneg %p2274
      $region82: #{fwd.3} parent=5 // pred_check_branch
        %2277 = sbr.rel (%p2275) target = $region84
      $region83: #{fwd.3} parent=5 // pred_region
        %s2278 = ssub.s32 %s23, 2
        // Predicated region
        $region85: #{fwd.3} parent=83 // pred_check
          %p2279 = pneg %p354
        $region86: #{fwd.3} parent=83 // pred_check_branch
          %2281 = sbr.rel (%p2279) target = $region88
        $region87: #{fwd.3} parent=83 // pred_region
          %p2282 = scmp.lt.s32.totalorder %s29, 4
          %s2283 = scalar_select %p2282, %s29, 4
          %s2284 = smul.addr %s2283, 8
          %s2285 = scalar_lea.vmem %s12, %s2284
        $region88: #{fwd.3} parent=83 // pred_fallthru
          _
        // Predicated region
        $region89: #{fwd.3} parent=83 // pred_check
          %p2286 = pneg %p380
        $region90: #{fwd.3} parent=83 // pred_check_branch
          %2288 = sbr.rel (%p2286) target = $region92
        $region91: #{fwd.3} parent=83 // pred_region
          %p2289 = scmp.lt.s32.totalorder %s29, 4
          %s2290 = scalar_select %p2289, %s29, 4
          %s2291 = smul.addr %s2290, 8
          %s2292 = scalar_lea.vmem %s13, %s2291
        $region92: #{fwd.3} parent=83 // pred_fallthru
          _
      $region84: #{fwd.3} parent=5 // pred_fallthru
        _
    $region6: #{fwd.3} parent=1 // loop_footer
      %s27 = sadd.s32 1, %s23
    $region7: #{fwd.3} parent=1 // loop_footer_branch
      %22 = sbr.rel target = $region3
    $region8: #{fwd.3} parent=1 // loop_exit
      _
    %2293 = vsyncpa [#allocation3], 1
    %s2294 = scalar_lea.sflag [#allocation3], 1
    %2295 = vsyncpa %s2294, 1

// kernel: fwd.2
$region0: #{fwd.2}
  #allocation0 [shape = 'u32[]', space=smem, size = 0x4, offset = 0x4, fixed_abs, tag = 'smem constant byte address 0x4 - core index']
  #allocation1 [shape = 'u32[144,128]{1,0:T(1,128)}', space=vmem, size = 0x12000, scoped, tag = 'internal scratch']
  %s0 = inlined_call_operand.vmem [shape: f32[5,8,128], index: 0, kind: input, shape index: {}]
  %s1 = inlined_call_operand.hbm [shape: f32[5,128,128], index: 1, kind: input, shape index: {}]
  %s2 = inlined_call_operand.hbm [shape: f32[5,1,128], index: 2, kind: input, shape index: {}]
  %s3 = inlined_call_operand.hbm [shape: f32[5,128,128], index: 3, kind: input, shape index: {}]
  %s4 = inlined_call_operand.hbm [shape: f32[5,1,128], index: 4, kind: input, shape index: {}]
  %s5 = inlined_call_operand.hbm [shape: f32[5,128,1536], index: 5, kind: input, shape index: {}]
  %s6 = inlined_call_operand.hbm [shape: f32[5,1,1536], index: 6, kind: input, shape index: {}]
  %s7 = inlined_call_operand.hbm [shape: f32[5,1536,128], index: 7, kind: input, shape index: {}]
  %s8 = inlined_call_operand.hbm [shape: f32[5,1,128], index: 8, kind: input, shape index: {}]
  %s9 = inlined_call_operand.vmem [shape: f32[5,8,128], index: 9, kind: output, shape index: {}]
  %s10 = sld [smem:[#allocation0]]
  $region101: #{fwd.2} parent=0
    _
  %s12 = ssub.s32 1, %s10
  %s13 = scalar_select 0, %s12, %s10
  $region1: #{fwd.2} parent=0
    #allocation2 [shape = 'u8[131072]{0}', space=vmem, size = 0x20000, scoped, tag = 'input window, operand 1']
    #allocation3 [shape = 's32[2]{0}', space=sflag, size = 0x8, scoped, tag = 'scoped memory for fwd.2']
    #allocation4 [shape = 'u8[1024]{0}', space=vmem, size = 0x400, scoped, tag = 'input window, operand 2']
    #allocation5 [shape = 's32[2]{0}', space=sflag, size = 0x8, scoped, tag = 'scoped memory for fwd.2']
    #allocation6 [shape = 'u8[131072]{0}', space=vmem, size = 0x20000, scoped, tag = 'input window, operand 3']
    #allocation7 [shape = 'u8[1024]{0}', space=vmem, size = 0x400, scoped, tag = 'input window, operand 4']
    #allocation8 [shape = 's32[2]{0}', space=sflag, size = 0x8, scoped, tag = 'scoped memory for fwd.2']
    #allocation9 [shape = 'u8[1572864]{0}', space=vmem, size = 0x180000, scoped, tag = 'input window, operand 5']
    #allocation10 [shape = 'u8[12288]{0}', space=vmem, size = 0x3000, scoped, tag = 'input window, operand 6']
    #allocation11 [shape = 's32[2]{0}', space=sflag, size = 0x8, scoped, tag = 'scoped memory for fwd.2']
    #allocation12 [shape = 'u8[1572864]{0}', space=vmem, size = 0x180000, scoped, tag = 'input window, operand 7']
    #allocation13 [shape = 'u8[1024]{0}', space=vmem, size = 0x400, scoped, tag = 'input window, operand 8']
    #allocation14 [shape = 's32[2]{0}', space=sflag, size = 0x8, scoped, tag = 'scoped memory for fwd.2']
    %14 = vsyncpa [#allocation3], 0
    %s15 = scalar_lea.sflag [#allocation3], 1
    %16 = vsyncpa %s15, 0
    %17 = vsyncpa [#allocation5], 0
    %s18 = scalar_lea.sflag [#allocation5], 1
    %19 = vsyncpa %s18, 0
    %20 = vsyncpa [#allocation8], 0
    %s21 = scalar_lea.sflag [#allocation8], 1
    %22 = vsyncpa %s21, 0
    %23 = vsyncpa [#allocation11], 0
    %s24 = scalar_lea.sflag [#allocation11], 1
    %25 = vsyncpa %s24, 0
    %26 = vsyncpa [#allocation14], 0
    %s27 = scalar_lea.sflag [#allocation14], 1
    %28 = vsyncpa %s27, 0
    loop: start=0, step=1, limit=7
    $region2: #{fwd.2} parent=1 // loop_pre_header
      _
    $region3: #{fwd.2} parent=1 // loop_header
      %s30 = sphi 0, %s34
      %p31 = scmp.ge.s32.totalorder %s30, 7
      %s40 = sphi 0, %s42
      %s43 = sphi 0, %s40
      %s44 = sphi 0, %s43
      %s60 = sphi 0, %s44
      %s66 = sphi 0, %s68
      %s69 = sphi 0, %s66
      %s70 = sphi 0, %s69
      %s86 = sphi 0, %s70
      %s92 = sphi 0, %s94
      %s95 = sphi 0, %s92
      %s96 = sphi 0, %s95
      %s112 = sphi 0, %s96
      %s118 = sphi 0, %s120
      %s121 = sphi 0, %s118
      %s122 = sphi 0, %s121
      %s138 = sphi 0, %s122
      %s144 = sphi 0, %s146
      %s147 = sphi 0, %s144
      %s148 = sphi 0, %s147
      %s164 = sphi 0, %s148
      %s170 = sphi 0, %s172
      %s173 = sphi 0, %s170
      %s174 = sphi 0, %s173
      %s190 = sphi 0, %s174
      %s196 = sphi 0, %s198
      %s199 = sphi 0, %s196
      %s200 = sphi 0, %s199
      %s216 = sphi 0, %s200
      %s222 = sphi 0, %s224
      %s225 = sphi 0, %s222
      %s226 = sphi 0, %s225
      %s242 = sphi 0, %s226
      %s248 = sphi 0, %s250
      %s251 = sphi 0, %s248
      %s252 = sphi 0, %s251
      %s268 = sphi 0, %s252
      %s274 = sphi 0, %s276
      %s277 = sphi 0, %s274
      %s278 = sphi 0, %s277
      %s294 = sphi 0, %s278
    $region4: #{fwd.2} parent=1 // loop_header_branch
      %33 = sbr.rel (%p31) target = $region8
    $region5: #{fwd.2} parent=1 // loop_body
      %s35 = ssub.s32 %s30, 1
      %s36 = ssub.s32 %s30, 2
      %s37 = sadd.s32 %s30, 1
      %s38 = ssub.s32 %s30, %s37
      %p39 = scmp.eq.s32.totalorder %s38, 0
      %s41 = sadd.s32 %s40, 1
      %s42 = scalar_select %p39, %s40, %s41
      %p45 = pneg %p39
      %p46 = scmp.eq.s32.totalorder %s30, 4
      %p47 = por %p45, %p46
      %p48 = scmp.ne.s32.totalorder %s40, %s43
      %p49 = scmp.eq.s32.totalorder %s30, 0
      %p50 = por %p48, %p49
      %p51 = scmp.ne.s32.totalorder %s40, %s43
      %p52 = scmp.eq.s32.totalorder %s35, 4
      %p53 = por %p51, %p52
      %p54 = scmp.ne.s32.totalorder %s43, %s44
      %p55 = scmp.eq.s32.totalorder %s35, 0
      %p56 = por %p54, %p55
      %p57 = scmp.ne.s32.totalorder %s43, %s44
      %p58 = scmp.eq.s32.totalorder %s36, 4
      %p59 = por %p57, %p58
      %p61 = scmp.ne.s32.totalorder %s44, %s60
      %p62 = scmp.eq.s32.totalorder %s36, 0
      %p63 = por %p61, %p62
      %s64 = ssub.s32 %s30, %s37
      %p65 = scmp.eq.s32.totalorder %s64, 0
      %s67 = sadd.s32 %s66, 1
      %s68 = scalar_select %p65, %s66, %s67
      %p71 = pneg %p65
      %p72 = scmp.eq.s32.totalorder %s30, 4
      %p73 = por %p71, %p72
      %p74 = scmp.ne.s32.totalorder %s66, %s69
      %p75 = scmp.eq.s32.totalorder %s30, 0
      %p76 = por %p74, %p75
      %p77 = scmp.ne.s32.totalorder %s66, %s69
      %p78 = scmp.eq.s32.totalorder %s35, 4
      %p79 = por %p77, %p78
      %p80 = scmp.ne.s32.totalorder %s69, %s70
      %p81 = scmp.eq.s32.totalorder %s35, 0
      %p82 = por %p80, %p81
      %p83 = scmp.ne.s32.totalorder %s69, %s70
      %p84 = scmp.eq.s32.totalorder %s36, 4
      %p85 = por %p83, %p84
      %p87 = scmp.ne.s32.totalorder %s70, %s86
      %p88 = scmp.eq.s32.totalorder %s36, 0
      %p89 = por %p87, %p88
      %s90 = ssub.s32 %s30, %s37
      %p91 = scmp.eq.s32.totalorder %s90, 0
      %s93 = sadd.s32 %s92, 1
      %s94 = scalar_select %p91, %s92, %s93
      %p97 = pneg %p91
      %p98 = scmp.eq.s32.totalorder %s30, 4
      %p99 = por %p97, %p98
      %p100 = scmp.ne.s32.totalorder %s92, %s95
      %p101 = scmp.eq.s32.totalorder %s30, 0
      %p102 = por %p100, %p101
      %p103 = scmp.ne.s32.totalorder %s92, %s95
      %p104 = scmp.eq.s32.totalorder %s35, 4
      %p105 = por %p103, %p104
      %p106 = scmp.ne.s32.totalorder %s95, %s96
      %p107 = scmp.eq.s32.totalorder %s35, 0
      %p108 = por %p106, %p107
      %p109 = scmp.ne.s32.totalorder %s95, %s96
      %p110 = scmp.eq.s32.totalorder %s36, 4
      %p111 = por %p109, %p110
      %p113 = scmp.ne.s32.totalorder %s96, %s112
      %p114 = scmp.eq.s32.totalorder %s36, 0
      %p115 = por %p113, %p114
      %s116 = ssub.s32 %s30, %s37
      %p117 = scmp.eq.s32.totalorder %s116, 0
      %s119 = sadd.s32 %s118, 1
      %s120 = scalar_select %p117, %s118, %s119
      %p123 = pneg %p117
      %p124 = scmp.eq.s32.totalorder %s30, 4
      %p125 = por %p123, %p124
      %p126 = scmp.ne.s32.totalorder %s118, %s121
      %p127 = scmp.eq.s32.totalorder %s30, 0
      %p128 = por %p126, %p127
      %p129 = scmp.ne.s32.totalorder %s118, %s121
      %p130 = scmp.eq.s32.totalorder %s35, 4
      %p131 = por %p129, %p130
      %p132 = scmp.ne.s32.totalorder %s121, %s122
      %p133 = scmp.eq.s32.totalorder %s35, 0
      %p134 = por %p132, %p133
      %p135 = scmp.ne.s32.totalorder %s121, %s122
      %p136 = scmp.eq.s32.totalorder %s36, 4
      %p137 = por %p135, %p136
      %p139 = scmp.ne.s32.totalorder %s122, %s138
      %p140 = scmp.eq.s32.totalorder %s36, 0
      %p141 = por %p139, %p140
      %s142 = ssub.s32 %s30, %s37
      %p143 = scmp.eq.s32.totalorder %s142, 0
      %s145 = sadd.s32 %s144, 1
      %s146 = scalar_select %p143, %s144, %s145
      %p149 = pneg %p143
      %p150 = scmp.eq.s32.totalorder %s30, 4
      %p151 = por %p149, %p150
      %p152 = scmp.ne.s32.totalorder %s144, %s147
      %p153 = scmp.eq.s32.totalorder %s30, 0
      %p154 = por %p152, %p153
      %p155 = scmp.ne.s32.totalorder %s144, %s147
      %p156 = scmp.eq.s32.totalorder %s35, 4
      %p157 = por %p155, %p156
      %p158 = scmp.ne.s32.totalorder %s147, %s148
      %p159 = scmp.eq.s32.totalorder %s35, 0
      %p160 = por %p158, %p159
      %p161 = scmp.ne.s32.totalorder %s147, %s148
      %p162 = scmp.eq.s32.totalorder %s36, 4
      %p163 = por %p161, %p162
      %p165 = scmp.ne.s32.totalorder %s148, %s164
      %p166 = scmp.eq.s32.totalorder %s36, 0
      %p167 = por %p165, %p166
      %s168 = ssub.s32 %s30, %s37
      %p169 = scmp.eq.s32.totalorder %s168, 0
      %s171 = sadd.s32 %s170, 1
      %s172 = scalar_select %p169, %s170, %s171
      %p175 = pneg %p169
      %p176 = scmp.eq.s32.totalorder %s30, 4
      %p177 = por %p175, %p176
      %p178 = scmp.ne.s32.totalorder %s170, %s173
      %p179 = scmp.eq.s32.totalorder %s30, 0
      %p180 = por %p178, %p179
      %p181 = scmp.ne.s32.totalorder %s170, %s173
      %p182 = scmp.eq.s32.totalorder %s35, 4
      %p183 = por %p181, %p182
      %p184 = scmp.ne.s32.totalorder %s173, %s174
      %p185 = scmp.eq.s32.totalorder %s35, 0
      %p186 = por %p184, %p185
      %p187 = scmp.ne.s32.totalorder %s173, %s174
      %p188 = scmp.eq.s32.totalorder %s36, 4
      %p189 = por %p187, %p188
      %p191 = scmp.ne.s32.totalorder %s174, %s190
      %p192 = scmp.eq.s32.totalorder %s36, 0
      %p193 = por %p191, %p192
      %s194 = ssub.s32 %s30, %s37
      %p195 = scmp.eq.s32.totalorder %s194, 0
      %s197 = sadd.s32 %s196, 1
      %s198 = scalar_select %p195, %s196, %s197
      %p201 = pneg %p195
      %p202 = scmp.eq.s32.totalorder %s30, 4
      %p203 = por %p201, %p202
      %p204 = scmp.ne.s32.totalorder %s196, %s199
      %p205 = scmp.eq.s32.totalorder %s30, 0
      %p206 = por %p204, %p205
      %p207 = scmp.ne.s32.totalorder %s196, %s199
      %p208 = scmp.eq.s32.totalorder %s35, 4
      %p209 = por %p207, %p208
      %p210 = scmp.ne.s32.totalorder %s199, %s200
      %p211 = scmp.eq.s32.totalorder %s35, 0
      %p212 = por %p210, %p211
      %p213 = scmp.ne.s32.totalorder %s199, %s200
      %p214 = scmp.eq.s32.totalorder %s36, 4
      %p215 = por %p213, %p214
      %p217 = scmp.ne.s32.totalorder %s200, %s216
      %p218 = scmp.eq.s32.totalorder %s36, 0
      %p219 = por %p217, %p218
      %s220 = ssub.s32 %s30, %s37
      %p221 = scmp.eq.s32.totalorder %s220, 0
      %s223 = sadd.s32 %s222, 1
      %s224 = scalar_select %p221, %s222, %s223
      %p227 = pneg %p221
      %p228 = scmp.eq.s32.totalorder %s30, 4
      %p229 = por %p227, %p228
      %p230 = scmp.ne.s32.totalorder %s222, %s225
      %p231 = scmp.eq.s32.totalorder %s30, 0
      %p232 = por %p230, %p231
      %p233 = scmp.ne.s32.totalorder %s222, %s225
      %p234 = scmp.eq.s32.totalorder %s35, 4
      %p235 = por %p233, %p234
      %p236 = scmp.ne.s32.totalorder %s225, %s226
      %p237 = scmp.eq.s32.totalorder %s35, 0
      %p238 = por %p236, %p237
      %p239 = scmp.ne.s32.totalorder %s225, %s226
      %p240 = scmp.eq.s32.totalorder %s36, 4
      %p241 = por %p239, %p240
      %p243 = scmp.ne.s32.totalorder %s226, %s242
      %p244 = scmp.eq.s32.totalorder %s36, 0
      %p245 = por %p243, %p244
      %s246 = ssub.s32 %s30, %s37
      %p247 = scmp.eq.s32.totalorder %s246, 0
      %s249 = sadd.s32 %s248, 1
      %s250 = scalar_select %p247, %s248, %s249
      %p253 = pneg %p247
      %p254 = scmp.eq.s32.totalorder %s30, 4
      %p255 = por %p253, %p254
      %p256 = scmp.ne.s32.totalorder %s248, %s251
      %p257 = scmp.eq.s32.totalorder %s30, 0
      %p258 = por %p256, %p257
      %p259 = scmp.ne.s32.totalorder %s248, %s251
      %p260 = scmp.eq.s32.totalorder %s35, 4
      %p261 = por %p259, %p260
      %p262 = scmp.ne.s32.totalorder %s251, %s252
      %p263 = scmp.eq.s32.totalorder %s35, 0
      %p264 = por %p262, %p263
      %p265 = scmp.ne.s32.totalorder %s251, %s252
      %p266 = scmp.eq.s32.totalorder %s36, 4
      %p267 = por %p265, %p266
      %p269 = scmp.ne.s32.totalorder %s252, %s268
      %p270 = scmp.eq.s32.totalorder %s36, 0
      %p271 = por %p269, %p270
      %s272 = ssub.s32 %s30, %s37
      %p273 = scmp.eq.s32.totalorder %s272, 0
      %s275 = sadd.s32 %s274, 1
      %s276 = scalar_select %p273, %s274, %s275
      %p279 = pneg %p273
      %p280 = scmp.eq.s32.totalorder %s30, 4
      %p281 = por %p279, %p280
      %p282 = scmp.ne.s32.totalorder %s274, %s277
      %p283 = scmp.eq.s32.totalorder %s30, 0
      %p284 = por %p282, %p283
      %p285 = scmp.ne.s32.totalorder %s274, %s277
      %p286 = scmp.eq.s32.totalorder %s35, 4
      %p287 = por %p285, %p286
      %p288 = scmp.ne.s32.totalorder %s277, %s278
      %p289 = scmp.eq.s32.totalorder %s35, 0
      %p290 = por %p288, %p289
      %p291 = scmp.ne.s32.totalorder %s277, %s278
      %p292 = scmp.eq.s32.totalorder %s36, 4
      %p293 = por %p291, %p292
      %p295 = scmp.ne.s32.totalorder %s278, %s294
      %p296 = scmp.eq.s32.totalorder %s36, 0
      %p297 = por %p295, %p296
      %p298 = scmp.le.s32.totalorder 1, %s30
      %p299 = scmp.lt.s32.totalorder %s30, 6
      %p300 = pnand %p298, %p299
      %p301 = pneg %p300
      // Predicated region
      $region9: #{fwd.2} parent=5 // pred_check
        _
      $region10: #{fwd.2} parent=5 // pred_check_branch
        %303 = sbr.rel (%p300) target = $region12
      $region11: #{fwd.2} parent=5 // pred_region
        %s304 = ssub.s32 %s30, 1
      $region12: #{fwd.2} parent=5 // pred_fallthru
        _
      %p305 = scmp.lt.s32.totalorder %s30, 5
      // Predicated region
      $region13: #{fwd.2} parent=5 // pred_check
        %p306 = pneg %p305
      $region14: #{fwd.2} parent=5 // pred_check_branch
        %308 = sbr.rel (%p306) target = $region16
      $region15: #{fwd.2} parent=5 // pred_region
        // Predicated region
        $region17: #{fwd.2} parent=15 // pred_check
          %p309 = pneg %p50
        $region18: #{fwd.2} parent=15 // pred_check_branch
          %311 = sbr.rel (%p309) target = $region20
        $region19: #{fwd.2} parent=15 // pred_region
          %p312 = scmp.lt.s32.totalorder %s30, 4
          %s313 = scalar_select %p312, %s30, 4
          %s314 = smul.addr %s313, 8
          %s315 = scalar_lea.vmem %s0, %s314
        $region20: #{fwd.2} parent=15 // pred_fallthru
          _
        // Predicated region
        $region21: #{fwd.2} parent=15 // pred_check
          %p316 = pneg %p76
        $region22: #{fwd.2} parent=15 // pred_check_branch
          %318 = sbr.rel (%p316) target = $region24
        $region23: #{fwd.2} parent=15 // pred_region
          %s319 = sand.u32 %s66, 1
          %s320 = scalar_lea.sflag [#allocation3], %s319
          %s321 = sand.u32 %s66, 1
          %s322 = smul.addr %s321, 128
          %s323 = scalar_lea.vmem [#allocation2], %s322
          %s325 = ssub.s32 2048, 2048
          %326 = vsyncadd %s320, %s325
          %s327 = smul.addr %s30, 16
          %s328 = smul.addr %s327, 128
          %s329 = scalar_lea.hbm %s1, %s328
          %s330 = sshll.u32 %s323, 4
          %s331 = int_to_ptr.vmem [resolvable:$true] %s330
          %336 = dma.hbm_to_vmem [thread:$0]  %s329, 2048, %s331, %s320, 128, 128, 8
        $region24: #{fwd.2} parent=15 // pred_fallthru
          _
        // Predicated region
        $region25: #{fwd.2} parent=15 // pred_check
          %p337 = pneg %p102
        $region26: #{fwd.2} parent=15 // pred_check_branch
          %339 = sbr.rel (%p337) target = $region28
        $region27: #{fwd.2} parent=15 // pred_region
          %s340 = sand.u32 %s30, 1
          %s341 = scalar_lea.sflag [#allocation5], %s340
          %s342 = sand.u32 %s92, 1
          %s343 = scalar_lea.vmem [#allocation4], %s342
          %s345 = ssub.s32 16, 16
          %346 = vsyncadd %s341, %s345
          %s347 = smul.addr %s30, 16
          %s348 = scalar_lea.hbm %s2, %s347
          %s350 = sshll.u32 %s343, 4
          %s351 = int_to_ptr.vmem [resolvable:$true] %s350
          %353 = dma.hbm_to_vmem [thread:$0]  %s348, 16, %s351, %s341
        $region28: #{fwd.2} parent=15 // pred_fallthru
          _
        // Predicated region
        $region29: #{fwd.2} parent=15 // pred_check
          %p354 = pneg %p128
        $region30: #{fwd.2} parent=15 // pred_check_branch
          %356 = sbr.rel (%p354) target = $region32
        $region31: #{fwd.2} parent=15 // pred_region
          %s357 = sand.u32 %s30, 1
          %s358 = scalar_lea.sflag [#allocation5], %s357
          %s359 = sand.u32 %s118, 1
          %s360 = smul.addr %s359, 128
          %s361 = scalar_lea.vmem [#allocation6], %s360
          %s363 = ssub.s32 2048, 2048
          %364 = vsyncadd %s358, %s363
          %s365 = smul.addr %s30, 16
          %s366 = smul.addr %s365, 128
          %s367 = scalar_lea.hbm %s3, %s366
          %s368 = sshll.u32 %s361, 4
          %s369 = int_to_ptr.vmem [resolvable:$true] %s368
          %374 = dma.hbm_to_vmem [thread:$0]  %s367, 2048, %s369, %s358, 128, 128, 8
        $region32: #{fwd.2} parent=15 // pred_fallthru
          _
        // Predicated region
        $region33: #{fwd.2} parent=15 // pred_check
          %p375 = pneg %p154
        $region34: #{fwd.2} parent=15 // pred_check_branch
          %377 = sbr.rel (%p375) target = $region36
        $region35: #{fwd.2} parent=15 // pred_region
          %s378 = sand.u32 %s30, 1
          %s379 = scalar_lea.sflag [#allocation8], %s378
          %s380 = sand.u32 %s144, 1
          %s381 = scalar_lea.vmem [#allocation7], %s380
          %s383 = ssub.s32 16, 16
          %384 = vsyncadd %s379, %s383
          %s385 = smul.addr %s30, 16
          %s386 = scalar_lea.hbm %s4, %s385
          %s388 = sshll.u32 %s381, 4
          %s389 = int_to_ptr.vmem [resolvable:$true] %s388
          %391 = dma.hbm_to_vmem [thread:$0]  %s386, 16, %s389, %s379
        $region36: #{fwd.2} parent=15 // pred_fallthru
          _
        // Predicated region
        $region37: #{fwd.2} parent=15 // pred_check
          %p392 = pneg %p180
        $region38: #{fwd.2} parent=15 // pred_check_branch
          %394 = sbr.rel (%p392) target = $region40
        $region39: #{fwd.2} parent=15 // pred_region
          %s395 = sand.u32 %s30, 1
          %s396 = scalar_lea.sflag [#allocation8], %s395
          %s397 = sand.u32 %s170, 1
          %s398 = smul.addr %s397, 1536
          %s399 = scalar_lea.vmem [#allocation9], %s398
          %s401 = ssub.s32 24576, 24576
          %402 = vsyncadd %s396, %s401
          %s403 = smul.addr %s30, 192
          %s404 = smul.addr %s403, 128
          %s405 = scalar_lea.hbm %s5, %s404
          %s406 = sshll.u32 %s399, 4
          %s407 = int_to_ptr.vmem [resolvable:$true] %s406
          %412 = dma.hbm_to_vmem [thread:$0]  %s405, 24576, %s407, %s396, 1536, 1536, 96
        $region40: #{fwd.2} parent=15 // pred_fallthru
          _
        // Predicated region
        $region41: #{fwd.2} parent=15 // pred_check
          %p413 = pneg %p206
        $region42: #{fwd.2} parent=15 // pred_check_branch
          %415 = sbr.rel (%p413) target = $region44
        $region43: #{fwd.2} parent=15 // pred_region
          %s416 = sand.u32 %s30, 1
          %s417 = scalar_lea.sflag [#allocation11], %s416
          %s418 = sand.u32 %s196, 1
          %s419 = smul.addr %s418, 12
          %s420 = scalar_lea.vmem [#allocation10], %s419
          %s422 = ssub.s32 192, 192
          %423 = vsyncadd %s417, %s422
          %s424 = smul.addr %s30, 12
          %s425 = smul.addr %s424, 16
          %s426 = scalar_lea.hbm %s6, %s425
          %s428 = sshll.u32 %s420, 4
          %s429 = int_to_ptr.vmem [resolvable:$true] %s428
          %431 = dma.hbm_to_vmem [thread:$0]  %s426, 192, %s429, %s417
        $region44: #{fwd.2} parent=15 // pred_fallthru
          _
        // Predicated region
        $region45: #{fwd.2} parent=15 // pred_check
          %p432 = pneg %p232
        $region46: #{fwd.2} parent=15 // pred_check_branch
          %434 = sbr.rel (%p432) target = $region48
        $region47: #{fwd.2} parent=15 // pred_region
          %s435 = sand.u32 %s30, 1
          %s436 = scalar_lea.sflag [#allocation11], %s435
          %s437 = sand.u32 %s222, 1
          %s438 = smul.addr %s437, 1536
          %s439 = scalar_lea.vmem [#allocation12], %s438
          %s441 = ssub.s32 24576, 24576
          %442 = vsyncadd %s436, %s441
          %s443 = smul.addr %s30, 192
          %s444 = smul.addr %s443, 128
          %s445 = scalar_lea.hbm %s7, %s444
          %s446 = sshll.u32 %s439, 4
          %s447 = int_to_ptr.vmem [resolvable:$true] %s446
          %452 = dma.hbm_to_vmem [thread:$0]  %s445, 24576, %s447, %s436, 128, 128, 8
        $region48: #{fwd.2} parent=15 // pred_fallthru
          _
        // Predicated region
        $region49: #{fwd.2} parent=15 // pred_check
          %p453 = pneg %p258
        $region50: #{fwd.2} parent=15 // pred_check_branch
          %455 = sbr.rel (%p453) target = $region52
        $region51: #{fwd.2} parent=15 // pred_region
          %s456 = sand.u32 %s248, 1
          %s457 = scalar_lea.sflag [#allocation14], %s456
          %s458 = sand.u32 %s248, 1
          %s459 = scalar_lea.vmem [#allocation13], %s458
          %s461 = ssub.s32 16, 16
          %462 = vsyncadd %s457, %s461
          %s463 = smul.addr %s30, 16
          %s464 = scalar_lea.hbm %s8, %s463
          %s466 = sshll.u32 %s459, 4
          %s467 = int_to_ptr.vmem [resolvable:$true] %s466
          %469 = dma.hbm_to_vmem [thread:$0]  %s464, 16, %s467, %s457
        $region52: #{fwd.2} parent=15 // pred_fallthru
          _
      $region16: #{fwd.2} parent=5 // pred_fallthru
        _
      %p470 = scmp.le.s32.totalorder 1, %s30
      %p471 = scmp.lt.s32.totalorder %s30, 6
      %p472 = pnand %p470, %p471
      %p473 = pneg %p472
      // Predicated region
      $region53: #{fwd.2} parent=5 // pred_check
        _
      $region54: #{fwd.2} parent=5 // pred_check_branch
        %475 = sbr.rel (%p472) target = $region56
      $region55: #{fwd.2} parent=5 // pred_region
        %s476 = ssub.s32 %s30, 1
        %s477 = sand.u32 %s69, 1
        %s478 = scalar_lea.sflag [#allocation3], %s477
        %s479 = sand.u32 %s69, 1
        %s480 = smul.addr %s479, 128
        %s481 = scalar_lea.vmem [#allocation2], %s480
        // Predicated region
        $region57: #{fwd.2} parent=55 // pred_check
          %p482 = pneg %p82
        $region58: #{fwd.2} parent=55 // pred_check_branch
          %484 = sbr.rel (%p482) target = $region60
        $region59: #{fwd.2} parent=55 // pred_region
          %485 = dma.done %s478, 2048
        $region60: #{fwd.2} parent=55 // pred_fallthru
          _
        %s486 = sand.u32 %s35, 1
        %s487 = scalar_lea.sflag [#allocation5], %s486
        %s488 = sand.u32 %s95, 1
        %s489 = scalar_lea.vmem [#allocation4], %s488
        // Predicated region
        $region61: #{fwd.2} parent=55 // pred_check
          %p490 = pneg %p108
        $region62: #{fwd.2} parent=55 // pred_check_branch
          %492 = sbr.rel (%p490) target = $region64
        $region63: #{fwd.2} parent=55 // pred_region
          %493 = dma.done %s487, 16
        $region64: #{fwd.2} parent=55 // pred_fallthru
          _
        %s494 = sand.u32 %s35, 1
        %s495 = scalar_lea.sflag [#allocation5], %s494
        %s496 = sand.u32 %s121, 1
        %s497 = smul.addr %s496, 128
        %s498 = scalar_lea.vmem [#allocation6], %s497
        // Predicated region
        $region65: #{fwd.2} parent=55 // pred_check
          %p499 = pneg %p134
        $region66: #{fwd.2} parent=55 // pred_check_branch
          %501 = sbr.rel (%p499) target = $region68
        $region67: #{fwd.2} parent=55 // pred_region
          %502 = dma.done %s495, 2048
        $region68: #{fwd.2} parent=55 // pred_fallthru
          _
        %s503 = sand.u32 %s35, 1
        %s504 = scalar_lea.sflag [#allocation8], %s503
        %s505 = sand.u32 %s147, 1
        %s506 = scalar_lea.vmem [#allocation7], %s505
        // Predicated region
        $region69: #{fwd.2} parent=55 // pred_check
          %p507 = pneg %p160
        $region70: #{fwd.2} parent=55 // pred_check_branch
          %509 = sbr.rel (%p507) target = $region72
        $region71: #{fwd.2} parent=55 // pred_region
          %510 = dma.done %s504, 16
        $region72: #{fwd.2} parent=55 // pred_fallthru
          _
        %s511 = sand.u32 %s35, 1
        %s512 = scalar_lea.sflag [#allocation8], %s511
        %s513 = sand.u32 %s173, 1
        %s514 = smul.addr %s513, 1536
        %s515 = scalar_lea.vmem [#allocation9], %s514
        // Predicated region
        $region73: #{fwd.2} parent=55 // pred_check
          %p516 = pneg %p186
        $region74: #{fwd.2} parent=55 // pred_check_branch
          %518 = sbr.rel (%p516) target = $region76
        $region75: #{fwd.2} parent=55 // pred_region
          %519 = dma.done %s512, 24576
        $region76: #{fwd.2} parent=55 // pred_fallthru
          _
        %s520 = sand.u32 %s35, 1
        %s521 = scalar_lea.sflag [#allocation11], %s520
        %s522 = sand.u32 %s199, 1
        %s523 = smul.addr %s522, 12
        %s524 = scalar_lea.vmem [#allocation10], %s523
        // Predicated region
        $region77: #{fwd.2} parent=55 // pred_check
          %p525 = pneg %p212
        $region78: #{fwd.2} parent=55 // pred_check_branch
          %527 = sbr.rel (%p525) target = $region80
        $region79: #{fwd.2} parent=55 // pred_region
          %528 = dma.done %s521, 192
        $region80: #{fwd.2} parent=55 // pred_fallthru
          _
        %s529 = sand.u32 %s35, 1
        %s530 = scalar_lea.sflag [#allocation11], %s529
        %s531 = sand.u32 %s225, 1
        %s532 = smul.addr %s531, 1536
        %s533 = scalar_lea.vmem [#allocation12], %s532
        // Predicated region
        $region81: #{fwd.2} parent=55 // pred_check
          %p534 = pneg %p238
        $region82: #{fwd.2} parent=55 // pred_check_branch
          %536 = sbr.rel (%p534) target = $region84
        $region83: #{fwd.2} parent=55 // pred_region
          %537 = dma.done %s530, 24576
        $region84: #{fwd.2} parent=55 // pred_fallthru
          _
        %s538 = sand.u32 %s251, 1
        %s539 = scalar_lea.sflag [#allocation14], %s538
        %s540 = sand.u32 %s251, 1
        %s541 = scalar_lea.vmem [#allocation13], %s540
        // Predicated region
        $region85: #{fwd.2} parent=55 // pred_check
          %p542 = pneg %p264
        $region86: #{fwd.2} parent=55 // pred_check_branch
          %544 = sbr.rel (%p542) target = $region88
        $region87: #{fwd.2} parent=55 // pred_region
          %545 = dma.done %s539, 16
        $region88: #{fwd.2} parent=55 // pred_fallthru
          _
        %p546 = scmp.lt.s32.totalorder %s35, 4
        %s547 = scalar_select %p546, %s35, 4
        %s548 = smul.addr %s547, 8
        %s549 = scalar_lea.vmem %s0, %s548
        %p550 = pneg %p56
        %p551 = pneg %p53
        %s552 = sand.u32 %s69, 1
        %s553 = scalar_lea.sflag [#allocation3], %s552
        %s554 = sand.u32 %s69, 1
        %s555 = smul.addr %s554, 128
        %s556 = scalar_lea.vmem [#allocation2], %s555
        %p557 = pneg %p82
        %p558 = pneg %p79
        %s559 = sand.u32 %s35, 1
        %s560 = scalar_lea.sflag [#allocation5], %s559
        %s561 = sand.u32 %s95, 1
        %s562 = scalar_lea.vmem [#allocation4], %s561
        %p563 = pneg %p108
        %p564 = pneg %p105
        %s565 = sand.u32 %s35, 1
        %s566 = scalar_lea.sflag [#allocation5], %s565
        %s567 = sand.u32 %s121, 1
        %s568 = smul.addr %s567, 128
        %s569 = scalar_lea.vmem [#allocation6], %s568
        %p570 = pneg %p134
        %p571 = pneg %p131
        %s572 = sand.u32 %s35, 1
        %s573 = scalar_lea.sflag [#allocation8], %s572
        %s574 = sand.u32 %s147, 1
        %s575 = scalar_lea.vmem [#allocation7], %s574
        %p576 = pneg %p160
        %p577 = pneg %p157
        %s578 = sand.u32 %s35, 1
        %s579 = scalar_lea.sflag [#allocation8], %s578
        %s580 = sand.u32 %s173, 1
        %s581 = smul.addr %s580, 1536
        %s582 = scalar_lea.vmem [#allocation9], %s581
        %p583 = pneg %p186
        %p584 = pneg %p183
        %s585 = sand.u32 %s35, 1
        %s586 = scalar_lea.sflag [#allocation11], %s585
        %s587 = sand.u32 %s199, 1
        %s588 = smul.addr %s587, 12
        %s589 = scalar_lea.vmem [#allocation10], %s588
        %p590 = pneg %p212
        %p591 = pneg %p209
        %s592 = sand.u32 %s35, 1
        %s593 = scalar_lea.sflag [#allocation11], %s592
        %s594 = sand.u32 %s225, 1
        %s595 = smul.addr %s594, 1536
        %s596 = scalar_lea.vmem [#allocation12], %s595
        %p597 = pneg %p238
        %p598 = pneg %p235
        %s599 = sand.u32 %s251, 1
        %s600 = scalar_lea.sflag [#allocation14], %s599
        %s601 = sand.u32 %s251, 1
        %s602 = scalar_lea.vmem [#allocation13], %s601
        %p603 = pneg %p264
        %p604 = pneg %p261
        %p605 = pneg %p290
        %p606 = pneg %p287
        %p607 = scmp.lt.s32.totalorder %s35, 4
        %s608 = scalar_select %p607, %s35, 4
        %s609 = smul.addr %s608, 8
        %s610 = scalar_lea.vmem %s9, %s609
        %p611 = scmp.lt.s32.totalorder %s35, 4
        %s612 = scalar_select %p611, %s35, 4
        %s613 = smul.addr %s612, 8
        %s614 = scalar_lea.vmem %s0, %s613
        %p615 = scmp.lt.s32.totalorder %s35, 4
        %s616 = scalar_select %p615, %s35, 4
        %s617 = smul.addr %s616, 8
        %s618 = scalar_lea.vmem %s9, %s617
        %v619 = vld [vmem:[%s614] sm:$0xff]
        %v620 = vld [vmem:[%s481] sm:$0xff]
        %v621 = vld [vmem:[%s481 + $0x8] sm:$0xff]
        %v622 = vld [vmem:[%s481 + $0x10] sm:$0xff]
        %v623 = vld [vmem:[%s481 + $0x18] sm:$0xff]
        %v624 = vld [vmem:[%s481 + $0x20] sm:$0xff]
        %v625 = vld [vmem:[%s481 + $0x28] sm:$0xff]
        %v626 = vld [vmem:[%s481 + $0x30] sm:$0xff]
        %v627 = vld [vmem:[%s481 + $0x38] sm:$0xff]
        %v628 = vld [vmem:[%s481 + $0x40] sm:$0xff]
        %v629 = vld [vmem:[%s481 + $0x48] sm:$0xff]
        %v630 = vld [vmem:[%s481 + $0x50] sm:$0xff]
        %v631 = vld [vmem:[%s481 + $0x58] sm:$0xff]
        %v632 = vld [vmem:[%s481 + $0x60] sm:$0xff]
        %v633 = vld [vmem:[%s481 + $0x68] sm:$0xff]
        %v634 = vld [vmem:[%s481 + $0x70] sm:$0xff]
        %v635 = vld [vmem:[%s481 + $0x78] sm:$0xff]
        %v636 = vld [vmem:[%s489] sm:$0x1]
        %v638 = vlaneseq
        %v639 = vshrl.u32 %v638, 7
        %v640 = vsub.s32 0, %v639
        %v641 = vrot.slane %v636, %v640
        %643 = vmatprep.subr.mxu0 0.0
        %644 = vmatpush1.msra.mxu0 %v620
        %645 = vmatprep.subr.mxu0 0.0
        %646 = vmatpush1.msra.mxu0 %v621
        %647 = vmatprep.subr.mxu0 0.0
        %648 = vmatpush1.msra.mxu0 %v622
        %649 = vmatprep.subr.mxu0 0.0
        %650 = vmatpush1.msra.mxu0 %v623
        %651 = vmatprep.subr.mxu0 0.0
        %652 = vmatpush1.msra.mxu0 %v624
        %653 = vmatprep.subr.mxu0 0.0
        %654 = vmatpush1.msra.mxu0 %v625
        %655 = vmatprep.subr.mxu0 0.0
        %656 = vmatpush1.msra.mxu0 %v626
        %657 = vmatprep.subr.mxu0 0.0
        %658 = vmatpush1.msra.mxu0 %v627
        %659 = vmatprep.subr.mxu0 0.0
        %660 = vmatpush1.msra.mxu0 %v628
        %661 = vmatprep.subr.mxu0 0.0
        %662 = vmatpush1.msra.mxu0 %v629
        %663 = vmatprep.subr.mxu0 0.0
        %664 = vmatpush1.msra.mxu0 %v630
        %665 = vmatprep.subr.mxu0 0.0
        %666 = vmatpush1.msra.mxu0 %v631
        %667 = vmatprep.subr.mxu0 0.0
        %668 = vmatpush1.msra.mxu0 %v632
        %669 = vmatprep.subr.mxu0 0.0
        %670 = vmatpush1.msra.mxu0 %v633
        %671 = vmatprep.subr.mxu0 0.0
        %672 = vmatpush1.msra.mxu0 %v634
        %673 = vmatprep.subr.mxu0 0.0
        %674 = vmatpush1.msra.mxu0 %v635
        %675 = vmatprep.subr.mxu0 0.0
        %676 = vmatpush1.msra.mxu0 0.0
        %677 = vmatprep.subr.mxu0 0.0
        %678 = vmatpush1.msra.mxu0 0.0
        %679 = vmatprep.subr.mxu0 0.0
        %680 = vmatpush1.msra.mxu0 0.0
        %681 = vmatprep.subr.mxu0 0.0
        %682 = vmatpush1.msra.mxu0 0.0
        %683 = vmatprep.subr.mxu0 0.0
        %684 = vmatpush1.msra.mxu0 0.0
        %685 = vmatprep.subr.mxu0 0.0
        %686 = vmatpush1.msra.mxu0 0.0
        %687 = vmatprep.subr.mxu0 0.0
        %688 = vmatpush1.msra.mxu0 0.0
        %689 = vmatprep.subr.mxu0 0.0
        %690 = vmatpush1.msra.mxu0 0.0
        %691 = vmatprep.subr.mxu0 0.0
        %692 = vmatpush1.msra.mxu0 0.0
        %693 = vmatprep.subr.mxu0 0.0
        %694 = vmatpush1.msra.mxu0 0.0
        %695 = vmatprep.subr.mxu0 0.0
        %696 = vmatpush1.msra.mxu0 0.0
        %697 = vmatprep.subr.mxu0 0.0
        %698 = vmatpush1.msra.mxu0 0.0
        %699 = vmatprep.subr.mxu0 0.0
        %700 = vmatpush1.msra.mxu0 0.0
        %701 = vmatprep.subr.mxu0 0.0
        %702 = vmatpush1.msra.mxu0 0.0
        %703 = vmatprep.subr.mxu0 0.0
        %704 = vmatpush1.msra.mxu0 0.0
        %705 = vmatprep.subr.mxu0 0.0
        %706 = vmatpush1.msra.mxu0 0.0
        %707 = vmatprep.mubr.f32.mxu0 0.0
        %708 = vmatmul.mubr.f32.gmra.mrb[0].mxu0 %v619
        %v709 = vpop.f32.mrb[0].mxu0
        %v710 = vadd.f32 %v641, %v709
        %v711 = vpop.f32.mrb[0].mxu0
        %712 = vdwg.mxu0
        %v713 = vmax.f32 %v710, 0.0
        %v714 = vld [vmem:[%s498] sm:$0xff]
        %v715 = vld [vmem:[%s498 + $0x8] sm:$0xff]
        %v716 = vld [vmem:[%s498 + $0x10] sm:$0xff]
        %v717 = vld [vmem:[%s498 + $0x18] sm:$0xff]
        %v718 = vld [vmem:[%s498 + $0x20] sm:$0xff]
        %v719 = vld [vmem:[%s498 + $0x28] sm:$0xff]
        %v720 = vld [vmem:[%s498 + $0x30] sm:$0xff]
        %v721 = vld [vmem:[%s498 + $0x38] sm:$0xff]
        %v722 = vld [vmem:[%s498 + $0x40] sm:$0xff]
        %v723 = vld [vmem:[%s498 + $0x48] sm:$0xff]
        %v724 = vld [vmem:[%s498 + $0x50] sm:$0xff]
        %v725 = vld [vmem:[%s498 + $0x58] sm:$0xff]
        %v726 = vld [vmem:[%s498 + $0x60] sm:$0xff]
        %v727 = vld [vmem:[%s498 + $0x68] sm:$0xff]
        %v728 = vld [vmem:[%s498 + $0x70] sm:$0xff]
        %v729 = vld [vmem:[%s498 + $0x78] sm:$0xff]
        %v730 = vld [vmem:[%s506] sm:$0x1]
        %v732 = vlaneseq
        %v733 = vshrl.u32 %v732, 7
        %v734 = vsub.s32 0, %v733
        %v735 = vrot.slane %v730, %v734
        %737 = vmatprep.subr.mxu0 0.0
        %738 = vmatpush1.msra.mxu0 %v714
        %739 = vmatprep.subr.mxu0 0.0
        %740 = vmatpush1.msra.mxu0 %v715
        %741 = vmatprep.subr.mxu0 0.0
        %742 = vmatpush1.msra.mxu0 %v716
        %743 = vmatprep.subr.mxu0 0.0
        %744 = vmatpush1.msra.mxu0 %v717
        %745 = vmatprep.subr.mxu0 0.0
        %746 = vmatpush1.msra.mxu0 %v718
        %747 = vmatprep.subr.mxu0 0.0
        %748 = vmatpush1.msra.mxu0 %v719
        %749 = vmatprep.subr.mxu0 0.0
        %750 = vmatpush1.msra.mxu0 %v720
        %751 = vmatprep.subr.mxu0 0.0
        %752 = vmatpush1.msra.mxu0 %v721
        %753 = vmatprep.subr.mxu0 0.0
        %754 = vmatpush1.msra.mxu0 %v722
        %755 = vmatprep.subr.mxu0 0.0
        %756 = vmatpush1.msra.mxu0 %v723
        %757 = vmatprep.subr.mxu0 0.0
        %758 = vmatpush1.msra.mxu0 %v724
        %759 = vmatprep.subr.mxu0 0.0
        %760 = vmatpush1.msra.mxu0 %v725
        %761 = vmatprep.subr.mxu0 0.0
        %762 = vmatpush1.msra.mxu0 %v726
        %763 = vmatprep.subr.mxu0 0.0
        %764 = vmatpush1.msra.mxu0 %v727
        %765 = vmatprep.subr.mxu0 0.0
        %766 = vmatpush1.msra.mxu0 %v728
        %767 = vmatprep.subr.mxu0 0.0
        %768 = vmatpush1.msra.mxu0 %v729
        %769 = vmatprep.subr.mxu0 0.0
        %770 = vmatpush1.msra.mxu0 0.0
        %771 = vmatprep.subr.mxu0 0.0
        %772 = vmatpush1.msra.mxu0 0.0
        %773 = vmatprep.subr.mxu0 0.0
        %774 = vmatpush1.msra.mxu0 0.0
        %775 = vmatprep.subr.mxu0 0.0
        %776 = vmatpush1.msra.mxu0 0.0
        %777 = vmatprep.subr.mxu0 0.0
        %778 = vmatpush1.msra.mxu0 0.0
        %779 = vmatprep.subr.mxu0 0.0
        %780 = vmatpush1.msra.mxu0 0.0
        %781 = vmatprep.subr.mxu0 0.0
        %782 = vmatpush1.msra.mxu0 0.0
        %783 = vmatprep.subr.mxu0 0.0
        %784 = vmatpush1.msra.mxu0 0.0
        %785 = vmatprep.subr.mxu0 0.0
        %786 = vmatpush1.msra.mxu0 0.0
        %787 = vmatprep.subr.mxu0 0.0
        %788 = vmatpush1.msra.mxu0 0.0
        %789 = vmatprep.subr.mxu0 0.0
        %790 = vmatpush1.msra.mxu0 0.0
        %791 = vmatprep.subr.mxu0 0.0
        %792 = vmatpush1.msra.mxu0 0.0
        %793 = vmatprep.subr.mxu0 0.0
        %794 = vmatpush1.msra.mxu0 0.0
        %795 = vmatprep.subr.mxu0 0.0
        %796 = vmatpush1.msra.mxu0 0.0
        %797 = vmatprep.subr.mxu0 0.0
        %798 = vmatpush1.msra.mxu0 0.0
        %799 = vmatprep.subr.mxu0 0.0
        %800 = vmatpush1.msra.mxu0 0.0
        %801 = vmatprep.mubr.f32.mxu0 0.0
        %802 = vmatmul.mubr.f32.gmra.mrb[0].mxu0 %v713
        %v803 = vpop.f32.mrb[0].mxu0
        %v804 = vadd.f32 %v735, %v803
        %v805 = vpop.f32.mrb[0].mxu0
        %806 = vdwg.mxu0
        %v807 = vmax.f32 %v804, 0.0
        %v808 = vld [vmem:[%s515] sm:$0xff]
        %v809 = vld [vmem:[%s515 + $0x8] sm:$0xff]
        %v810 = vld [vmem:[%s515 + $0x10] sm:$0xff]
        %v811 = vld [vmem:[%s515 + $0x18] sm:$0xff]
        %v812 = vld [vmem:[%s515 + $0x20] sm:$0xff]
        %v813 = vld [vmem:[%s515 + $0x28] sm:$0xff]
        %v814 = vld [vmem:[%s515 + $0x30] sm:$0xff]
        %v815 = vld [vmem:[%s515 + $0x38] sm:$0xff]
        %v816 = vld [vmem:[%s515 + $0x40] sm:$0xff]
        %v817 = vld [vmem:[%s515 + $0x48] sm:$0xff]
        %v818 = vld [vmem:[%s515 + $0x50] sm:$0xff]
        %v819 = vld [vmem:[%s515 + $0x58] sm:$0xff]
        %v820 = vld [vmem:[%s515 + $0x60] sm:$0xff]
        %v821 = vld [vmem:[%s515 + $0x68] sm:$0xff]
        %v822 = vld [vmem:[%s515 + $0x70] sm:$0xff]
        %v823 = vld [vmem:[%s515 + $0x78] sm:$0xff]
        %v824 = vld [vmem:[%s515 + $0x80] sm:$0xff]
        %v825 = vld [vmem:[%s515 + $0x88] sm:$0xff]
        %v826 = vld [vmem:[%s515 + $0x90] sm:$0xff]
        %v827 = vld [vmem:[%s515 + $0x98] sm:$0xff]
        %v828 = vld [vmem:[%s515 + $0xa0] sm:$0xff]
        %v829 = vld [vmem:[%s515 + $0xa8] sm:$0xff]
        %v830 = vld [vmem:[%s515 + $0xb0] sm:$0xff]
        %v831 = vld [vmem:[%s515 + $0xb8] sm:$0xff]
        %v832 = vld [vmem:[%s515 + $0xc0] sm:$0xff]
        %v833 = vld [vmem:[%s515 + $0xc8] sm:$0xff]
        %v834 = vld [vmem:[%s515 + $0xd0] sm:$0xff]
        %v835 = vld [vmem:[%s515 + $0xd8] sm:$0xff]
        %v836 = vld [vmem:[%s515 + $0xe0] sm:$0xff]
        %v837 = vld [vmem:[%s515 + $0xe8] sm:$0xff]
        %v838 = vld [vmem:[%s515 + $0xf0] sm:$0xff]
        %v839 = vld [vmem:[%s515 + $0xf8] sm:$0xff]
        %v840 = vld [vmem:[%s515 + $0x100] sm:$0xff]
        %v841 = vld [vmem:[%s515 + $0x108] sm:$0xff]
        %v842 = vld [vmem:[%s515 + $0x110] sm:$0xff]
        %v843 = vld [vmem:[%s515 + $0x118] sm:$0xff]
        %v844 = vld [vmem:[%s515 + $0x120] sm:$0xff]
        %v845 = vld [vmem:[%s515 + $0x128] sm:$0xff]
        %v846 = vld [vmem:[%s515 + $0x130] sm:$0xff]
        %v847 = vld [vmem:[%s515 + $0x138] sm:$0xff]
        %v848 = vld [vmem:[%s515 + $0x140] sm:$0xff]
        %v849 = vld [vmem:[%s515 + $0x148] sm:$0xff]
        %v850 = vld [vmem:[%s515 + $0x150] sm:$0xff]
        %v851 = vld [vmem:[%s515 + $0x158] sm:$0xff]
        %v852 = vld [vmem:[%s515 + $0x160] sm:$0xff]
        %v853 = vld [vmem:[%s515 + $0x168] sm:$0xff]
        %v854 = vld [vmem:[%s515 + $0x170] sm:$0xff]
        %v855 = vld [vmem:[%s515 + $0x178] sm:$0xff]
        %v856 = vld [vmem:[%s515 + $0x180] sm:$0xff]
        %v857 = vld [vmem:[%s515 + $0x188] sm:$0xff]
        %v858 = vld [vmem:[%s515 + $0x190] sm:$0xff]
        %v859 = vld [vmem:[%s515 + $0x198] sm:$0xff]
        %v860 = vld [vmem:[%s515 + $0x1a0] sm:$0xff]
        %v861 = vld [vmem:[%s515 + $0x1a8] sm:$0xff]
        %v862 = vld [vmem:[%s515 + $0x1b0] sm:$0xff]
        %v863 = vld [vmem:[%s515 + $0x1b8] sm:$0xff]
        %v864 = vld [vmem:[%s515 + $0x1c0] sm:$0xff]
        %v865 = vld [vmem:[%s515 + $0x1c8] sm:$0xff]
        %v866 = vld [vmem:[%s515 + $0x1d0] sm:$0xff]
        %v867 = vld [vmem:[%s515 + $0x1d8] sm:$0xff]
        %v868 = vld [vmem:[%s515 + $0x1e0] sm:$0xff]
        %v869 = vld [vmem:[%s515 + $0x1e8] sm:$0xff]
        %v870 = vld [vmem:[%s515 + $0x1f0] sm:$0xff]
        %v871 = vld [vmem:[%s515 + $0x1f8] sm:$0xff]
        %v872 = vld [vmem:[%s515 + $0x200] sm:$0xff]
        %v873 = vld [vmem:[%s515 + $0x208] sm:$0xff]
        %v874 = vld [vmem:[%s515 + $0x210] sm:$0xff]
        %v875 = vld [vmem:[%s515 + $0x218] sm:$0xff]
        %v876 = vld [vmem:[%s515 + $0x220] sm:$0xff]
        %v877 = vld [vmem:[%s515 + $0x228] sm:$0xff]
        %v878 = vld [vmem:[%s515 + $0x230] sm:$0xff]
        %v879 = vld [vmem:[%s515 + $0x238] sm:$0xff]
        %v880 = vld [vmem:[%s515 + $0x240] sm:$0xff]
        %v881 = vld [vmem:[%s515 + $0x248] sm:$0xff]
        %v882 = vld [vmem:[%s515 + $0x250] sm:$0xff]
        %v883 = vld [vmem:[%s515 + $0x258] sm:$0xff]
        %v884 = vld [vmem:[%s515 + $0x260] sm:$0xff]
        %v885 = vld [vmem:[%s515 + $0x268] sm:$0xff]
        %v886 = vld [vmem:[%s515 + $0x270] sm:$0xff]
        %v887 = vld [vmem:[%s515 + $0x278] sm:$0xff]
        %v888 = vld [vmem:[%s515 + $0x280] sm:$0xff]
        %v889 = vld [vmem:[%s515 + $0x288] sm:$0xff]
        %v890 = vld [vmem:[%s515 + $0x290] sm:$0xff]
        %v891 = vld [vmem:[%s515 + $0x298] sm:$0xff]
        %v892 = vld [vmem:[%s515 + $0x2a0] sm:$0xff]
        %v893 = vld [vmem:[%s515 + $0x2a8] sm:$0xff]
        %v894 = vld [vmem:[%s515 + $0x2b0] sm:$0xff]
        %v895 = vld [vmem:[%s515 + $0x2b8] sm:$0xff]
        %v896 = vld [vmem:[%s515 + $0x2c0] sm:$0xff]
        %v897 = vld [vmem:[%s515 + $0x2c8] sm:$0xff]
        %v898 = vld [vmem:[%s515 + $0x2d0] sm:$0xff]
        %v899 = vld [vmem:[%s515 + $0x2d8] sm:$0xff]
        %v900 = vld [vmem:[%s515 + $0x2e0] sm:$0xff]
        %v901 = vld [vmem:[%s515 + $0x2e8] sm:$0xff]
        %v902 = vld [vmem:[%s515 + $0x2f0] sm:$0xff]
        %v903 = vld [vmem:[%s515 + $0x2f8] sm:$0xff]
        %v904 = vld [vmem:[%s515 + $0x300] sm:$0xff]
        %v905 = vld [vmem:[%s515 + $0x308] sm:$0xff]
        %v906 = vld [vmem:[%s515 + $0x310] sm:$0xff]
        %v907 = vld [vmem:[%s515 + $0x318] sm:$0xff]
        %v908 = vld [vmem:[%s515 + $0x320] sm:$0xff]
        %v909 = vld [vmem:[%s515 + $0x328] sm:$0xff]
        %v910 = vld [vmem:[%s515 + $0x330] sm:$0xff]
        %v911 = vld [vmem:[%s515 + $0x338] sm:$0xff]
        %v912 = vld [vmem:[%s515 + $0x340] sm:$0xff]
        %v913 = vld [vmem:[%s515 + $0x348] sm:$0xff]
        %v914 = vld [vmem:[%s515 + $0x350] sm:$0xff]
        %v915 = vld [vmem:[%s515 + $0x358] sm:$0xff]
        %v916 = vld [vmem:[%s515 + $0x360] sm:$0xff]
        %v917 = vld [vmem:[%s515 + $0x368] sm:$0xff]
        %v918 = vld [vmem:[%s515 + $0x370] sm:$0xff]
        %v919 = vld [vmem:[%s515 + $0x378] sm:$0xff]
        %v920 = vld [vmem:[%s515 + $0x380] sm:$0xff]
        %v921 = vld [vmem:[%s515 + $0x388] sm:$0xff]
        %v922 = vld [vmem:[%s515 + $0x390] sm:$0xff]
        %v923 = vld [vmem:[%s515 + $0x398] sm:$0xff]
        %v924 = vld [vmem:[%s515 + $0x3a0] sm:$0xff]
        %v925 = vld [vmem:[%s515 + $0x3a8] sm:$0xff]
        %v926 = vld [vmem:[%s515 + $0x3b0] sm:$0xff]
        %v927 = vld [vmem:[%s515 + $0x3b8] sm:$0xff]
        %v928 = vld [vmem:[%s515 + $0x3c0] sm:$0xff]
        %v929 = vld [vmem:[%s515 + $0x3c8] sm:$0xff]
        %v930 = vld [vmem:[%s515 + $0x3d0] sm:$0xff]
        %v931 = vld [vmem:[%s515 + $0x3d8] sm:$0xff]
        %v932 = vld [vmem:[%s515 + $0x3e0] sm:$0xff]
        %v933 = vld [vmem:[%s515 + $0x3e8] sm:$0xff]
        %v934 = vld [vmem:[%s515 + $0x3f0] sm:$0xff]
        %v935 = vld [vmem:[%s515 + $0x3f8] sm:$0xff]
        %v936 = vld [vmem:[%s515 + $0x400] sm:$0xff]
        %v937 = vld [vmem:[%s515 + $0x408] sm:$0xff]
        %v938 = vld [vmem:[%s515 + $0x410] sm:$0xff]
        %v939 = vld [vmem:[%s515 + $0x418] sm:$0xff]
        %v940 = vld [vmem:[%s515 + $0x420] sm:$0xff]
        %v941 = vld [vmem:[%s515 + $0x428] sm:$0xff]
        %v942 = vld [vmem:[%s515 + $0x430] sm:$0xff]
        %v943 = vld [vmem:[%s515 + $0x438] sm:$0xff]
        %v944 = vld [vmem:[%s515 + $0x440] sm:$0xff]
        %v945 = vld [vmem:[%s515 + $0x448] sm:$0xff]
        %v946 = vld [vmem:[%s515 + $0x450] sm:$0xff]
        %v947 = vld [vmem:[%s515 + $0x458] sm:$0xff]
        %v948 = vld [vmem:[%s515 + $0x460] sm:$0xff]
        %v949 = vld [vmem:[%s515 + $0x468] sm:$0xff]
        %v950 = vld [vmem:[%s515 + $0x470] sm:$0xff]
        %v951 = vld [vmem:[%s515 + $0x478] sm:$0xff]
        %v952 = vld [vmem:[%s515 + $0x480] sm:$0xff]
        %v953 = vld [vmem:[%s515 + $0x488] sm:$0xff]
        %v954 = vld [vmem:[%s515 + $0x490] sm:$0xff]
        %v955 = vld [vmem:[%s515 + $0x498] sm:$0xff]
        %v956 = vld [vmem:[%s515 + $0x4a0] sm:$0xff]
        %v957 = vld [vmem:[%s515 + $0x4a8] sm:$0xff]
        %v958 = vld [vmem:[%s515 + $0x4b0] sm:$0xff]
        %v959 = vld [vmem:[%s515 + $0x4b8] sm:$0xff]
        %v960 = vld [vmem:[%s515 + $0x4c0] sm:$0xff]
        %v961 = vld [vmem:[%s515 + $0x4c8] sm:$0xff]
        %v962 = vld [vmem:[%s515 + $0x4d0] sm:$0xff]
        %v963 = vld [vmem:[%s515 + $0x4d8] sm:$0xff]
        %v964 = vld [vmem:[%s515 + $0x4e0] sm:$0xff]
        %v965 = vld [vmem:[%s515 + $0x4e8] sm:$0xff]
        %v966 = vld [vmem:[%s515 + $0x4f0] sm:$0xff]
        %v967 = vld [vmem:[%s515 + $0x4f8] sm:$0xff]
        %v968 = vld [vmem:[%s515 + $0x500] sm:$0xff]
        %v969 = vld [vmem:[%s515 + $0x508] sm:$0xff]
        %v970 = vld [vmem:[%s515 + $0x510] sm:$0xff]
        %v971 = vld [vmem:[%s515 + $0x518] sm:$0xff]
        %v972 = vld [vmem:[%s515 + $0x520] sm:$0xff]
        %v973 = vld [vmem:[%s515 + $0x528] sm:$0xff]
        %v974 = vld [vmem:[%s515 + $0x530] sm:$0xff]
        %v975 = vld [vmem:[%s515 + $0x538] sm:$0xff]
        %v976 = vld [vmem:[%s515 + $0x540] sm:$0xff]
        %v977 = vld [vmem:[%s515 + $0x548] sm:$0xff]
        %v978 = vld [vmem:[%s515 + $0x550] sm:$0xff]
        %v979 = vld [vmem:[%s515 + $0x558] sm:$0xff]
        %v980 = vld [vmem:[%s515 + $0x560] sm:$0xff]
        %v981 = vld [vmem:[%s515 + $0x568] sm:$0xff]
        %v982 = vld [vmem:[%s515 + $0x570] sm:$0xff]
        %v983 = vld [vmem:[%s515 + $0x578] sm:$0xff]
        %v984 = vld [vmem:[%s515 + $0x580] sm:$0xff]
        %v985 = vld [vmem:[%s515 + $0x588] sm:$0xff]
        %v986 = vld [vmem:[%s515 + $0x590] sm:$0xff]
        %v987 = vld [vmem:[%s515 + $0x598] sm:$0xff]
        %v988 = vld [vmem:[%s515 + $0x5a0] sm:$0xff]
        %v989 = vld [vmem:[%s515 + $0x5a8] sm:$0xff]
        %v990 = vld [vmem:[%s515 + $0x5b0] sm:$0xff]
        %v991 = vld [vmem:[%s515 + $0x5b8] sm:$0xff]
        %v992 = vld [vmem:[%s515 + $0x5c0] sm:$0xff]
        %v993 = vld [vmem:[%s515 + $0x5c8] sm:$0xff]
        %v994 = vld [vmem:[%s515 + $0x5d0] sm:$0xff]
        %v995 = vld [vmem:[%s515 + $0x5d8] sm:$0xff]
        %v996 = vld [vmem:[%s515 + $0x5e0] sm:$0xff]
        %v997 = vld [vmem:[%s515 + $0x5e8] sm:$0xff]
        %v998 = vld [vmem:[%s515 + $0x5f0] sm:$0xff]
        %v999 = vld [vmem:[%s515 + $0x5f8] sm:$0xff]
        %v1000 = vld [vmem:[%s524] sm:$0xff]
        %v1001 = vld [vmem:[%s524 + $0x8] sm:$0xf]
        %v1004 = vlaneseq
        %v1005 = vshrl.u32 %v1004, 7
        %v1006 = vsub.s32 0, %v1005
        %v1007 = vrot.slane %v1000, %v1006
        %v1008 = vlaneseq
        %v1009 = vshrl.u32 %v1008, 7
        %v1010 = vsub.s32 1, %v1009
        %v1011 = vrot.slane %v1000, %v1010
        %v1012 = vlaneseq
        %v1013 = vshrl.u32 %v1012, 7
        %v1014 = vsub.s32 2, %v1013
        %v1015 = vrot.slane %v1000, %v1014
        %v1016 = vlaneseq
        %v1017 = vshrl.u32 %v1016, 7
        %v1018 = vsub.s32 3, %v1017
        %v1019 = vrot.slane %v1000, %v1018
        %v1020 = vlaneseq
        %v1021 = vshrl.u32 %v1020, 7
        %v1022 = vsub.s32 4, %v1021
        %v1023 = vrot.slane %v1000, %v1022
        %v1024 = vlaneseq
        %v1025 = vshrl.u32 %v1024, 7
        %v1026 = vsub.s32 5, %v1025
        %v1027 = vrot.slane %v1000, %v1026
        %v1028 = vlaneseq
        %v1029 = vshrl.u32 %v1028, 7
        %v1030 = vsub.s32 6, %v1029
        %v1031 = vrot.slane %v1000, %v1030
        %v1032 = vlaneseq
        %v1033 = vshrl.u32 %v1032, 7
        %v1034 = vsub.s32 7, %v1033
        %v1035 = vrot.slane %v1000, %v1034
        %v1036 = vlaneseq
        %v1037 = vshrl.u32 %v1036, 7
        %v1038 = vsub.s32 0, %v1037
        %v1039 = vrot.slane %v1001, %v1038
        %v1040 = vlaneseq
        %v1041 = vshrl.u32 %v1040, 7
        %v1042 = vsub.s32 1, %v1041
        %v1043 = vrot.slane %v1001, %v1042
        %v1044 = vlaneseq
        %v1045 = vshrl.u32 %v1044, 7
        %v1046 = vsub.s32 2, %v1045
        %v1047 = vrot.slane %v1001, %v1046
        %v1048 = vlaneseq
        %v1049 = vshrl.u32 %v1048, 7
        %v1050 = vsub.s32 3, %v1049
        %v1051 = vrot.slane %v1001, %v1050
        %1064 = vmatprep.subr.mxu0 %v809
        %1065 = vmatpush1.msra.mxu0 %v808
        %1066 = vmatprep.subr.mxu0 %v821
        %1067 = vmatpush1.msra.mxu0 %v820
        %1068 = vmatprep.subr.mxu0 %v833
        %1069 = vmatpush1.msra.mxu0 %v832
        %1070 = vmatprep.subr.mxu0 %v845
        %1071 = vmatpush1.msra.mxu0 %v844
        %1072 = vmatprep.subr.mxu0 %v857
        %1073 = vmatpush1.msra.mxu0 %v856
        %1074 = vmatprep.subr.mxu0 %v869
        %1075 = vmatpush1.msra.mxu0 %v868
        %1076 = vmatprep.subr.mxu0 %v881
        %1077 = vmatpush1.msra.mxu0 %v880
        %1078 = vmatprep.subr.mxu0 %v893
        %1079 = vmatpush1.msra.mxu0 %v892
        %1080 = vmatprep.subr.mxu0 %v905
        %1081 = vmatpush1.msra.mxu0 %v904
        %1082 = vmatprep.subr.mxu0 %v917
        %1083 = vmatpush1.msra.mxu0 %v916
        %1084 = vmatprep.subr.mxu0 %v929
        %1085 = vmatpush1.msra.mxu0 %v928
        %1086 = vmatprep.subr.mxu0 %v941
        %1087 = vmatpush1.msra.mxu0 %v940
        %1088 = vmatprep.subr.mxu0 %v953
        %1089 = vmatpush1.msra.mxu0 %v952
        %1090 = vmatprep.subr.mxu0 %v965
        %1091 = vmatpush1.msra.mxu0 %v964
        %1092 = vmatprep.subr.mxu0 %v977
        %1093 = vmatpush1.msra.mxu0 %v976
        %1094 = vmatprep.subr.mxu0 %v989
        %1095 = vmatpush1.msra.mxu0 %v988
        %1096 = vmatprep.subr.mxu0 0.0
        %1097 = vmatpush1.msra.mxu0 0.0
        %1098 = vmatprep.subr.mxu0 0.0
        %1099 = vmatpush1.msra.mxu0 0.0
        %1100 = vmatprep.subr.mxu0 0.0
        %1101 = vmatpush1.msra.mxu0 0.0
        %1102 = vmatprep.subr.mxu0 0.0
        %1103 = vmatpush1.msra.mxu0 0.0
        %1104 = vmatprep.subr.mxu0 0.0
        %1105 = vmatpush1.msra.mxu0 0.0
        %1106 = vmatprep.subr.mxu0 0.0
        %1107 = vmatpush1.msra.mxu0 0.0
        %1108 = vmatprep.subr.mxu0 0.0
        %1109 = vmatpush1.msra.mxu0 0.0
        %1110 = vmatprep.subr.mxu0 0.0
        %1111 = vmatpush1.msra.mxu0 0.0
        %1112 = vmatprep.subr.mxu0 0.0
        %1113 = vmatpush1.msra.mxu0 0.0
        %1114 = vmatprep.subr.mxu0 0.0
        %1115 = vmatpush1.msra.mxu0 0.0
        %1116 = vmatprep.subr.mxu0 0.0
        %1117 = vmatpush1.msra.mxu0 0.0
        %1118 = vmatprep.subr.mxu0 0.0
        %1119 = vmatpush1.msra.mxu0 0.0
        %1120 = vmatprep.subr.mxu0 0.0
        %1121 = vmatpush1.msra.mxu0 0.0
        %1122 = vmatprep.subr.mxu0 0.0
        %1123 = vmatpush1.msra.mxu0 0.0
        %1124 = vmatprep.subr.mxu0 0.0
        %1125 = vmatpush1.msra.mxu0 0.0
        %1126 = vmatprep.subr.mxu0 0.0
        %1127 = vmatpush1.msra.mxu0 0.0
        %1128 = vmatprep.mubr.f32.mxu0 0.0
        %1129 = vmatmul.mubr.f32.gmra.mrb[0].mxu0 %v807
        %v1130 = vpop.f32.mrb[0].mxu0
        %v1131 = vadd.f32 %v1007, %v1130
        %v1132 = vpop.f32.mrb[0].mxu0
        %v1133 = vadd.f32 %v1011, %v1132
        %1134 = vdwg.mxu0
        %1135 = vmatprep.subr.mxu0 %v811
        %1136 = vmatpush1.msra.mxu0 %v810
        %1137 = vmatprep.subr.mxu0 %v823
        %1138 = vmatpush1.msra.mxu0 %v822
        %1139 = vmatprep.subr.mxu0 %v835
        %1140 = vmatpush1.msra.mxu0 %v834
        %1141 = vmatprep.subr.mxu0 %v847
        %1142 = vmatpush1.msra.mxu0 %v846
        %1143 = vmatprep.subr.mxu0 %v859
        %1144 = vmatpush1.msra.mxu0 %v858
        %1145 = vmatprep.subr.mxu0 %v871
        %1146 = vmatpush1.msra.mxu0 %v870
        %1147 = vmatprep.subr.mxu0 %v883
        %1148 = vmatpush1.msra.mxu0 %v882
        %1149 = vmatprep.subr.mxu0 %v895
        %1150 = vmatpush1.msra.mxu0 %v894
        %1151 = vmatprep.subr.mxu0 %v907
        %1152 = vmatpush1.msra.mxu0 %v906
        %1153 = vmatprep.subr.mxu0 %v919
        %1154 = vmatpush1.msra.mxu0 %v918
        %1155 = vmatprep.subr.mxu0 %v931
        %1156 = vmatpush1.msra.mxu0 %v930
        %1157 = vmatprep.subr.mxu0 %v943
        %1158 = vmatpush1.msra.mxu0 %v942
        %1159 = vmatprep.subr.mxu0 %v955
        %1160 = vmatpush1.msra.mxu0 %v954
        %1161 = vmatprep.subr.mxu0 %v967
        %1162 = vmatpush1.msra.mxu0 %v966
        %1163 = vmatprep.subr.mxu0 %v979
        %1164 = vmatpush1.msra.mxu0 %v978
        %1165 = vmatprep.subr.mxu0 %v991
        %1166 = vmatpush1.msra.mxu0 %v990
        %1167 = vmatprep.subr.mxu0 0.0
        %1168 = vmatpush1.msra.mxu0 0.0
        %1169 = vmatprep.subr.mxu0 0.0
        %1170 = vmatpush1.msra.mxu0 0.0
        %1171 = vmatprep.subr.mxu0 0.0
        %1172 = vmatpush1.msra.mxu0 0.0
        %1173 = vmatprep.subr.mxu0 0.0
        %1174 = vmatpush1.msra.mxu0 0.0
        %1175 = vmatprep.subr.mxu0 0.0
        %1176 = vmatpush1.msra.mxu0 0.0
        %1177 = vmatprep.subr.mxu0 0.0
        %1178 = vmatpush1.msra.mxu0 0.0
        %1179 = vmatprep.subr.mxu0 0.0
        %1180 = vmatpush1.msra.mxu0 0.0
        %1181 = vmatprep.subr.mxu0 0.0
        %1182 = vmatpush1.msra.mxu0 0.0
        %1183 = vmatprep.subr.mxu0 0.0
        %1184 = vmatpush1.msra.mxu0 0.0
        %1185 = vmatprep.subr.mxu0 0.0
        %1186 = vmatpush1.msra.mxu0 0.0
        %1187 = vmatprep.subr.mxu0 0.0
        %1188 = vmatpush1.msra.mxu0 0.0
        %1189 = vmatprep.subr.mxu0 0.0
        %1190 = vmatpush1.msra.mxu0 0.0
        %1191 = vmatprep.subr.mxu0 0.0
        %1192 = vmatpush1.msra.mxu0 0.0
        %1193 = vmatprep.subr.mxu0 0.0
        %1194 = vmatpush1.msra.mxu0 0.0
        %1195 = vmatprep.subr.mxu0 0.0
        %1196 = vmatpush1.msra.mxu0 0.0
        %1197 = vmatprep.subr.mxu0 0.0
        %1198 = vmatpush1.msra.mxu0 0.0
        %1199 = vmatprep.mubr.f32.mxu0 0.0
        %1200 = vmatmul.mubr.f32.gmra.mrb[0].mxu0 %v807
        %v1201 = vpop.f32.mrb[0].mxu0
        %v1202 = vadd.f32 %v1015, %v1201
        %v1203 = vpop.f32.mrb[0].mxu0
        %v1204 = vadd.f32 %v1019, %v1203
        %1205 = vdwg.mxu0
        %1206 = vmatprep.subr.mxu0 %v813
        %1207 = vmatpush1.msra.mxu0 %v812
        %1208 = vmatprep.subr.mxu0 %v825
        %1209 = vmatpush1.msra.mxu0 %v824
        %1210 = vmatprep.subr.mxu0 %v837
        %1211 = vmatpush1.msra.mxu0 %v836
        %1212 = vmatprep.subr.mxu0 %v849
        %1213 = vmatpush1.msra.mxu0 %v848
        %1214 = vmatprep.subr.mxu0 %v861
        %1215 = vmatpush1.msra.mxu0 %v860
        %1216 = vmatprep.subr.mxu0 %v873
        %1217 = vmatpush1.msra.mxu0 %v872
        %1218 = vmatprep.subr.mxu0 %v885
        %1219 = vmatpush1.msra.mxu0 %v884
        %1220 = vmatprep.subr.mxu0 %v897
        %1221 = vmatpush1.msra.mxu0 %v896
        %1222 = vmatprep.subr.mxu0 %v909
        %1223 = vmatpush1.msra.mxu0 %v908
        %1224 = vmatprep.subr.mxu0 %v921
        %1225 = vmatpush1.msra.mxu0 %v920
        %1226 = vmatprep.subr.mxu0 %v933
        %1227 = vmatpush1.msra.mxu0 %v932
        %1228 = vmatprep.subr.mxu0 %v945
        %1229 = vmatpush1.msra.mxu0 %v944
        %1230 = vmatprep.subr.mxu0 %v957
        %1231 = vmatpush1.msra.mxu0 %v956
        %1232 = vmatprep.subr.mxu0 %v969
        %1233 = vmatpush1.msra.mxu0 %v968
        %1234 = vmatprep.subr.mxu0 %v981
        %1235 = vmatpush1.msra.mxu0 %v980
        %1236 = vmatprep.subr.mxu0 %v993
        %1237 = vmatpush1.msra.mxu0 %v992
        %1238 = vmatprep.subr.mxu0 0.0
        %1239 = vmatpush1.msra.mxu0 0.0
        %1240 = vmatprep.subr.mxu0 0.0
        %1241 = vmatpush1.msra.mxu0 0.0
        %1242 = vmatprep.subr.mxu0 0.0
        %1243 = vmatpush1.msra.mxu0 0.0
        %1244 = vmatprep.subr.mxu0 0.0
        %1245 = vmatpush1.msra.mxu0 0.0
        %1246 = vmatprep.subr.mxu0 0.0
        %1247 = vmatpush1.msra.mxu0 0.0
        %1248 = vmatprep.subr.mxu0 0.0
        %1249 = vmatpush1.msra.mxu0 0.0
        %1250 = vmatprep.subr.mxu0 0.0
        %1251 = vmatpush1.msra.mxu0 0.0
        %1252 = vmatprep.subr.mxu0 0.0
        %1253 = vmatpush1.msra.mxu0 0.0
        %1254 = vmatprep.subr.mxu0 0.0
        %1255 = vmatpush1.msra.mxu0 0.0
        %1256 = vmatprep.subr.mxu0 0.0
        %1257 = vmatpush1.msra.mxu0 0.0
        %1258 = vmatprep.subr.mxu0 0.0
        %1259 = vmatpush1.msra.mxu0 0.0
        %1260 = vmatprep.subr.mxu0 0.0
        %1261 = vmatpush1.msra.mxu0 0.0
        %1262 = vmatprep.subr.mxu0 0.0
        %1263 = vmatpush1.msra.mxu0 0.0
        %1264 = vmatprep.subr.mxu0 0.0
        %1265 = vmatpush1.msra.mxu0 0.0
        %1266 = vmatprep.subr.mxu0 0.0
        %1267 = vmatpush1.msra.mxu0 0.0
        %1268 = vmatprep.subr.mxu0 0.0
        %1269 = vmatpush1.msra.mxu0 0.0
        %1270 = vmatprep.mubr.f32.mxu0 0.0
        %1271 = vmatmul.mubr.f32.gmra.mrb[0].mxu0 %v807
        %v1272 = vpop.f32.mrb[0].mxu0
        %v1273 = vadd.f32 %v1023, %v1272
        %v1274 = vpop.f32.mrb[0].mxu0
        %v1275 = vadd.f32 %v1027, %v1274
        %1276 = vdwg.mxu0
        %1277 = vmatprep.subr.mxu0 %v815
        %1278 = vmatpush1.msra.mxu0 %v814
        %1279 = vmatprep.subr.mxu0 %v827
        %1280 = vmatpush1.msra.mxu0 %v826
        %1281 = vmatprep.subr.mxu0 %v839
        %1282 = vmatpush1.msra.mxu0 %v838
        %1283 = vmatprep.subr.mxu0 %v851
        %1284 = vmatpush1.msra.mxu0 %v850
        %1285 = vmatprep.subr.mxu0 %v863
        %1286 = vmatpush1.msra.mxu0 %v862
        %1287 = vmatprep.subr.mxu0 %v875
        %1288 = vmatpush1.msra.mxu0 %v874
        %1289 = vmatprep.subr.mxu0 %v887
        %1290 = vmatpush1.msra.mxu0 %v886
        %1291 = vmatprep.subr.mxu0 %v899
        %1292 = vmatpush1.msra.mxu0 %v898
        %1293 = vmatprep.subr.mxu0 %v911
        %1294 = vmatpush1.msra.mxu0 %v910
        %1295 = vmatprep.subr.mxu0 %v923
        %1296 = vmatpush1.msra.mxu0 %v922
        %1297 = vmatprep.subr.mxu0 %v935
        %1298 = vmatpush1.msra.mxu0 %v934
        %1299 = vmatprep.subr.mxu0 %v947
        %1300 = vmatpush1.msra.mxu0 %v946
        %1301 = vmatprep.subr.mxu0 %v959
        %1302 = vmatpush1.msra.mxu0 %v958
        %1303 = vmatprep.subr.mxu0 %v971
        %1304 = vmatpush1.msra.mxu0 %v970
        %1305 = vmatprep.subr.mxu0 %v983
        %1306 = vmatpush1.msra.mxu0 %v982
        %1307 = vmatprep.subr.mxu0 %v995
        %1308 = vmatpush1.msra.mxu0 %v994
        %1309 = vmatprep.subr.mxu0 0.0
        %1310 = vmatpush1.msra.mxu0 0.0
        %1311 = vmatprep.subr.mxu0 0.0
        %1312 = vmatpush1.msra.mxu0 0.0
        %1313 = vmatprep.subr.mxu0 0.0
        %1314 = vmatpush1.msra.mxu0 0.0
        %1315 = vmatprep.subr.mxu0 0.0
        %1316 = vmatpush1.msra.mxu0 0.0
        %1317 = vmatprep.subr.mxu0 0.0
        %1318 = vmatpush1.msra.mxu0 0.0
        %1319 = vmatprep.subr.mxu0 0.0
        %1320 = vmatpush1.msra.mxu0 0.0
        %1321 = vmatprep.subr.mxu0 0.0
        %1322 = vmatpush1.msra.mxu0 0.0
        %1323 = vmatprep.subr.mxu0 0.0
        %1324 = vmatpush1.msra.mxu0 0.0
        %1325 = vmatprep.subr.mxu0 0.0
        %1326 = vmatpush1.msra.mxu0 0.0
        %1327 = vmatprep.subr.mxu0 0.0
        %1328 = vmatpush1.msra.mxu0 0.0
        %1329 = vmatprep.subr.mxu0 0.0
        %1330 = vmatpush1.msra.mxu0 0.0
        %1331 = vmatprep.subr.mxu0 0.0
        %1332 = vmatpush1.msra.mxu0 0.0
        %1333 = vmatprep.subr.mxu0 0.0
        %1334 = vmatpush1.msra.mxu0 0.0
        %1335 = vmatprep.subr.mxu0 0.0
        %1336 = vmatpush1.msra.mxu0 0.0
        %1337 = vmatprep.subr.mxu0 0.0
        %1338 = vmatpush1.msra.mxu0 0.0
        %1339 = vmatprep.subr.mxu0 0.0
        %1340 = vmatpush1.msra.mxu0 0.0
        %1341 = vmatprep.mubr.f32.mxu0 0.0
        %1342 = vmatmul.mubr.f32.gmra.mrb[0].mxu0 %v807
        %v1343 = vpop.f32.mrb[0].mxu0
        %v1344 = vadd.f32 %v1031, %v1343
        %v1345 = vpop.f32.mrb[0].mxu0
        %v1346 = vadd.f32 %v1035, %v1345
        %1347 = vdwg.mxu0
        %1348 = vmatprep.subr.mxu0 %v817
        %1349 = vmatpush1.msra.mxu0 %v816
        %1350 = vmatprep.subr.mxu0 %v829
        %1351 = vmatpush1.msra.mxu0 %v828
        %1352 = vmatprep.subr.mxu0 %v841
        %1353 = vmatpush1.msra.mxu0 %v840
        %1354 = vmatprep.subr.mxu0 %v853
        %1355 = vmatpush1.msra.mxu0 %v852
        %1356 = vmatprep.subr.mxu0 %v865
        %1357 = vmatpush1.msra.mxu0 %v864
        %1358 = vmatprep.subr.mxu0 %v877
        %1359 = vmatpush1.msra.mxu0 %v876
        %1360 = vmatprep.subr.mxu0 %v889
        %1361 = vmatpush1.msra.mxu0 %v888
        %1362 = vmatprep.subr.mxu0 %v901
        %1363 = vmatpush1.msra.mxu0 %v900
        %1364 = vmatprep.subr.mxu0 %v913
        %1365 = vmatpush1.msra.mxu0 %v912
        %1366 = vmatprep.subr.mxu0 %v925
        %1367 = vmatpush1.msra.mxu0 %v924
        %1368 = vmatprep.subr.mxu0 %v937
        %1369 = vmatpush1.msra.mxu0 %v936
        %1370 = vmatprep.subr.mxu0 %v949
        %1371 = vmatpush1.msra.mxu0 %v948
        %1372 = vmatprep.subr.mxu0 %v961
        %1373 = vmatpush1.msra.mxu0 %v960
        %1374 = vmatprep.subr.mxu0 %v973
        %1375 = vmatpush1.msra.mxu0 %v972
        %1376 = vmatprep.subr.mxu0 %v985
        %1377 = vmatpush1.msra.mxu0 %v984
        %1378 = vmatprep.subr.mxu0 %v997
        %1379 = vmatpush1.msra.mxu0 %v996
        %1380 = vmatprep.subr.mxu0 0.0
        %1381 = vmatpush1.msra.mxu0 0.0
        %1382 = vmatprep.subr.mxu0 0.0
        %1383 = vmatpush1.msra.mxu0 0.0
        %1384 = vmatprep.subr.mxu0 0.0
        %1385 = vmatpush1.msra.mxu0 0.0
        %1386 = vmatprep.subr.mxu0 0.0
        %1387 = vmatpush1.msra.mxu0 0.0
        %1388 = vmatprep.subr.mxu0 0.0
        %1389 = vmatpush1.msra.mxu0 0.0
        %1390 = vmatprep.subr.mxu0 0.0
        %1391 = vmatpush1.msra.mxu0 0.0
        %1392 = vmatprep.subr.mxu0 0.0
        %1393 = vmatpush1.msra.mxu0 0.0
        %1394 = vmatprep.subr.mxu0 0.0
        %1395 = vmatpush1.msra.mxu0 0.0
        %1396 = vmatprep.subr.mxu0 0.0
        %1397 = vmatpush1.msra.mxu0 0.0
        %1398 = vmatprep.subr.mxu0 0.0
        %1399 = vmatpush1.msra.mxu0 0.0
        %1400 = vmatprep.subr.mxu0 0.0
        %1401 = vmatpush1.msra.mxu0 0.0
        %1402 = vmatprep.subr.mxu0 0.0
        %1403 = vmatpush1.msra.mxu0 0.0
        %1404 = vmatprep.subr.mxu0 0.0
        %1405 = vmatpush1.msra.mxu0 0.0
        %1406 = vmatprep.subr.mxu0 0.0
        %1407 = vmatpush1.msra.mxu0 0.0
        %1408 = vmatprep.subr.mxu0 0.0
        %1409 = vmatpush1.msra.mxu0 0.0
        %1410 = vmatprep.subr.mxu0 0.0
        %1411 = vmatpush1.msra.mxu0 0.0
        %1412 = vmatprep.mubr.f32.mxu0 0.0
        %1413 = vmatmul.mubr.f32.gmra.mrb[0].mxu0 %v807
        %v1414 = vpop.f32.mrb[0].mxu0
        %v1415 = vadd.f32 %v1039, %v1414
        %v1416 = vpop.f32.mrb[0].mxu0
        %v1417 = vadd.f32 %v1043, %v1416
        %1418 = vdwg.mxu0
        %1419 = vmatprep.subr.mxu0 %v819
        %1420 = vmatpush1.msra.mxu0 %v818
        %1421 = vmatprep.subr.mxu0 %v831
        %1422 = vmatpush1.msra.mxu0 %v830
        %1423 = vmatprep.subr.mxu0 %v843
        %1424 = vmatpush1.msra.mxu0 %v842
        %1425 = vmatprep.subr.mxu0 %v855
        %1426 = vmatpush1.msra.mxu0 %v854
        %1427 = vmatprep.subr.mxu0 %v867
        %1428 = vmatpush1.msra.mxu0 %v866
        %1429 = vmatprep.subr.mxu0 %v879
        %1430 = vmatpush1.msra.mxu0 %v878
        %1431 = vmatprep.subr.mxu0 %v891
        %1432 = vmatpush1.msra.mxu0 %v890
        %1433 = vmatprep.subr.mxu0 %v903
        %1434 = vmatpush1.msra.mxu0 %v902
        %1435 = vmatprep.subr.mxu0 %v915
        %1436 = vmatpush1.msra.mxu0 %v914
        %1437 = vmatprep.subr.mxu0 %v927
        %1438 = vmatpush1.msra.mxu0 %v926
        %1439 = vmatprep.subr.mxu0 %v939
        %1440 = vmatpush1.msra.mxu0 %v938
        %1441 = vmatprep.subr.mxu0 %v951
        %1442 = vmatpush1.msra.mxu0 %v950
        %1443 = vmatprep.subr.mxu0 %v963
        %1444 = vmatpush1.msra.mxu0 %v962
        %1445 = vmatprep.subr.mxu0 %v975
        %1446 = vmatpush1.msra.mxu0 %v974
        %1447 = vmatprep.subr.mxu0 %v987
        %1448 = vmatpush1.msra.mxu0 %v986
        %1449 = vmatprep.subr.mxu0 %v999
        %1450 = vmatpush1.msra.mxu0 %v998
        %1451 = vmatprep.subr.mxu0 0.0
        %1452 = vmatpush1.msra.mxu0 0.0
        %1453 = vmatprep.subr.mxu0 0.0
        %1454 = vmatpush1.msra.mxu0 0.0
        %1455 = vmatprep.subr.mxu0 0.0
        %1456 = vmatpush1.msra.mxu0 0.0
        %1457 = vmatprep.subr.mxu0 0.0
        %1458 = vmatpush1.msra.mxu0 0.0
        %1459 = vmatprep.subr.mxu0 0.0
        %1460 = vmatpush1.msra.mxu0 0.0
        %1461 = vmatprep.subr.mxu0 0.0
        %1462 = vmatpush1.msra.mxu0 0.0
        %1463 = vmatprep.subr.mxu0 0.0
        %1464 = vmatpush1.msra.mxu0 0.0
        %1465 = vmatprep.subr.mxu0 0.0
        %1466 = vmatpush1.msra.mxu0 0.0
        %1467 = vmatprep.subr.mxu0 0.0
        %1468 = vmatpush1.msra.mxu0 0.0
        %1469 = vmatprep.subr.mxu0 0.0
        %1470 = vmatpush1.msra.mxu0 0.0
        %1471 = vmatprep.subr.mxu0 0.0
        %1472 = vmatpush1.msra.mxu0 0.0
        %1473 = vmatprep.subr.mxu0 0.0
        %1474 = vmatpush1.msra.mxu0 0.0
        %1475 = vmatprep.subr.mxu0 0.0
        %1476 = vmatpush1.msra.mxu0 0.0
        %1477 = vmatprep.subr.mxu0 0.0
        %1478 = vmatpush1.msra.mxu0 0.0
        %1479 = vmatprep.subr.mxu0 0.0
        %1480 = vmatpush1.msra.mxu0 0.0
        %1481 = vmatprep.subr.mxu0 0.0
        %1482 = vmatpush1.msra.mxu0 0.0
        %1483 = vmatprep.mubr.f32.mxu0 0.0
        %1484 = vmatmul.mubr.f32.gmra.mrb[0].mxu0 %v807
        %v1485 = vpop.f32.mrb[0].mxu0
        %v1486 = vadd.f32 %v1047, %v1485
        %v1487 = vpop.f32.mrb[0].mxu0
        %v1488 = vadd.f32 %v1051, %v1487
        %1489 = vdwg.mxu0
        %v1490 = vmax.f32 %v1131, 0.0
        %v1491 = vmax.f32 %v1133, 0.0
        %v1492 = vmax.f32 %v1202, 0.0
        %v1493 = vmax.f32 %v1204, 0.0
        %v1494 = vmax.f32 %v1273, 0.0
        %v1495 = vmax.f32 %v1275, 0.0
        %v1496 = vmax.f32 %v1344, 0.0
        %v1497 = vmax.f32 %v1346, 0.0
        %v1498 = vmax.f32 %v1415, 0.0
        %v1499 = vmax.f32 %v1417, 0.0
        %v1500 = vmax.f32 %v1486, 0.0
        %v1501 = vmax.f32 %v1488, 0.0
        %v1502 = vld [vmem:[%s533] sm:$0xff]
        %v1503 = vld [vmem:[%s533 + $0x8] sm:$0xff]
        %v1504 = vld [vmem:[%s533 + $0x10] sm:$0xff]
        %v1505 = vld [vmem:[%s533 + $0x18] sm:$0xff]
        %v1506 = vld [vmem:[%s533 + $0x20] sm:$0xff]
        %v1507 = vld [vmem:[%s533 + $0x28] sm:$0xff]
        %v1508 = vld [vmem:[%s533 + $0x30] sm:$0xff]
        %v1509 = vld [vmem:[%s533 + $0x38] sm:$0xff]
        %v1510 = vld [vmem:[%s533 + $0x40] sm:$0xff]
        %v1511 = vld [vmem:[%s533 + $0x48] sm:$0xff]
        %v1512 = vld [vmem:[%s533 + $0x50] sm:$0xff]
        %v1513 = vld [vmem:[%s533 + $0x58] sm:$0xff]
        %v1514 = vld [vmem:[%s533 + $0x60] sm:$0xff]
        %v1515 = vld [vmem:[%s533 + $0x68] sm:$0xff]
        %v1516 = vld [vmem:[%s533 + $0x70] sm:$0xff]
        %v1517 = vld [vmem:[%s533 + $0x78] sm:$0xff]
        %v1518 = vld [vmem:[%s533 + $0x80] sm:$0xff]
        %v1519 = vld [vmem:[%s533 + $0x88] sm:$0xff]
        %v1520 = vld [vmem:[%s533 + $0x90] sm:$0xff]
        %v1521 = vld [vmem:[%s533 + $0x98] sm:$0xff]
        %v1522 = vld [vmem:[%s533 + $0xa0] sm:$0xff]
        %v1523 = vld [vmem:[%s533 + $0xa8] sm:$0xff]
        %v1524 = vld [vmem:[%s533 + $0xb0] sm:$0xff]
        %v1525 = vld [vmem:[%s533 + $0xb8] sm:$0xff]
        %v1526 = vld [vmem:[%s533 + $0xc0] sm:$0xff]
        %v1527 = vld [vmem:[%s533 + $0xc8] sm:$0xff]
        %v1528 = vld [vmem:[%s533 + $0xd0] sm:$0xff]
        %v1529 = vld [vmem:[%s533 + $0xd8] sm:$0xff]
        %v1530 = vld [vmem:[%s533 + $0xe0] sm:$0xff]
        %v1531 = vld [vmem:[%s533 + $0xe8] sm:$0xff]
        %v1532 = vld [vmem:[%s533 + $0xf0] sm:$0xff]
        %v1533 = vld [vmem:[%s533 + $0xf8] sm:$0xff]
        %v1534 = vld [vmem:[%s533 + $0x100] sm:$0xff]
        %v1535 = vld [vmem:[%s533 + $0x108] sm:$0xff]
        %v1536 = vld [vmem:[%s533 + $0x110] sm:$0xff]
        %v1537 = vld [vmem:[%s533 + $0x118] sm:$0xff]
        %v1538 = vld [vmem:[%s533 + $0x120] sm:$0xff]
        %v1539 = vld [vmem:[%s533 + $0x128] sm:$0xff]
        %v1540 = vld [vmem:[%s533 + $0x130] sm:$0xff]
        %v1541 = vld [vmem:[%s533 + $0x138] sm:$0xff]
        %v1542 = vld [vmem:[%s533 + $0x140] sm:$0xff]
        %v1543 = vld [vmem:[%s533 + $0x148] sm:$0xff]
        %v1544 = vld [vmem:[%s533 + $0x150] sm:$0xff]
        %v1545 = vld [vmem:[%s533 + $0x158] sm:$0xff]
        %v1546 = vld [vmem:[%s533 + $0x160] sm:$0xff]
        %v1547 = vld [vmem:[%s533 + $0x168] sm:$0xff]
        %v1548 = vld [vmem:[%s533 + $0x170] sm:$0xff]
        %v1549 = vld [vmem:[%s533 + $0x178] sm:$0xff]
        %v1550 = vld [vmem:[%s533 + $0x180] sm:$0xff]
        %v1551 = vld [vmem:[%s533 + $0x188] sm:$0xff]
        %v1552 = vld [vmem:[%s533 + $0x190] sm:$0xff]
        %v1553 = vld [vmem:[%s533 + $0x198] sm:$0xff]
        %v1554 = vld [vmem:[%s533 + $0x1a0] sm:$0xff]
        %v1555 = vld [vmem:[%s533 + $0x1a8] sm:$0xff]
        %v1556 = vld [vmem:[%s533 + $0x1b0] sm:$0xff]
        %v1557 = vld [vmem:[%s533 + $0x1b8] sm:$0xff]
        %v1558 = vld [vmem:[%s533 + $0x1c0] sm:$0xff]
        %v1559 = vld [vmem:[%s533 + $0x1c8] sm:$0xff]
        %v1560 = vld [vmem:[%s533 + $0x1d0] sm:$0xff]
        %v1561 = vld [vmem:[%s533 + $0x1d8] sm:$0xff]
        %v1562 = vld [vmem:[%s533 + $0x1e0] sm:$0xff]
        %v1563 = vld [vmem:[%s533 + $0x1e8] sm:$0xff]
        %v1564 = vld [vmem:[%s533 + $0x1f0] sm:$0xff]
        %v1565 = vld [vmem:[%s533 + $0x1f8] sm:$0xff]
        %v1566 = vld [vmem:[%s533 + $0x200] sm:$0xff]
        %v1567 = vld [vmem:[%s533 + $0x208] sm:$0xff]
        %v1568 = vld [vmem:[%s533 + $0x210] sm:$0xff]
        %v1569 = vld [vmem:[%s533 + $0x218] sm:$0xff]
        %v1570 = vld [vmem:[%s533 + $0x220] sm:$0xff]
        %v1571 = vld [vmem:[%s533 + $0x228] sm:$0xff]
        %v1572 = vld [vmem:[%s533 + $0x230] sm:$0xff]
        %v1573 = vld [vmem:[%s533 + $0x238] sm:$0xff]
        %v1574 = vld [vmem:[%s533 + $0x240] sm:$0xff]
        %v1575 = vld [vmem:[%s533 + $0x248] sm:$0xff]
        %v1576 = vld [vmem:[%s533 + $0x250] sm:$0xff]
        %v1577 = vld [vmem:[%s533 + $0x258] sm:$0xff]
        %v1578 = vld [vmem:[%s533 + $0x260] sm:$0xff]
        %v1579 = vld [vmem:[%s533 + $0x268] sm:$0xff]
        %v1580 = vld [vmem:[%s533 + $0x270] sm:$0xff]
        %v1581 = vld [vmem:[%s533 + $0x278] sm:$0xff]
        %v1582 = vld [vmem:[%s533 + $0x280] sm:$0xff]
        %v1583 = vld [vmem:[%s533 + $0x288] sm:$0xff]
        %v1584 = vld [vmem:[%s533 + $0x290] sm:$0xff]
        %v1585 = vld [vmem:[%s533 + $0x298] sm:$0xff]
        %v1586 = vld [vmem:[%s533 + $0x2a0] sm:$0xff]
        %v1587 = vld [vmem:[%s533 + $0x2a8] sm:$0xff]
        %v1588 = vld [vmem:[%s533 + $0x2b0] sm:$0xff]
        %v1589 = vld [vmem:[%s533 + $0x2b8] sm:$0xff]
        %v1590 = vld [vmem:[%s533 + $0x2c0] sm:$0xff]
        %v1591 = vld [vmem:[%s533 + $0x2c8] sm:$0xff]
        %v1592 = vld [vmem:[%s533 + $0x2d0] sm:$0xff]
        %v1593 = vld [vmem:[%s533 + $0x2d8] sm:$0xff]
        %v1594 = vld [vmem:[%s533 + $0x2e0] sm:$0xff]
        %v1595 = vld [vmem:[%s533 + $0x2e8] sm:$0xff]
        %v1596 = vld [vmem:[%s533 + $0x2f0] sm:$0xff]
        %v1597 = vld [vmem:[%s533 + $0x2f8] sm:$0xff]
        %v1598 = vld [vmem:[%s533 + $0x300] sm:$0xff]
        %v1599 = vld [vmem:[%s533 + $0x308] sm:$0xff]
        %v1600 = vld [vmem:[%s533 + $0x310] sm:$0xff]
        %v1601 = vld [vmem:[%s533 + $0x318] sm:$0xff]
        %v1602 = vld [vmem:[%s533 + $0x320] sm:$0xff]
        %v1603 = vld [vmem:[%s533 + $0x328] sm:$0xff]
        %v1604 = vld [vmem:[%s533 + $0x330] sm:$0xff]
        %v1605 = vld [vmem:[%s533 + $0x338] sm:$0xff]
        %v1606 = vld [vmem:[%s533 + $0x340] sm:$0xff]
        %v1607 = vld [vmem:[%s533 + $0x348] sm:$0xff]
        %v1608 = vld [vmem:[%s533 + $0x350] sm:$0xff]
        %v1609 = vld [vmem:[%s533 + $0x358] sm:$0xff]
        %v1610 = vld [vmem:[%s533 + $0x360] sm:$0xff]
        %v1611 = vld [vmem:[%s533 + $0x368] sm:$0xff]
        %v1612 = vld [vmem:[%s533 + $0x370] sm:$0xff]
        %v1613 = vld [vmem:[%s533 + $0x378] sm:$0xff]
        %v1614 = vld [vmem:[%s533 + $0x380] sm:$0xff]
        %v1615 = vld [vmem:[%s533 + $0x388] sm:$0xff]
        %v1616 = vld [vmem:[%s533 + $0x390] sm:$0xff]
        %v1617 = vld [vmem:[%s533 + $0x398] sm:$0xff]
        %v1618 = vld [vmem:[%s533 + $0x3a0] sm:$0xff]
        %v1619 = vld [vmem:[%s533 + $0x3a8] sm:$0xff]
        %v1620 = vld [vmem:[%s533 + $0x3b0] sm:$0xff]
        %v1621 = vld [vmem:[%s533 + $0x3b8] sm:$0xff]
        %v1622 = vld [vmem:[%s533 + $0x3c0] sm:$0xff]
        %v1623 = vld [vmem:[%s533 + $0x3c8] sm:$0xff]
        %v1624 = vld [vmem:[%s533 + $0x3d0] sm:$0xff]
        %v1625 = vld [vmem:[%s533 + $0x3d8] sm:$0xff]
        %v1626 = vld [vmem:[%s533 + $0x3e0] sm:$0xff]
        %v1627 = vld [vmem:[%s533 + $0x3e8] sm:$0xff]
        %v1628 = vld [vmem:[%s533 + $0x3f0] sm:$0xff]
        %v1629 = vld [vmem:[%s533 + $0x3f8] sm:$0xff]
        %v1630 = vld [vmem:[%s533 + $0x400] sm:$0xff]
        %v1631 = vld [vmem:[%s533 + $0x408] sm:$0xff]
        %v1632 = vld [vmem:[%s533 + $0x410] sm:$0xff]
        %v1633 = vld [vmem:[%s533 + $0x418] sm:$0xff]
        %v1634 = vld [vmem:[%s533 + $0x420] sm:$0xff]
        %v1635 = vld [vmem:[%s533 + $0x428] sm:$0xff]
        %v1636 = vld [vmem:[%s533 + $0x430] sm:$0xff]
        %v1637 = vld [vmem:[%s533 + $0x438] sm:$0xff]
        %v1638 = vld [vmem:[%s533 + $0x440] sm:$0xff]
        %v1639 = vld [vmem:[%s533 + $0x448] sm:$0xff]
        %v1640 = vld [vmem:[%s533 + $0x450] sm:$0xff]
        %v1641 = vld [vmem:[%s533 + $0x458] sm:$0xff]
        %v1642 = vld [vmem:[%s533 + $0x460] sm:$0xff]
        %v1643 = vld [vmem:[%s533 + $0x468] sm:$0xff]
        %v1644 = vld [vmem:[%s533 + $0x470] sm:$0xff]
        %v1645 = vld [vmem:[%s533 + $0x478] sm:$0xff]
        %v1646 = vld [vmem:[%s533 + $0x480] sm:$0xff]
        %v1647 = vld [vmem:[%s533 + $0x488] sm:$0xff]
        %v1648 = vld [vmem:[%s533 + $0x490] sm:$0xff]
        %v1649 = vld [vmem:[%s533 + $0x498] sm:$0xff]
        %v1650 = vld [vmem:[%s533 + $0x4a0] sm:$0xff]
        %v1651 = vld [vmem:[%s533 + $0x4a8] sm:$0xff]
        %v1652 = vld [vmem:[%s533 + $0x4b0] sm:$0xff]
        %v1653 = vld [vmem:[%s533 + $0x4b8] sm:$0xff]
        %v1654 = vld [vmem:[%s533 + $0x4c0] sm:$0xff]
        %v1655 = vld [vmem:[%s533 + $0x4c8] sm:$0xff]
        %v1656 = vld [vmem:[%s533 + $0x4d0] sm:$0xff]
        %v1657 = vld [vmem:[%s533 + $0x4d8] sm:$0xff]
        %v1658 = vld [vmem:[%s533 + $0x4e0] sm:$0xff]
        %v1659 = vld [vmem:[%s533 + $0x4e8] sm:$0xff]
        %v1660 = vld [vmem:[%s533 + $0x4f0] sm:$0xff]
        %v1661 = vld [vmem:[%s533 + $0x4f8] sm:$0xff]
        %v1662 = vld [vmem:[%s533 + $0x500] sm:$0xff]
        %v1663 = vld [vmem:[%s533 + $0x508] sm:$0xff]
        %v1664 = vld [vmem:[%s533 + $0x510] sm:$0xff]
        %v1665 = vld [vmem:[%s533 + $0x518] sm:$0xff]
        %v1666 = vld [vmem:[%s533 + $0x520] sm:$0xff]
        %v1667 = vld [vmem:[%s533 + $0x528] sm:$0xff]
        %v1668 = vld [vmem:[%s533 + $0x530] sm:$0xff]
        %v1669 = vld [vmem:[%s533 + $0x538] sm:$0xff]
        %v1670 = vld [vmem:[%s533 + $0x540] sm:$0xff]
        %v1671 = vld [vmem:[%s533 + $0x548] sm:$0xff]
        %v1672 = vld [vmem:[%s533 + $0x550] sm:$0xff]
        %v1673 = vld [vmem:[%s533 + $0x558] sm:$0xff]
        %v1674 = vld [vmem:[%s533 + $0x560] sm:$0xff]
        %v1675 = vld [vmem:[%s533 + $0x568] sm:$0xff]
        %v1676 = vld [vmem:[%s533 + $0x570] sm:$0xff]
        %v1677 = vld [vmem:[%s533 + $0x578] sm:$0xff]
        %v1678 = vld [vmem:[%s533 + $0x580] sm:$0xff]
        %v1679 = vld [vmem:[%s533 + $0x588] sm:$0xff]
        %v1680 = vld [vmem:[%s533 + $0x590] sm:$0xff]
        %v1681 = vld [vmem:[%s533 + $0x598] sm:$0xff]
        %v1682 = vld [vmem:[%s533 + $0x5a0] sm:$0xff]
        %v1683 = vld [vmem:[%s533 + $0x5a8] sm:$0xff]
        %v1684 = vld [vmem:[%s533 + $0x5b0] sm:$0xff]
        %v1685 = vld [vmem:[%s533 + $0x5b8] sm:$0xff]
        %v1686 = vld [vmem:[%s533 + $0x5c0] sm:$0xff]
        %v1687 = vld [vmem:[%s533 + $0x5c8] sm:$0xff]
        %v1688 = vld [vmem:[%s533 + $0x5d0] sm:$0xff]
        %v1689 = vld [vmem:[%s533 + $0x5d8] sm:$0xff]
        %v1690 = vld [vmem:[%s533 + $0x5e0] sm:$0xff]
        %v1691 = vld [vmem:[%s533 + $0x5e8] sm:$0xff]
        %v1692 = vld [vmem:[%s533 + $0x5f0] sm:$0xff]
        %v1693 = vld [vmem:[%s533 + $0x5f8] sm:$0xff]
        %v1694 = vld [vmem:[%s541] sm:$0x1]
        %v1696 = vlaneseq
        %v1697 = vshrl.u32 %v1696, 7
        %v1698 = vsub.s32 0, %v1697
        %v1699 = vrot.slane %v1694, %v1698
        %1701 = vmatprep.subr.mxu0 0.0
        %1702 = vmatpush1.msra.mxu0 %v1502
        %1703 = vmatprep.subr.mxu0 0.0
        %1704 = vmatpush1.msra.mxu0 %v1503
        %1705 = vmatprep.subr.mxu0 0.0
        %1706 = vmatpush1.msra.mxu0 %v1504
        %1707 = vmatprep.subr.mxu0 0.0
        %1708 = vmatpush1.msra.mxu0 %v1505
        %1709 = vmatprep.subr.mxu0 0.0
        %1710 = vmatpush1.msra.mxu0 %v1506
        %1711 = vmatprep.subr.mxu0 0.0
        %1712 = vmatpush1.msra.mxu0 %v1507
        %1713 = vmatprep.subr.mxu0 0.0
        %1714 = vmatpush1.msra.mxu0 %v1508
        %1715 = vmatprep.subr.mxu0 0.0
        %1716 = vmatpush1.msra.mxu0 %v1509
        %1717 = vmatprep.subr.mxu0 0.0
        %1718 = vmatpush1.msra.mxu0 %v1510
        %1719 = vmatprep.subr.mxu0 0.0
        %1720 = vmatpush1.msra.mxu0 %v1511
        %1721 = vmatprep.subr.mxu0 0.0
        %1722 = vmatpush1.msra.mxu0 %v1512
        %1723 = vmatprep.subr.mxu0 0.0
        %1724 = vmatpush1.msra.mxu0 %v1513
        %1725 = vmatprep.subr.mxu0 0.0
        %1726 = vmatpush1.msra.mxu0 %v1514
        %1727 = vmatprep.subr.mxu0 0.0
        %1728 = vmatpush1.msra.mxu0 %v1515
        %1729 = vmatprep.subr.mxu0 0.0
        %1730 = vmatpush1.msra.mxu0 %v1516
        %1731 = vmatprep.subr.mxu0 0.0
        %1732 = vmatpush1.msra.mxu0 %v1517
        %1733 = vmatprep.subr.mxu0 0.0
        %1734 = vmatpush1.msra.mxu0 %v1518
        %1735 = vmatprep.subr.mxu0 0.0
        %1736 = vmatpush1.msra.mxu0 %v1519
        %1737 = vmatprep.subr.mxu0 0.0
        %1738 = vmatpush1.msra.mxu0 %v1520
        %1739 = vmatprep.subr.mxu0 0.0
        %1740 = vmatpush1.msra.mxu0 %v1521
        %1741 = vmatprep.subr.mxu0 0.0
        %1742 = vmatpush1.msra.mxu0 %v1522
        %1743 = vmatprep.subr.mxu0 0.0
        %1744 = vmatpush1.msra.mxu0 %v1523
        %1745 = vmatprep.subr.mxu0 0.0
        %1746 = vmatpush1.msra.mxu0 %v1524
        %1747 = vmatprep.subr.mxu0 0.0
        %1748 = vmatpush1.msra.mxu0 %v1525
        %1749 = vmatprep.subr.mxu0 0.0
        %1750 = vmatpush1.msra.mxu0 %v1526
        %1751 = vmatprep.subr.mxu0 0.0
        %1752 = vmatpush1.msra.mxu0 %v1527
        %1753 = vmatprep.subr.mxu0 0.0
        %1754 = vmatpush1.msra.mxu0 %v1528
        %1755 = vmatprep.subr.mxu0 0.0
        %1756 = vmatpush1.msra.mxu0 %v1529
        %1757 = vmatprep.subr.mxu0 0.0
        %1758 = vmatpush1.msra.mxu0 %v1530
        %1759 = vmatprep.subr.mxu0 0.0
        %1760 = vmatpush1.msra.mxu0 %v1531
        %1761 = vmatprep.subr.mxu0 0.0
        %1762 = vmatpush1.msra.mxu0 %v1532
        %1763 = vmatprep.subr.mxu0 0.0
        %1764 = vmatpush1.msra.mxu0 %v1533
        %1765 = vmatprep.mubr.f32.mxu0 %v1491
        %1766 = vmatmul.mubr.f32.gmra.mrb[0].mxu0 %v1490
        %v1767 = vpop.f32.mrb[0].mxu0
        %v1768 = vadd.f32 %v1699, %v1767
        %v1769 = vpop.f32.mrb[0].mxu0
        %1770 = vdwg.mxu0
        %1771 = vmatprep.subr.mxu0 0.0
        %1772 = vmatpush1.msra.mxu0 %v1534
        %1773 = vmatprep.subr.mxu0 0.0
        %1774 = vmatpush1.msra.mxu0 %v1535
        %1775 = vmatprep.subr.mxu0 0.0
        %1776 = vmatpush1.msra.mxu0 %v1536
        %1777 = vmatprep.subr.mxu0 0.0
        %1778 = vmatpush1.msra.mxu0 %v1537
        %1779 = vmatprep.subr.mxu0 0.0
        %1780 = vmatpush1.msra.mxu0 %v1538
        %1781 = vmatprep.subr.mxu0 0.0
        %1782 = vmatpush1.msra.mxu0 %v1539
        %1783 = vmatprep.subr.mxu0 0.0
        %1784 = vmatpush1.msra.mxu0 %v1540
        %1785 = vmatprep.subr.mxu0 0.0
        %1786 = vmatpush1.msra.mxu0 %v1541
        %1787 = vmatprep.subr.mxu0 0.0
        %1788 = vmatpush1.msra.mxu0 %v1542
        %1789 = vmatprep.subr.mxu0 0.0
        %1790 = vmatpush1.msra.mxu0 %v1543
        %1791 = vmatprep.subr.mxu0 0.0
        %1792 = vmatpush1.msra.mxu0 %v1544
        %1793 = vmatprep.subr.mxu0 0.0
        %1794 = vmatpush1.msra.mxu0 %v1545
        %1795 = vmatprep.subr.mxu0 0.0
        %1796 = vmatpush1.msra.mxu0 %v1546
        %1797 = vmatprep.subr.mxu0 0.0
        %1798 = vmatpush1.msra.mxu0 %v1547
        %1799 = vmatprep.subr.mxu0 0.0
        %1800 = vmatpush1.msra.mxu0 %v1548
        %1801 = vmatprep.subr.mxu0 0.0
        %1802 = vmatpush1.msra.mxu0 %v1549
        %1803 = vmatprep.subr.mxu0 0.0
        %1804 = vmatpush1.msra.mxu0 %v1550
        %1805 = vmatprep.subr.mxu0 0.0
        %1806 = vmatpush1.msra.mxu0 %v1551
        %1807 = vmatprep.subr.mxu0 0.0
        %1808 = vmatpush1.msra.mxu0 %v1552
        %1809 = vmatprep.subr.mxu0 0.0
        %1810 = vmatpush1.msra.mxu0 %v1553
        %1811 = vmatprep.subr.mxu0 0.0
        %1812 = vmatpush1.msra.mxu0 %v1554
        %1813 = vmatprep.subr.mxu0 0.0
        %1814 = vmatpush1.msra.mxu0 %v1555
        %1815 = vmatprep.subr.mxu0 0.0
        %1816 = vmatpush1.msra.mxu0 %v1556
        %1817 = vmatprep.subr.mxu0 0.0
        %1818 = vmatpush1.msra.mxu0 %v1557
        %1819 = vmatprep.subr.mxu0 0.0
        %1820 = vmatpush1.msra.mxu0 %v1558
        %1821 = vmatprep.subr.mxu0 0.0
        %1822 = vmatpush1.msra.mxu0 %v1559
        %1823 = vmatprep.subr.mxu0 0.0
        %1824 = vmatpush1.msra.mxu0 %v1560
        %1825 = vmatprep.subr.mxu0 0.0
        %1826 = vmatpush1.msra.mxu0 %v1561
        %1827 = vmatprep.subr.mxu0 0.0
        %1828 = vmatpush1.msra.mxu0 %v1562
        %1829 = vmatprep.subr.mxu0 0.0
        %1830 = vmatpush1.msra.mxu0 %v1563
        %1831 = vmatprep.subr.mxu0 0.0
        %1832 = vmatpush1.msra.mxu0 %v1564
        %1833 = vmatprep.subr.mxu0 0.0
        %1834 = vmatpush1.msra.mxu0 %v1565
        %1835 = vmatprep.mubr.f32.mxu0 %v1493
        %1836 = vmatmul.mubr.f32.gmra.mrb[0].mxu0 %v1492
        %v1837 = vpop.f32.mrb[0].mxu0
        %v1838 = vadd.f32 %v1768, %v1837
        %v1839 = vpop.f32.mrb[0].mxu0
        %1840 = vdwg.mxu0
        %1841 = vmatprep.subr.mxu0 0.0
        %1842 = vmatpush1.msra.mxu0 %v1566
        %1843 = vmatprep.subr.mxu0 0.0
        %1844 = vmatpush1.msra.mxu0 %v1567
        %1845 = vmatprep.subr.mxu0 0.0
        %1846 = vmatpush1.msra.mxu0 %v1568
        %1847 = vmatprep.subr.mxu0 0.0
        %1848 = vmatpush1.msra.mxu0 %v1569
        %1849 = vmatprep.subr.mxu0 0.0
        %1850 = vmatpush1.msra.mxu0 %v1570
        %1851 = vmatprep.subr.mxu0 0.0
        %1852 = vmatpush1.msra.mxu0 %v1571
        %1853 = vmatprep.subr.mxu0 0.0
        %1854 = vmatpush1.msra.mxu0 %v1572
        %1855 = vmatprep.subr.mxu0 0.0
        %1856 = vmatpush1.msra.mxu0 %v1573
        %1857 = vmatprep.subr.mxu0 0.0
        %1858 = vmatpush1.msra.mxu0 %v1574
        %1859 = vmatprep.subr.mxu0 0.0
        %1860 = vmatpush1.msra.mxu0 %v1575
        %1861 = vmatprep.subr.mxu0 0.0
        %1862 = vmatpush1.msra.mxu0 %v1576
        %1863 = vmatprep.subr.mxu0 0.0
        %1864 = vmatpush1.msra.mxu0 %v1577
        %1865 = vmatprep.subr.mxu0 0.0
        %1866 = vmatpush1.msra.mxu0 %v1578
        %1867 = vmatprep.subr.mxu0 0.0
        %1868 = vmatpush1.msra.mxu0 %v1579
        %1869 = vmatprep.subr.mxu0 0.0
        %1870 = vmatpush1.msra.mxu0 %v1580
        %1871 = vmatprep.subr.mxu0 0.0
        %1872 = vmatpush1.msra.mxu0 %v1581
        %1873 = vmatprep.subr.mxu0 0.0
        %1874 = vmatpush1.msra.mxu0 %v1582
        %1875 = vmatprep.subr.mxu0 0.0
        %1876 = vmatpush1.msra.mxu0 %v1583
        %1877 = vmatprep.subr.mxu0 0.0
        %1878 = vmatpush1.msra.mxu0 %v1584
        %1879 = vmatprep.subr.mxu0 0.0
        %1880 = vmatpush1.msra.mxu0 %v1585
        %1881 = vmatprep.subr.mxu0 0.0
        %1882 = vmatpush1.msra.mxu0 %v1586
        %1883 = vmatprep.subr.mxu0 0.0
        %1884 = vmatpush1.msra.mxu0 %v1587
        %1885 = vmatprep.subr.mxu0 0.0
        %1886 = vmatpush1.msra.mxu0 %v1588
        %1887 = vmatprep.subr.mxu0 0.0
        %1888 = vmatpush1.msra.mxu0 %v1589
        %1889 = vmatprep.subr.mxu0 0.0
        %1890 = vmatpush1.msra.mxu0 %v1590
        %1891 = vmatprep.subr.mxu0 0.0
        %1892 = vmatpush1.msra.mxu0 %v1591
        %1893 = vmatprep.subr.mxu0 0.0
        %1894 = vmatpush1.msra.mxu0 %v1592
        %1895 = vmatprep.subr.mxu0 0.0
        %1896 = vmatpush1.msra.mxu0 %v1593
        %1897 = vmatprep.subr.mxu0 0.0
        %1898 = vmatpush1.msra.mxu0 %v1594
        %1899 = vmatprep.subr.mxu0 0.0
        %1900 = vmatpush1.msra.mxu0 %v1595
        %1901 = vmatprep.subr.mxu0 0.0
        %1902 = vmatpush1.msra.mxu0 %v1596
        %1903 = vmatprep.subr.mxu0 0.0
        %1904 = vmatpush1.msra.mxu0 %v1597
        %1905 = vmatprep.mubr.f32.mxu0 %v1495
        %1906 = vmatmul.mubr.f32.gmra.mrb[0].mxu0 %v1494
        %v1907 = vpop.f32.mrb[0].mxu0
        %v1908 = vadd.f32 %v1838, %v1907
        %v1909 = vpop.f32.mrb[0].mxu0
        %1910 = vdwg.mxu0
        %1911 = vmatprep.subr.mxu0 0.0
        %1912 = vmatpush1.msra.mxu0 %v1598
        %1913 = vmatprep.subr.mxu0 0.0
        %1914 = vmatpush1.msra.mxu0 %v1599
        %1915 = vmatprep.subr.mxu0 0.0
        %1916 = vmatpush1.msra.mxu0 %v1600
        %1917 = vmatprep.subr.mxu0 0.0
        %1918 = vmatpush1.msra.mxu0 %v1601
        %1919 = vmatprep.subr.mxu0 0.0
        %1920 = vmatpush1.msra.mxu0 %v1602
        %1921 = vmatprep.subr.mxu0 0.0
        %1922 = vmatpush1.msra.mxu0 %v1603
        %1923 = vmatprep.subr.mxu0 0.0
        %1924 = vmatpush1.msra.mxu0 %v1604
        %1925 = vmatprep.subr.mxu0 0.0
        %1926 = vmatpush1.msra.mxu0 %v1605
        %1927 = vmatprep.subr.mxu0 0.0
        %1928 = vmatpush1.msra.mxu0 %v1606
        %1929 = vmatprep.subr.mxu0 0.0
        %1930 = vmatpush1.msra.mxu0 %v1607
        %1931 = vmatprep.subr.mxu0 0.0
        %1932 = vmatpush1.msra.mxu0 %v1608
        %1933 = vmatprep.subr.mxu0 0.0
        %1934 = vmatpush1.msra.mxu0 %v1609
        %1935 = vmatprep.subr.mxu0 0.0
        %1936 = vmatpush1.msra.mxu0 %v1610
        %1937 = vmatprep.subr.mxu0 0.0
        %1938 = vmatpush1.msra.mxu0 %v1611
        %1939 = vmatprep.subr.mxu0 0.0
        %1940 = vmatpush1.msra.mxu0 %v1612
        %1941 = vmatprep.subr.mxu0 0.0
        %1942 = vmatpush1.msra.mxu0 %v1613
        %1943 = vmatprep.subr.mxu0 0.0
        %1944 = vmatpush1.msra.mxu0 %v1614
        %1945 = vmatprep.subr.mxu0 0.0
        %1946 = vmatpush1.msra.mxu0 %v1615
        %1947 = vmatprep.subr.mxu0 0.0
        %1948 = vmatpush1.msra.mxu0 %v1616
        %1949 = vmatprep.subr.mxu0 0.0
        %1950 = vmatpush1.msra.mxu0 %v1617
        %1951 = vmatprep.subr.mxu0 0.0
        %1952 = vmatpush1.msra.mxu0 %v1618
        %1953 = vmatprep.subr.mxu0 0.0
        %1954 = vmatpush1.msra.mxu0 %v1619
        %1955 = vmatprep.subr.mxu0 0.0
        %1956 = vmatpush1.msra.mxu0 %v1620
        %1957 = vmatprep.subr.mxu0 0.0
        %1958 = vmatpush1.msra.mxu0 %v1621
        %1959 = vmatprep.subr.mxu0 0.0
        %1960 = vmatpush1.msra.mxu0 %v1622
        %1961 = vmatprep.subr.mxu0 0.0
        %1962 = vmatpush1.msra.mxu0 %v1623
        %1963 = vmatprep.subr.mxu0 0.0
        %1964 = vmatpush1.msra.mxu0 %v1624
        %1965 = vmatprep.subr.mxu0 0.0
        %1966 = vmatpush1.msra.mxu0 %v1625
        %1967 = vmatprep.subr.mxu0 0.0
        %1968 = vmatpush1.msra.mxu0 %v1626
        %1969 = vmatprep.subr.mxu0 0.0
        %1970 = vmatpush1.msra.mxu0 %v1627
        %1971 = vmatprep.subr.mxu0 0.0
        %1972 = vmatpush1.msra.mxu0 %v1628
        %1973 = vmatprep.subr.mxu0 0.0
        %1974 = vmatpush1.msra.mxu0 %v1629
        %1975 = vmatprep.mubr.f32.mxu0 %v1497
        %1976 = vmatmul.mubr.f32.gmra.mrb[0].mxu0 %v1496
        %v1977 = vpop.f32.mrb[0].mxu0
        %v1978 = vadd.f32 %v1908, %v1977
        %v1979 = vpop.f32.mrb[0].mxu0
        %1980 = vdwg.mxu0
        %1981 = vmatprep.subr.mxu0 0.0
        %1982 = vmatpush1.msra.mxu0 %v1630
        %1983 = vmatprep.subr.mxu0 0.0
        %1984 = vmatpush1.msra.mxu0 %v1631
        %1985 = vmatprep.subr.mxu0 0.0
        %1986 = vmatpush1.msra.mxu0 %v1632
        %1987 = vmatprep.subr.mxu0 0.0
        %1988 = vmatpush1.msra.mxu0 %v1633
        %1989 = vmatprep.subr.mxu0 0.0
        %1990 = vmatpush1.msra.mxu0 %v1634
        %1991 = vmatprep.subr.mxu0 0.0
        %1992 = vmatpush1.msra.mxu0 %v1635
        %1993 = vmatprep.subr.mxu0 0.0
        %1994 = vmatpush1.msra.mxu0 %v1636
        %1995 = vmatprep.subr.mxu0 0.0
        %1996 = vmatpush1.msra.mxu0 %v1637
        %1997 = vmatprep.subr.mxu0 0.0
        %1998 = vmatpush1.msra.mxu0 %v1638
        %1999 = vmatprep.subr.mxu0 0.0
        %2000 = vmatpush1.msra.mxu0 %v1639
        %2001 = vmatprep.subr.mxu0 0.0
        %2002 = vmatpush1.msra.mxu0 %v1640
        %2003 = vmatprep.subr.mxu0 0.0
        %2004 = vmatpush1.msra.mxu0 %v1641
        %2005 = vmatprep.subr.mxu0 0.0
        %2006 = vmatpush1.msra.mxu0 %v1642
        %2007 = vmatprep.subr.mxu0 0.0
        %2008 = vmatpush1.msra.mxu0 %v1643
        %2009 = vmatprep.subr.mxu0 0.0
        %2010 = vmatpush1.msra.mxu0 %v1644
        %2011 = vmatprep.subr.mxu0 0.0
        %2012 = vmatpush1.msra.mxu0 %v1645
        %2013 = vmatprep.subr.mxu0 0.0
        %2014 = vmatpush1.msra.mxu0 %v1646
        %2015 = vmatprep.subr.mxu0 0.0
        %2016 = vmatpush1.msra.mxu0 %v1647
        %2017 = vmatprep.subr.mxu0 0.0
        %2018 = vmatpush1.msra.mxu0 %v1648
        %2019 = vmatprep.subr.mxu0 0.0
        %2020 = vmatpush1.msra.mxu0 %v1649
        %2021 = vmatprep.subr.mxu0 0.0
        %2022 = vmatpush1.msra.mxu0 %v1650
        %2023 = vmatprep.subr.mxu0 0.0
        %2024 = vmatpush1.msra.mxu0 %v1651
        %2025 = vmatprep.subr.mxu0 0.0
        %2026 = vmatpush1.msra.mxu0 %v1652
        %2027 = vmatprep.subr.mxu0 0.0
        %2028 = vmatpush1.msra.mxu0 %v1653
        %2029 = vmatprep.subr.mxu0 0.0
        %2030 = vmatpush1.msra.mxu0 %v1654
        %2031 = vmatprep.subr.mxu0 0.0
        %2032 = vmatpush1.msra.mxu0 %v1655
        %2033 = vmatprep.subr.mxu0 0.0
        %2034 = vmatpush1.msra.mxu0 %v1656
        %2035 = vmatprep.subr.mxu0 0.0
        %2036 = vmatpush1.msra.mxu0 %v1657
        %2037 = vmatprep.subr.mxu0 0.0
        %2038 = vmatpush1.msra.mxu0 %v1658
        %2039 = vmatprep.subr.mxu0 0.0
        %2040 = vmatpush1.msra.mxu0 %v1659
        %2041 = vmatprep.subr.mxu0 0.0
        %2042 = vmatpush1.msra.mxu0 %v1660
        %2043 = vmatprep.subr.mxu0 0.0
        %2044 = vmatpush1.msra.mxu0 %v1661
        %2045 = vmatprep.mubr.f32.mxu0 %v1499
        %2046 = vmatmul.mubr.f32.gmra.mrb[0].mxu0 %v1498
        %v2047 = vpop.f32.mrb[0].mxu0
        %v2048 = vadd.f32 %v1978, %v2047
        %v2049 = vpop.f32.mrb[0].mxu0
        %2050 = vdwg.mxu0
        %2051 = vmatprep.subr.mxu0 0.0
        %2052 = vmatpush1.msra.mxu0 %v1662
        %2053 = vmatprep.subr.mxu0 0.0
        %2054 = vmatpush1.msra.mxu0 %v1663
        %2055 = vmatprep.subr.mxu0 0.0
        %2056 = vmatpush1.msra.mxu0 %v1664
        %2057 = vmatprep.subr.mxu0 0.0
        %2058 = vmatpush1.msra.mxu0 %v1665
        %2059 = vmatprep.subr.mxu0 0.0
        %2060 = vmatpush1.msra.mxu0 %v1666
        %2061 = vmatprep.subr.mxu0 0.0
        %2062 = vmatpush1.msra.mxu0 %v1667
        %2063 = vmatprep.subr.mxu0 0.0
        %2064 = vmatpush1.msra.mxu0 %v1668
        %2065 = vmatprep.subr.mxu0 0.0
        %2066 = vmatpush1.msra.mxu0 %v1669
        %2067 = vmatprep.subr.mxu0 0.0
        %2068 = vmatpush1.msra.mxu0 %v1670
        %2069 = vmatprep.subr.mxu0 0.0
        %2070 = vmatpush1.msra.mxu0 %v1671
        %2071 = vmatprep.subr.mxu0 0.0
        %2072 = vmatpush1.msra.mxu0 %v1672
        %2073 = vmatprep.subr.mxu0 0.0
        %2074 = vmatpush1.msra.mxu0 %v1673
        %2075 = vmatprep.subr.mxu0 0.0
        %2076 = vmatpush1.msra.mxu0 %v1674
        %2077 = vmatprep.subr.mxu0 0.0
        %2078 = vmatpush1.msra.mxu0 %v1675
        %2079 = vmatprep.subr.mxu0 0.0
        %2080 = vmatpush1.msra.mxu0 %v1676
        %2081 = vmatprep.subr.mxu0 0.0
        %2082 = vmatpush1.msra.mxu0 %v1677
        %2083 = vmatprep.subr.mxu0 0.0
        %2084 = vmatpush1.msra.mxu0 %v1678
        %2085 = vmatprep.subr.mxu0 0.0
        %2086 = vmatpush1.msra.mxu0 %v1679
        %2087 = vmatprep.subr.mxu0 0.0
        %2088 = vmatpush1.msra.mxu0 %v1680
        %2089 = vmatprep.subr.mxu0 0.0
        %2090 = vmatpush1.msra.mxu0 %v1681
        %2091 = vmatprep.subr.mxu0 0.0
        %2092 = vmatpush1.msra.mxu0 %v1682
        %2093 = vmatprep.subr.mxu0 0.0
        %2094 = vmatpush1.msra.mxu0 %v1683
        %2095 = vmatprep.subr.mxu0 0.0
        %2096 = vmatpush1.msra.mxu0 %v1684
        %2097 = vmatprep.subr.mxu0 0.0
        %2098 = vmatpush1.msra.mxu0 %v1685
        %2099 = vmatprep.subr.mxu0 0.0
        %2100 = vmatpush1.msra.mxu0 %v1686
        %2101 = vmatprep.subr.mxu0 0.0
        %2102 = vmatpush1.msra.mxu0 %v1687
        %2103 = vmatprep.subr.mxu0 0.0
        %2104 = vmatpush1.msra.mxu0 %v1688
        %2105 = vmatprep.subr.mxu0 0.0
        %2106 = vmatpush1.msra.mxu0 %v1689
        %2107 = vmatprep.subr.mxu0 0.0
        %2108 = vmatpush1.msra.mxu0 %v1690
        %2109 = vmatprep.subr.mxu0 0.0
        %2110 = vmatpush1.msra.mxu0 %v1691
        %2111 = vmatprep.subr.mxu0 0.0
        %2112 = vmatpush1.msra.mxu0 %v1692
        %2113 = vmatprep.subr.mxu0 0.0
        %2114 = vmatpush1.msra.mxu0 %v1693
        %2115 = vmatprep.mubr.f32.mxu0 %v1501
        %2116 = vmatmul.mubr.f32.gmra.mrb[0].mxu0 %v1500
        %v2117 = vpop.f32.mrb[0].mxu0
        %v2118 = vadd.f32 %v2048, %v2117
        %v2119 = vpop.f32.mrb[0].mxu0
        %2120 = vdwg.mxu0
        %2121 = vst [vmem:[%s618] sm:$0xff] %v2118
        %p2122 = scmp.lt.s32.totalorder %s35, 4
        %s2123 = scalar_select %p2122, %s35, 4
        %s2124 = smul.addr %s2123, 8
        %s2125 = scalar_lea.vmem %s9, %s2124
        // Predicated region
        $region89: #{fwd.2} parent=55 // pred_check
          %p2126 = pneg %p287
        $region90: #{fwd.2} parent=55 // pred_check_branch
          %2128 = sbr.rel (%p2126) target = $region92
        $region91: #{fwd.2} parent=55 // pred_region
          _
        $region92: #{fwd.2} parent=55 // pred_fallthru
          _
      $region56: #{fwd.2} parent=5 // pred_fallthru
        _
      %p2129 = scmp.le.s32.totalorder 2, %s30
      // Predicated region
      $region93: #{fwd.2} parent=5 // pred_check
        %p2130 = pneg %p2129
      $region94: #{fwd.2} parent=5 // pred_check_branch
        %2132 = sbr.rel (%p2130) target = $region96
      $region95: #{fwd.2} parent=5 // pred_region
        %s2133 = ssub.s32 %s30, 2
        // Predicated region
        $region97: #{fwd.2} parent=95 // pred_check
          %p2134 = pneg %p293
        $region98: #{fwd.2} parent=95 // pred_check_branch
          %2136 = sbr.rel (%p2134) target = $region100
        $region99: #{fwd.2} parent=95 // pred_region
          %p2137 = scmp.lt.s32.totalorder %s36, 4
          %s2138 = scalar_select %p2137, %s36, 4
          %s2139 = smul.addr %s2138, 8
          %s2140 = scalar_lea.vmem %s9, %s2139
        $region100: #{fwd.2} parent=95 // pred_fallthru
          _
      $region96: #{fwd.2} parent=5 // pred_fallthru
        _
    $region6: #{fwd.2} parent=1 // loop_footer
      %s34 = sadd.s32 1, %s30
    $region7: #{fwd.2} parent=1 // loop_footer_branch
      %29 = sbr.rel target = $region3
    $region8: #{fwd.2} parent=1 // loop_exit
      _
    %2141 = vsyncpa [#allocation3], 1
    %s2142 = scalar_lea.sflag [#allocation3], 1
    %2143 = vsyncpa %s2142, 1
    %2144 = vsyncpa [#allocation5], 1
    %s2145 = scalar_lea.sflag [#allocation5], 1
    %2146 = vsyncpa %s2145, 1
    %2147 = vsyncpa [#allocation8], 1
    %s2148 = scalar_lea.sflag [#allocation8], 1
    %2149 = vsyncpa %s2148, 1
    %2150 = vsyncpa [#allocation11], 1
    %s2151 = scalar_lea.sflag [#allocation11], 1
    %2152 = vsyncpa %s2151, 1
    %2153 = vsyncpa [#allocation14], 1
    %s2154 = scalar_lea.sflag [#allocation14], 1
    %2155 = vsyncpa %s2154, 1

</llo_original>
